<compile_context>
chip_gen: v7x
topology: tpu7x:2x2x1
jax: 0.10.0
libtpu: 0.0.40
codegen_flags: <defaults>
</compile_context>

<pallas_src>
import numpy as np
import jax
import jax.numpy as jnp
from jax import lax
from jax.experimental import pallas as pl
from jax.experimental.pallas import tpu as pltpu

# ---------------- problem configuration (consistent with the module) ----------------
BATCH = 2
N_NEIGHBOURS = 8                               # memory_slots / N
KEY_SIZE = 4                                   # K
VALUE_SIZE = 8                                 # V
N_HEADS = 4                                    # H
MEMORY_SIZE = VALUE_SIZE * N_HEADS             # M = 32 (== hidden_dim)
HIDDEN_DIM = MEMORY_SIZE
QKV_SIZE = 2 * KEY_SIZE + VALUE_SIZE           # 16
PROJ_SIZE = N_HEADS * QKV_SIZE                 # 64
HK = N_HEADS * KEY_SIZE                        # 16
LN_EPS = 1e-5
_HIGH = jax.lax.Precision.HIGHEST

# ---------------- packed-parameter row layout: one (_ROWS, PROJ_SIZE) f32 array ----------------
_R_WQKV = 0                                    # rows [0, 32)   : wqkv, columns permuted to [Q|K|V]
_R_WMLP = _R_WQKV + MEMORY_SIZE                # rows [32, 64)  : wmlp (padded to 64 lanes)
_R_LN1W = _R_WMLP + MEMORY_SIZE                # rows [64, 80)  : ln1_w perm, Q cols pre-scaled, batch-tiled
_R_LN1B = _R_LN1W + BATCH * N_NEIGHBOURS       # rows [80, 96)  : ln1_b perm, Q cols pre-scaled, batch-tiled
_R_BQKV = _R_LN1B + BATCH * N_NEIGHBOURS       # row 96         : bqkv (permuted, NOT pre-scaled: it precedes LN)
_R_BMLP = _R_BQKV + 1                          # row 97         : bmlp
_R_LN2W = _R_BMLP + 1                          # row 98         : ln2_w
_R_LN2B = _R_LN2W + 1                          # row 99         : ln2_b
_R_MASK = ((_R_LN2B + 1 + 7) // 8) * 8         # rows [104,120) : additive batch block-diagonal mask (BN x BN)
_ROWS = ((_R_MASK + BATCH * N_NEIGHBOURS + 7) // 8) * 8   # 120, sublane-tile aligned


def _residual_transform_kernel(x_ref, theta_ref, o_ref):
    B, N, H, K, V = BATCH, N_NEIGHBOURS, N_HEADS, KEY_SIZE, VALUE_SIZE
    BN, M = B * N, MEMORY_SIZE

    x = x_ref[...].astype(jnp.float32)                             # (BN, M)

    # ---- unpack parameters (static slices of the packed VMEM ref) ----
    w_qkv = theta_ref[_R_WQKV:_R_WQKV + M, :]                      # (M, P)
    w_mlp = theta_ref[_R_WMLP:_R_WMLP + M, :M]                     # (M, M)
    ln1_w = theta_ref[_R_LN1W:_R_LN1W + BN, :]                     # (BN, P)  Q cols pre-scaled
    ln1_b = theta_ref[_R_LN1B:_R_LN1B + BN, :]                     # (BN, P)
    b_qkv = theta_ref[_R_BQKV:_R_BQKV + 1, :]                      # (1, P)
    b_mlp = theta_ref[_R_BMLP:_R_BMLP + 1, :M]                     # (1, M)
    ln2_w = theta_ref[_R_LN2W:_R_LN2W + 1, :M]                     # (1, M)
    ln2_b = theta_ref[_R_LN2B:_R_LN2B + 1, :M]                     # (1, M)
    mask = theta_ref[_R_MASK:_R_MASK + BN, :BN]                    # (BN, BN) additive 0 / -1e30

    # ---- MHDPA ----
    # QKV projection for both batches at once: (BN, M) @ (M, P) + (1, P)
    qkv = jnp.dot(x, w_qkv, preferred_element_type=jnp.float32,
                  precision=_HIGH) + b_qkv

    # Per-batch LayerNorm over the full (N, P) slab. Each batch block is one
    # (8, 64) sublane tile; two-pass (centered) moments for numerical safety.
    inv_np = 1.0 / float(N * PROJ_SIZE)
    blocks = []
    for b in range(B):                                             # static unroll, B == 2
        blk = qkv[b * N:(b + 1) * N, :]                            # (N, P), tile-aligned
        mu = jnp.sum(blk) * inv_np
        cen = blk - mu
        var = jnp.sum(cen * cen) * inv_np
        blocks.append(cen * lax.rsqrt(var + LN_EPS))
    qkv_n = jnp.concatenate(blocks, axis=0)                        # (BN, P)
    # Affine was pre-tiled over batch and its Q columns pre-scaled by K**-0.5.
    qkv_n = qkv_n * ln1_w + ln1_b

    # Columns were permuted host-side to contiguous [Q_all | K_all | V_all].
    q_all = qkv_n[:, :HK]                                          # (BN, H*K), already scaled
    k_all = qkv_n[:, HK:2 * HK]                                    # (BN, H*K)
    v_all = qkv_n[:, 2 * HK:]                                      # (BN, H*V)

    # Both batches share each per-head matmul/softmax via the additive
    # block-diagonal mask (every row keeps N unmasked same-batch columns, so
    # the max-subtraction is always finite).
    head_outs = []
    for h in range(H):                                             # static unroll, H == 4
        qh = q_all[:, h * K:(h + 1) * K]                           # (BN, K)
        kh = k_all[:, h * K:(h + 1) * K]                           # (BN, K)
        vh = v_all[:, h * V:(h + 1) * V]                           # (BN, V)
        s = lax.dot_general(qh, kh, (((1,), (1,)), ((), ())),      # q @ k^T, no transpose op
                            preferred_element_type=jnp.float32,
                            precision=_HIGH)                       # (BN, BN)
        s = s + mask
        s = s - jnp.max(s, axis=-1, keepdims=True)
        p = jnp.exp(s)
        p = p / jnp.sum(p, axis=-1, keepdims=True)                 # exact softmax normalization
        head_outs.append(jnp.dot(p, vh, preferred_element_type=jnp.float32,
                                 precision=_HIGH))
    attn = jnp.concatenate(head_outs, axis=-1)                     # (BN, M)

    x1 = x + attn                                                  # residual 1

    # ---- NormMLP: layernorm(linear(relu(x1))), per-row LN (two-pass moments) ----
    h1 = jnp.dot(jnp.maximum(x1, 0.0), w_mlp,
                 preferred_element_type=jnp.float32, precision=_HIGH) + b_mlp
    inv_m = 1.0 / float(M)
    mu2 = jnp.sum(h1, axis=-1, keepdims=True) * inv_m
    cen2 = h1 - mu2
    var2 = jnp.sum(cen2 * cen2, axis=-1, keepdims=True) * inv_m
    h1n = cen2 * lax.rsqrt(var2 + LN_EPS) * ln2_w + ln2_b

    o_ref[...] = (x1 + h1n).astype(o_ref.dtype)                    # residual 2


def _qkv_column_perm():
    """New column i -> old column perm[i]: regroups the head-interleaved
    [q,k,v]*H projection outputs into contiguous [Q_all | K_all | V_all]."""
    idx = np.arange(PROJ_SIZE).reshape(N_HEADS, QKV_SIZE)
    q = idx[:, :KEY_SIZE].reshape(-1)
    k = idx[:, KEY_SIZE:2 * KEY_SIZE].reshape(-1)
    v = idx[:, 2 * KEY_SIZE:].reshape(-1)
    return np.concatenate([q, k, v])


def pack_params(params):
    """Pack all weights + constants into one lane-dense (_ROWS, PROJ_SIZE) f32
    array.  Pure host-side NumPy; call ONCE and reuse the result."""
    perm = _qkv_column_perm()
    scale = KEY_SIZE ** (-0.5)
    f32 = lambda a: np.asarray(a, dtype=np.float32)

    theta = np.zeros((_ROWS, PROJ_SIZE), np.float32)
    theta[_R_WQKV:_R_WQKV + MEMORY_SIZE, :] = f32(params["wqkv"])[:, perm]
    theta[_R_WMLP:_R_WMLP + MEMORY_SIZE, :MEMORY_SIZE] = f32(params["wmlp"])

    ln1_w = f32(params["ln1_w"])[:, perm].copy()
    ln1_b = f32(params["ln1_b"])[:, perm].copy()
    ln1_w[:, :HK] *= scale          # fold q * K**-0.5 into the post-LN affine
    ln1_b[:, :HK] *= scale
    theta[_R_LN1W:_R_LN1W + BATCH * N_NEIGHBOURS, :] = np.tile(ln1_w, (BATCH, 1))
    theta[_R_LN1B:_R_LN1B + BATCH * N_NEIGHBOURS, :] = np.tile(ln1_b, (BATCH, 1))

    theta[_R_BQKV, :] = f32(params["bqkv"])[0, perm]    # bias precedes LN -> not scaled
    theta[_R_BMLP, :MEMORY_SIZE] = f32(params["bmlp"])[0]
    theta[_R_LN2W, :MEMORY_SIZE] = f32(params["ln2_w"])[0]
    theta[_R_LN2B, :MEMORY_SIZE] = f32(params["ln2_b"])[0]

    # Additive batch block-diagonal mask: 0 within a batch, -1e30 across batches.
    rb = np.arange(BATCH * N_NEIGHBOURS) // N_NEIGHBOURS
    mask = np.where(rb[:, None] == rb[None, :], 0.0, -1e30).astype(np.float32)
    theta[_R_MASK:_R_MASK + BATCH * N_NEIGHBOURS, :BATCH * N_NEIGHBOURS] = mask
    return jnp.asarray(theta)


def _steps_impl(xs, theta):
    """xs: (S, B, N, M). One pallas_call; the step axis is the grid axis."""
    S, B, N, M = xs.shape
    BN = B * N
    out = pl.pallas_call(
        _residual_transform_kernel,
        out_shape=jax.ShapeDtypeStruct((S, BN, M), xs.dtype),
        grid=(S,),
        in_specs=[
            # One (BN, M) activation slab per step (leading step dim squeezed).
            pl.BlockSpec((None, BN, M), lambda s: (s, 0, 0)),
            # Packed weights: same block every step -> DMA'd once, VMEM-resident.
            pl.BlockSpec((_ROWS, PROJ_SIZE), lambda s: (0, 0)),
        ],
        out_specs=pl.BlockSpec((None, BN, M), lambda s: (s, 0, 0)),
        compiler_params=pltpu.CompilerParams(
            dimension_semantics=("parallel",)),   # v7x: shard steps across cores
    )(xs.reshape(S, BN, M), theta)
    return out.reshape(S, B, N, M)


@jax.jit
def residual_transform(x, theta):
    """Single forward: x (B, N, M), theta from pack_params. Returns (B, N, M)."""
    return _steps_impl(x[None], theta)[0]


@jax.jit
def residual_transform_steps(xs, theta):
    """Batched-over-steps forward: xs (S, B, N, M) -> (S, B, N, M)."""
    return _steps_impl(xs, theta)


def reference(x, params):
    """Pure-JAX reference mirroring the PyTorch forward (unpermuted params)."""
    qkv = jnp.matmul(x, params["wqkv"], precision=_HIGH) + params["bqkv"]   # (B, N, P)
    mean = jnp.mean(qkv, axis=(1, 2), keepdims=True)
    var = jnp.mean((qkv - mean) ** 2, axis=(1, 2), keepdims=True)
    qkv = (qkv - mean) / jnp.sqrt(var + LN_EPS)
    qkv = qkv * params["ln1_w"][None] + params["ln1_b"][None]
    B, N, _ = qkv.shape
    qkv = qkv.reshape(B, N, N_HEADS, QKV_SIZE).transpose(0, 2, 1, 3)
    q, k, v = (qkv[..., :KEY_SIZE], qkv[..., KEY_SIZE:2 * KEY_SIZE],
               qkv[..., 2 * KEY_SIZE:])
    q = q * KEY_SIZE ** (-0.5)
    w = jax.nn.softmax(jnp.matmul(q, jnp.swapaxes(k, -1, -2), precision=_HIGH),
                       axis=-1)
    out = jnp.matmul(w, v, precision=_HIGH).transpose(0, 2, 1, 3).reshape(
        B, N, MEMORY_SIZE)
    x1 = x + out
    h1 = jnp.matmul(jnp.maximum(x1, 0.0), params["wmlp"],
                    precision=_HIGH) + params["bmlp"]
    mu = jnp.mean(h1, axis=-1, keepdims=True)
    var2 = jnp.mean((h1 - mu) ** 2, axis=-1, keepdims=True)
    h1 = (h1 - mu) / jnp.sqrt(var2 + LN_EPS) * params["ln2_w"] + params["ln2_b"]
    return x1 + h1


def init_params(key):
    ks = jax.random.split(key, 4)
    s = 0.1
    return {
        # qkv_projector: Linear(M -> P), stored (in, out) so kernel does x @ W
        "wqkv": s * jax.random.normal(ks[0], (MEMORY_SIZE, PROJ_SIZE), jnp.float32),
        "bqkv": s * jax.random.normal(ks[1], (1, PROJ_SIZE), jnp.float32),
        # qkv_layernorm over [memory_slots, projection_size]
        "ln1_w": jnp.ones((N_NEIGHBOURS, PROJ_SIZE), jnp.float32),
        "ln1_b": jnp.zeros((N_NEIGHBOURS, PROJ_SIZE), jnp.float32),
        # NormMLP linear (hidden -> hidden) and layernorm(hidden)
        "wmlp": s * jax.random.normal(ks[2], (HIDDEN_DIM, HIDDEN_DIM), jnp.float32),
        "bmlp": s * jax.random.normal(ks[3], (1, HIDDEN_DIM), jnp.float32),
        "ln2_w": jnp.ones((1, HIDDEN_DIM), jnp.float32),
        "ln2_b": jnp.zeros((1, HIDDEN_DIM), jnp.float32),
    }


if __name__ == "__main__":
    key = jax.random.PRNGKey(0)
    k_x, k_p, k_s = jax.random.split(key, 3)
    x = jax.random.normal(k_x, (BATCH, N_NEIGHBOURS, MEMORY_SIZE), jnp.float32)
    params = init_params(k_p)

    theta = pack_params(params)        # packed once, host-side; reused by every call

    # Single module forward.
    out = jax.block_until_ready(residual_transform(x, theta))
    ref = reference(x, params)
    assert out.shape == (BATCH, N_NEIGHBOURS, MEMORY_SIZE)
    err = float(jnp.max(jnp.abs(out - ref)))
    assert jnp.allclose(out, ref, atol=2e-3, rtol=2e-3), \
        f"mismatch vs reference: max|diff|={err}"

    # Grid-batched path: several independent forwards in ONE pallas_call
    # (weights DMA'd once, step axis marked parallel for v7x).
    S = 4
    xs = jax.random.normal(k_s, (S, BATCH, N_NEIGHBOURS, MEMORY_SIZE), jnp.float32)
    outs = jax.block_until_ready(residual_transform_steps(xs, theta))
    refs = jax.vmap(lambda xx: reference(xx, params))(xs)
    err_s = float(jnp.max(jnp.abs(outs - refs)))
    assert jnp.allclose(outs, refs, atol=2e-3, rtol=2e-3), \
        f"batched mismatch vs reference: max|diff|={err_s}"

    print("KERNEL_OK")
</pallas_src>

<mosaic_0001>
module attributes {stable_mosaic.version = 11 : i64} {
  func.func @_residual_transform_kernel(%arg0: i32, %arg1: memref<1x16x32xf32, #tpu.memory_space<vmem>>, %arg2: memref<120x64xf32, #tpu.memory_space<vmem>>, %arg3: memref<1x16x32xf32, #tpu.memory_space<vmem>>) attributes {dimension_semantics = [#tpu.dimension_semantics<parallel>], iteration_bounds = array<i64: 1>, scalar_prefetch = 0 : i64, scratch_operands = 0 : i64, tpu.core_type = #tpu.core_type<tc>, window_params = [{transform_indices = @transform_0, window_bounds = array<i64: 1, 16, 32>}, {pipeline_mode = #tpu.pipeline_mode<synchronous>, transform_indices = @transform_1, window_bounds = array<i64: 120, 64>}, {transform_indices = @transform_2, window_bounds = array<i64: 1, 16, 32>}]} {
    %c0 = arith.constant 0 : index
    %c0_0 = arith.constant 0 : index
    %c0_1 = arith.constant 0 : index
    %0 = vector.load %arg1[%c0, %c0_0, %c0_1] : memref<1x16x32xf32, #tpu.memory_space<vmem>>, vector<1x16x32xf32>
    %1 = vector.shape_cast %0 : vector<1x16x32xf32> to vector<16x32xf32>
    %c0_2 = arith.constant 0 : index
    %c0_3 = arith.constant 0 : index
    %2 = vector.load %arg2[%c0_2, %c0_3] : memref<120x64xf32, #tpu.memory_space<vmem>>, vector<32x64xf32>
    %c32 = arith.constant 32 : index
    %c0_4 = arith.constant 0 : index
    %3 = vector.load %arg2[%c32, %c0_4] : memref<120x64xf32, #tpu.memory_space<vmem>>, vector<32x32xf32>
    %c64 = arith.constant 64 : index
    %c0_5 = arith.constant 0 : index
    %4 = vector.load %arg2[%c64, %c0_5] : memref<120x64xf32, #tpu.memory_space<vmem>>, vector<16x64xf32>
    %c80 = arith.constant 80 : index
    %c0_6 = arith.constant 0 : index
    %5 = vector.load %arg2[%c80, %c0_6] : memref<120x64xf32, #tpu.memory_space<vmem>>, vector<16x64xf32>
    %c96 = arith.constant 96 : index
    %c0_7 = arith.constant 0 : index
    %6 = vector.load %arg2[%c96, %c0_7] : memref<120x64xf32, #tpu.memory_space<vmem>>, vector<1x64xf32>
    %c97 = arith.constant 97 : index
    %c0_8 = arith.constant 0 : index
    %7 = vector.load %arg2[%c97, %c0_8] : memref<120x64xf32, #tpu.memory_space<vmem>>, vector<1x32xf32>
    %c98 = arith.constant 98 : index
    %c0_9 = arith.constant 0 : index
    %8 = vector.load %arg2[%c98, %c0_9] : memref<120x64xf32, #tpu.memory_space<vmem>>, vector<1x32xf32>
    %c99 = arith.constant 99 : index
    %c0_10 = arith.constant 0 : index
    %9 = vector.load %arg2[%c99, %c0_10] : memref<120x64xf32, #tpu.memory_space<vmem>>, vector<1x32xf32>
    %c104 = arith.constant 104 : index
    %c0_11 = arith.constant 0 : index
    %10 = vector.load %arg2[%c104, %c0_11] : memref<120x64xf32, #tpu.memory_space<vmem>>, vector<16x16xf32>
    %cst = arith.constant dense<0.000000e+00> : vector<16x64xf32>
    %11 = tpu.matmul %1, %2, %cst {dimension_numbers = #tpu.dot_dimension_numbers<[1], [0], [0], [1], [0, 0, 1, 1], [], []>, precision = #tpu.contract_precision<fp32>} : vector<16x32xf32>, vector<32x64xf32>, vector<16x64xf32> -> vector<16x64xf32>
    %12 = vector.broadcast %6 : vector<1x64xf32> to vector<16x64xf32>
    %13 = arith.addf %11, %12 : vector<16x64xf32>
    %14 = vector.extract_strided_slice %13 {offsets = [0, 0], sizes = [8, 64], strides = [1, 1]} : vector<16x64xf32> to vector<8x64xf32>
    %15 = vector.shape_cast %14 : vector<8x64xf32> to vector<1x8x64xf32>
    %cst_12 = arith.constant dense<0.000000e+00> : vector<1xf32>
    %16 = vector.multi_reduction <add>, %15, %cst_12 [1, 2] : vector<1x8x64xf32> to vector<1xf32>
    %17 = vector.shape_cast %16 : vector<1xf32> to vector<1x1x1xf32>
    %18 = vector.extract %17[0, 0, 0] : f32 from vector<1x1x1xf32>
    %cst_13 = arith.constant 0.001953125 : f32
    %19 = arith.mulf %18, %cst_13 : f32
    %20 = vector.broadcast %19 : f32 to vector<8x64xf32>
    %21 = arith.subf %14, %20 : vector<8x64xf32>
    %22 = arith.mulf %21, %21 : vector<8x64xf32>
    %23 = vector.shape_cast %22 : vector<8x64xf32> to vector<1x8x64xf32>
    %cst_14 = arith.constant dense<0.000000e+00> : vector<1xf32>
    %24 = vector.multi_reduction <add>, %23, %cst_14 [1, 2] : vector<1x8x64xf32> to vector<1xf32>
    %25 = vector.shape_cast %24 : vector<1xf32> to vector<1x1x1xf32>
    %26 = vector.extract %25[0, 0, 0] : f32 from vector<1x1x1xf32>
    %cst_15 = arith.constant 0.001953125 : f32
    %27 = arith.mulf %26, %cst_15 : f32
    %cst_16 = arith.constant 9.99999974E-6 : f32
    %28 = arith.addf %27, %cst_16 : f32
    %29 = math.rsqrt %28 : f32
    %30 = vector.broadcast %29 : f32 to vector<8x64xf32>
    %31 = arith.mulf %21, %30 : vector<8x64xf32>
    %32 = vector.extract_strided_slice %13 {offsets = [8, 0], sizes = [8, 64], strides = [1, 1]} : vector<16x64xf32> to vector<8x64xf32>
    %33 = vector.shape_cast %32 : vector<8x64xf32> to vector<1x8x64xf32>
    %cst_17 = arith.constant dense<0.000000e+00> : vector<1xf32>
    %34 = vector.multi_reduction <add>, %33, %cst_17 [1, 2] : vector<1x8x64xf32> to vector<1xf32>
    %35 = vector.shape_cast %34 : vector<1xf32> to vector<1x1x1xf32>
    %36 = vector.extract %35[0, 0, 0] : f32 from vector<1x1x1xf32>
    %cst_18 = arith.constant 0.001953125 : f32
    %37 = arith.mulf %36, %cst_18 : f32
    %38 = vector.broadcast %37 : f32 to vector<8x64xf32>
    %39 = arith.subf %32, %38 : vector<8x64xf32>
    %40 = arith.mulf %39, %39 : vector<8x64xf32>
    %41 = vector.shape_cast %40 : vector<8x64xf32> to vector<1x8x64xf32>
    %cst_19 = arith.constant dense<0.000000e+00> : vector<1xf32>
    %42 = vector.multi_reduction <add>, %41, %cst_19 [1, 2] : vector<1x8x64xf32> to vector<1xf32>
    %43 = vector.shape_cast %42 : vector<1xf32> to vector<1x1x1xf32>
    %44 = vector.extract %43[0, 0, 0] : f32 from vector<1x1x1xf32>
    %cst_20 = arith.constant 0.001953125 : f32
    %45 = arith.mulf %44, %cst_20 : f32
    %cst_21 = arith.constant 9.99999974E-6 : f32
    %46 = arith.addf %45, %cst_21 : f32
    %47 = math.rsqrt %46 : f32
    %48 = vector.broadcast %47 : f32 to vector<8x64xf32>
    %49 = arith.mulf %39, %48 : vector<8x64xf32>
    %50 = tpu.concatenate %31, %49 in 0 : vector<8x64xf32>, vector<8x64xf32> -> vector<16x64xf32>
    %51 = arith.mulf %50, %4 : vector<16x64xf32>
    %52 = arith.addf %51, %5 : vector<16x64xf32>
    %53 = vector.extract_strided_slice %52 {offsets = [0, 0], sizes = [16, 16], strides = [1, 1]} : vector<16x64xf32> to vector<16x16xf32>
    %54 = vector.extract_strided_slice %52 {offsets = [0, 16], sizes = [16, 16], strides = [1, 1]} : vector<16x64xf32> to vector<16x16xf32>
    %55 = vector.extract_strided_slice %52 {offsets = [0, 32], sizes = [16, 32], strides = [1, 1]} : vector<16x64xf32> to vector<16x32xf32>
    %56 = vector.extract_strided_slice %53 {offsets = [0, 0], sizes = [16, 4], strides = [1, 1]} : vector<16x16xf32> to vector<16x4xf32>
    %57 = vector.extract_strided_slice %54 {offsets = [0, 0], sizes = [16, 4], strides = [1, 1]} : vector<16x16xf32> to vector<16x4xf32>
    %58 = vector.extract_strided_slice %55 {offsets = [0, 0], sizes = [16, 8], strides = [1, 1]} : vector<16x32xf32> to vector<16x8xf32>
    %cst_22 = arith.constant dense<0.000000e+00> : vector<16x16xf32>
    %59 = tpu.matmul %56, %57, %cst_22 {dimension_numbers = #tpu.dot_dimension_numbers<[1], [1], [0], [0], [0, 0, 1, 0], [], []>, precision = #tpu.contract_precision<fp32>} : vector<16x4xf32>, vector<16x4xf32>, vector<16x16xf32> -> vector<16x16xf32>
    %60 = arith.addf %59, %10 : vector<16x16xf32>
    %cst_23 = arith.constant dense<0xFF800000> : vector<16xf32>
    %61 = vector.multi_reduction <maximumf>, %60, %cst_23 [1] : vector<16x16xf32> to vector<16xf32>
    %62 = vector.shape_cast %61 : vector<16xf32> to vector<16x1xf32>
    %63 = vector.broadcast %62 : vector<16x1xf32> to vector<16x16xf32>
    %64 = arith.subf %60, %63 : vector<16x16xf32>
    %65 = math.exp %64 : vector<16x16xf32>
    %cst_24 = arith.constant dense<0.000000e+00> : vector<16xf32>
    %66 = vector.multi_reduction <add>, %65, %cst_24 [1] : vector<16x16xf32> to vector<16xf32>
    %67 = vector.shape_cast %66 : vector<16xf32> to vector<16x1xf32>
    %68 = vector.broadcast %67 : vector<16x1xf32> to vector<16x16xf32>
    %69 = arith.divf %65, %68 : vector<16x16xf32>
    %cst_25 = arith.constant dense<0.000000e+00> : vector<16x8xf32>
    %70 = tpu.matmul %69, %58, %cst_25 {dimension_numbers = #tpu.dot_dimension_numbers<[1], [0], [0], [1], [0, 0, 1, 1], [], []>, precision = #tpu.contract_precision<fp32>} : vector<16x16xf32>, vector<16x8xf32>, vector<16x8xf32> -> vector<16x8xf32>
    %71 = vector.extract_strided_slice %53 {offsets = [0, 4], sizes = [16, 4], strides = [1, 1]} : vector<16x16xf32> to vector<16x4xf32>
    %72 = vector.extract_strided_slice %54 {offsets = [0, 4], sizes = [16, 4], strides = [1, 1]} : vector<16x16xf32> to vector<16x4xf32>
    %73 = vector.extract_strided_slice %55 {offsets = [0, 8], sizes = [16, 8], strides = [1, 1]} : vector<16x32xf32> to vector<16x8xf32>
    %cst_26 = arith.constant dense<0.000000e+00> : vector<16x16xf32>
    %74 = tpu.matmul %71, %72, %cst_26 {dimension_numbers = #tpu.dot_dimension_numbers<[1], [1], [0], [0], [0, 0, 1, 0], [], []>, precision = #tpu.contract_precision<fp32>} : vector<16x4xf32>, vector<16x4xf32>, vector<16x16xf32> -> vector<16x16xf32>
    %75 = arith.addf %74, %10 : vector<16x16xf32>
    %cst_27 = arith.constant dense<0xFF800000> : vector<16xf32>
    %76 = vector.multi_reduction <maximumf>, %75, %cst_27 [1] : vector<16x16xf32> to vector<16xf32>
    %77 = vector.shape_cast %76 : vector<16xf32> to vector<16x1xf32>
    %78 = vector.broadcast %77 : vector<16x1xf32> to vector<16x16xf32>
    %79 = arith.subf %75, %78 : vector<16x16xf32>
    %80 = math.exp %79 : vector<16x16xf32>
    %cst_28 = arith.constant dense<0.000000e+00> : vector<16xf32>
    %81 = vector.multi_reduction <add>, %80, %cst_28 [1] : vector<16x16xf32> to vector<16xf32>
    %82 = vector.shape_cast %81 : vector<16xf32> to vector<16x1xf32>
    %83 = vector.broadcast %82 : vector<16x1xf32> to vector<16x16xf32>
    %84 = arith.divf %80, %83 : vector<16x16xf32>
    %cst_29 = arith.constant dense<0.000000e+00> : vector<16x8xf32>
    %85 = tpu.matmul %84, %73, %cst_29 {dimension_numbers = #tpu.dot_dimension_numbers<[1], [0], [0], [1], [0, 0, 1, 1], [], []>, precision = #tpu.contract_precision<fp32>} : vector<16x16xf32>, vector<16x8xf32>, vector<16x8xf32> -> vector<16x8xf32>
    %86 = vector.extract_strided_slice %53 {offsets = [0, 8], sizes = [16, 4], strides = [1, 1]} : vector<16x16xf32> to vector<16x4xf32>
    %87 = vector.extract_strided_slice %54 {offsets = [0, 8], sizes = [16, 4], strides = [1, 1]} : vector<16x16xf32> to vector<16x4xf32>
    %88 = vector.extract_strided_slice %55 {offsets = [0, 16], sizes = [16, 8], strides = [1, 1]} : vector<16x32xf32> to vector<16x8xf32>
    %cst_30 = arith.constant dense<0.000000e+00> : vector<16x16xf32>
    %89 = tpu.matmul %86, %87, %cst_30 {dimension_numbers = #tpu.dot_dimension_numbers<[1], [1], [0], [0], [0, 0, 1, 0], [], []>, precision = #tpu.contract_precision<fp32>} : vector<16x4xf32>, vector<16x4xf32>, vector<16x16xf32> -> vector<16x16xf32>
    %90 = arith.addf %89, %10 : vector<16x16xf32>
    %cst_31 = arith.constant dense<0xFF800000> : vector<16xf32>
    %91 = vector.multi_reduction <maximumf>, %90, %cst_31 [1] : vector<16x16xf32> to vector<16xf32>
    %92 = vector.shape_cast %91 : vector<16xf32> to vector<16x1xf32>
    %93 = vector.broadcast %92 : vector<16x1xf32> to vector<16x16xf32>
    %94 = arith.subf %90, %93 : vector<16x16xf32>
    %95 = math.exp %94 : vector<16x16xf32>
    %cst_32 = arith.constant dense<0.000000e+00> : vector<16xf32>
    %96 = vector.multi_reduction <add>, %95, %cst_32 [1] : vector<16x16xf32> to vector<16xf32>
    %97 = vector.shape_cast %96 : vector<16xf32> to vector<16x1xf32>
    %98 = vector.broadcast %97 : vector<16x1xf32> to vector<16x16xf32>
    %99 = arith.divf %95, %98 : vector<16x16xf32>
    %cst_33 = arith.constant dense<0.000000e+00> : vector<16x8xf32>
    %100 = tpu.matmul %99, %88, %cst_33 {dimension_numbers = #tpu.dot_dimension_numbers<[1], [0], [0], [1], [0, 0, 1, 1], [], []>, precision = #tpu.contract_precision<fp32>} : vector<16x16xf32>, vector<16x8xf32>, vector<16x8xf32> -> vector<16x8xf32>
    %101 = vector.extract_strided_slice %53 {offsets = [0, 12], sizes = [16, 4], strides = [1, 1]} : vector<16x16xf32> to vector<16x4xf32>
    %102 = vector.extract_strided_slice %54 {offsets = [0, 12], sizes = [16, 4], strides = [1, 1]} : vector<16x16xf32> to vector<16x4xf32>
    %103 = vector.extract_strided_slice %55 {offsets = [0, 24], sizes = [16, 8], strides = [1, 1]} : vector<16x32xf32> to vector<16x8xf32>
    %cst_34 = arith.constant dense<0.000000e+00> : vector<16x16xf32>
    %104 = tpu.matmul %101, %102, %cst_34 {dimension_numbers = #tpu.dot_dimension_numbers<[1], [1], [0], [0], [0, 0, 1, 0], [], []>, precision = #tpu.contract_precision<fp32>} : vector<16x4xf32>, vector<16x4xf32>, vector<16x16xf32> -> vector<16x16xf32>
    %105 = arith.addf %104, %10 : vector<16x16xf32>
    %cst_35 = arith.constant dense<0xFF800000> : vector<16xf32>
    %106 = vector.multi_reduction <maximumf>, %105, %cst_35 [1] : vector<16x16xf32> to vector<16xf32>
    %107 = vector.shape_cast %106 : vector<16xf32> to vector<16x1xf32>
    %108 = vector.broadcast %107 : vector<16x1xf32> to vector<16x16xf32>
    %109 = arith.subf %105, %108 : vector<16x16xf32>
    %110 = math.exp %109 : vector<16x16xf32>
    %cst_36 = arith.constant dense<0.000000e+00> : vector<16xf32>
    %111 = vector.multi_reduction <add>, %110, %cst_36 [1] : vector<16x16xf32> to vector<16xf32>
    %112 = vector.shape_cast %111 : vector<16xf32> to vector<16x1xf32>
    %113 = vector.broadcast %112 : vector<16x1xf32> to vector<16x16xf32>
    %114 = arith.divf %110, %113 : vector<16x16xf32>
    %cst_37 = arith.constant dense<0.000000e+00> : vector<16x8xf32>
    %115 = tpu.matmul %114, %103, %cst_37 {dimension_numbers = #tpu.dot_dimension_numbers<[1], [0], [0], [1], [0, 0, 1, 1], [], []>, precision = #tpu.contract_precision<fp32>} : vector<16x16xf32>, vector<16x8xf32>, vector<16x8xf32> -> vector<16x8xf32>
    %116 = tpu.concatenate %70, %85, %100, %115 in 1 : vector<16x8xf32>, vector<16x8xf32>, vector<16x8xf32>, vector<16x8xf32> -> vector<16x32xf32>
    %117 = arith.addf %1, %116 : vector<16x32xf32>
    %cst_38 = arith.constant 0.000000e+00 : f32
    %118 = vector.broadcast %cst_38 : f32 to vector<16x32xf32>
    %119 = arith.maximumf %117, %118 : vector<16x32xf32>
    %cst_39 = arith.constant dense<0.000000e+00> : vector<16x32xf32>
    %120 = tpu.matmul %119, %3, %cst_39 {dimension_numbers = #tpu.dot_dimension_numbers<[1], [0], [0], [1], [0, 0, 1, 1], [], []>, precision = #tpu.contract_precision<fp32>} : vector<16x32xf32>, vector<32x32xf32>, vector<16x32xf32> -> vector<16x32xf32>
    %121 = vector.broadcast %7 : vector<1x32xf32> to vector<16x32xf32>
    %122 = arith.addf %120, %121 : vector<16x32xf32>
    %cst_40 = arith.constant dense<0.000000e+00> : vector<16xf32>
    %123 = vector.multi_reduction <add>, %122, %cst_40 [1] : vector<16x32xf32> to vector<16xf32>
    %124 = vector.shape_cast %123 : vector<16xf32> to vector<16x1xf32>
    %cst_41 = arith.constant 3.125000e-02 : f32
    %125 = vector.broadcast %cst_41 : f32 to vector<16x1xf32>
    %126 = arith.mulf %124, %125 : vector<16x1xf32>
    %127 = vector.broadcast %126 : vector<16x1xf32> to vector<16x32xf32>
    %128 = arith.subf %122, %127 : vector<16x32xf32>
    %129 = arith.mulf %128, %128 : vector<16x32xf32>
    %cst_42 = arith.constant dense<0.000000e+00> : vector<16xf32>
    %130 = vector.multi_reduction <add>, %129, %cst_42 [1] : vector<16x32xf32> to vector<16xf32>
    %131 = vector.shape_cast %130 : vector<16xf32> to vector<16x1xf32>
    %cst_43 = arith.constant 3.125000e-02 : f32
    %132 = vector.broadcast %cst_43 : f32 to vector<16x1xf32>
    %133 = arith.mulf %131, %132 : vector<16x1xf32>
    %cst_44 = arith.constant 9.99999974E-6 : f32
    %134 = vector.broadcast %cst_44 : f32 to vector<16x1xf32>
    %135 = arith.addf %133, %134 : vector<16x1xf32>
    %136 = math.rsqrt %135 : vector<16x1xf32>
    %137 = vector.broadcast %136 : vector<16x1xf32> to vector<16x32xf32>
    %138 = arith.mulf %128, %137 : vector<16x32xf32>
    %139 = vector.broadcast %8 : vector<1x32xf32> to vector<16x32xf32>
    %140 = arith.mulf %138, %139 : vector<16x32xf32>
    %141 = vector.broadcast %9 : vector<1x32xf32> to vector<16x32xf32>
    %142 = arith.addf %140, %141 : vector<16x32xf32>
    %143 = arith.addf %117, %142 : vector<16x32xf32>
    %c0_45 = arith.constant 0 : index
    %c0_46 = arith.constant 0 : index
    %c0_47 = arith.constant 0 : index
    %144 = vector.load %arg3[%c0_45, %c0_46, %c0_47] : memref<1x16x32xf32, #tpu.memory_space<vmem>>, vector<1x16x32xf32>
    %145 = vector.shape_cast %144 : vector<1x16x32xf32> to vector<16x32xf32>
    %146 = vector.shape_cast %143 : vector<16x32xf32> to vector<1x16x32xf32>
    tpu.vector_store %arg3[%c0_45, %c0_46, %c0_47], %146 {strides = array<i32>} : memref<1x16x32xf32, #tpu.memory_space<vmem>>, vector<1x16x32xf32>,
    return
  }
  func.func @transform_0(%arg0: i32) -> (i32, i32, i32) {
    %c0_i32 = arith.constant 0 : i32
    %c0_i32_0 = arith.constant 0 : i32
    %c0_i32_1 = arith.constant 0 : i32
    return %arg0, %c0_i32, %c0_i32_0 : i32, i32, i32
  }
  func.func @transform_1(%arg0: i32) -> (i32, i32) {
    %c0_i32 = arith.constant 0 : i32
    %c0_i32_0 = arith.constant 0 : i32
    %c0_i32_1 = arith.constant 0 : i32
    return %c0_i32, %c0_i32_0 : i32, i32
  }
  func.func @transform_2(%arg0: i32) -> (i32, i32, i32) {
    %c0_i32 = arith.constant 0 : i32
    %c0_i32_0 = arith.constant 0 : i32
    %c0_i32_1 = arith.constant 0 : i32
    return %arg0, %c0_i32, %c0_i32_0 : i32, i32, i32
  }
}

</mosaic_0001>

<llo_original>
// kernel: residual_transform.1
$region0: #{residual_transform.1}
  #allocation0 [shape = 'u32[]', space=smem, size = 0x4, offset = 0x4, fixed_abs, tag = 'smem constant byte address 0x4 - core index']
  #allocation1 [shape = 'u32[144,128]{1,0:T(1,128)}', space=vmem, size = 0x12000, scoped, tag = 'internal scratch']
  %s0 = inlined_call_operand.vmem [shape: f32[1,16,32], index: 0, kind: input, shape index: {}]
  %s1 = inlined_call_operand.vmem [shape: f32[120,64], index: 1, kind: input, shape index: {}]
  %s2 = inlined_call_operand.hbm [shape: f32[1,16,32], index: 2, kind: output, shape index: {}]
  %s3 = sld [smem:[#allocation0]]
  $region18: #{residual_transform.1} parent=0
    _
  %s5 = ssub.s32 1, %s3
  %s6 = scalar_select 0, %s5, %s3
  $region1: #{residual_transform.1} parent=0
    #allocation2 [shape = 'u8[8192]{0}', space=vmem, size = 0x2000, scoped, tag = 'output window, operand 0, single buffered']
    #allocation3 [shape = 's32[1]{0}', space=sflag, size = 0x4, scoped, tag = 'scoped memory for residual_transform.1']
    %7 = vsyncpa [#allocation3], 0
    // Predicated region
    $region2: #{residual_transform.1} parent=1 // pred_check
      _
    $region3: #{residual_transform.1} parent=1 // pred_check_branch
      %9 = sbr.rel (0) target = $region5
    $region4: #{residual_transform.1} parent=1 // pred_region
      _
    $region5: #{residual_transform.1} parent=1 // pred_fallthru
      _
    // Predicated region
    $region6: #{residual_transform.1} parent=1 // pred_check
      _
    $region7: #{residual_transform.1} parent=1 // pred_check_branch
      %11 = sbr.rel (0) target = $region9
    $region8: #{residual_transform.1} parent=1 // pred_region
      _
    $region9: #{residual_transform.1} parent=1 // pred_fallthru
      _
    %v12 = vld [vmem:[%s0] sm:$0xff]
    %v13 = vld [vmem:[%s0 + $0x8] sm:$0xff]
    %v14 = vld [vmem:[%s1] sm:$0xff]
    %v15 = vld [vmem:[%s1 + $0x8] sm:$0xff]
    %v16 = vld [vmem:[%s1 + $0x10] sm:$0xff]
    %v17 = vld [vmem:[%s1 + $0x18] sm:$0xff]
    %v18 = vld [vmem:[%s1 + $0x20] sm:$0xff]
    %v19 = vld [vmem:[%s1 + $0x28] sm:$0xff]
    %v20 = vld [vmem:[%s1 + $0x30] sm:$0xff]
    %v21 = vld [vmem:[%s1 + $0x38] sm:$0xff]
    %v22 = vld [vmem:[%s1 + $0x40] sm:$0xff]
    %v23 = vld [vmem:[%s1 + $0x48] sm:$0xff]
    %v24 = vld [vmem:[%s1 + $0x50] sm:$0xff]
    %v25 = vld [vmem:[%s1 + $0x58] sm:$0xff]
    %v26 = vld [vmem:[%s1 + $0x60] sm:$0x1]
    %v27 = vld [vmem:[%s1 + $0x61] sm:$0x1]
    %v28 = vld [vmem:[%s1 + $0x62] sm:$0x1]
    %v29 = vld [vmem:[%s1 + $0x63] sm:$0x1]
    %v30 = vld [vmem:[%s1 + $0x68] sm:$0xff]
    %v31 = vld [vmem:[%s1 + $0x70] sm:$0xff]
    %v32 = vlaneseq
    %v33 = vshrl.u32 %v32, 7
    %v34 = vsub.s32 0, %v33
    %v35 = vrot.slane %v26, %v34
    %vm36 = vcmask 261120
    %v38 = vsel %vm36, %v12, 0
    %v41 = vsel %vm36, %v13, 0
    %43 = vmatprep.subr.mxu0 0.0
    %v44 = vand.u32 %v14, 4294901760
    %45 = vmatpush1.msra.mxu0 %v44
    %46 = vmatprep.subr.mxu0 0.0
    %v47 = vand.u32 %v15, 4294901760
    %48 = vmatpush1.msra.mxu0 %v47
    %49 = vmatprep.subr.mxu0 0.0
    %v50 = vand.u32 %v16, 4294901760
    %51 = vmatpush1.msra.mxu0 %v50
    %52 = vmatprep.subr.mxu0 0.0
    %v53 = vand.u32 %v17, 4294901760
    %54 = vmatpush1.msra.mxu0 %v53
    %55 = vmatprep.subr.mxu0 0.0
    %56 = vmatpush1.msra.mxu0 0.0
    %57 = vmatprep.subr.mxu0 0.0
    %58 = vmatpush1.msra.mxu0 0.0
    %59 = vmatprep.subr.mxu0 0.0
    %60 = vmatpush1.msra.mxu0 0.0
    %61 = vmatprep.subr.mxu0 0.0
    %62 = vmatpush1.msra.mxu0 0.0
    %63 = vmatprep.subr.mxu0 0.0
    %64 = vmatpush1.msra.mxu0 0.0
    %65 = vmatprep.subr.mxu0 0.0
    %66 = vmatpush1.msra.mxu0 0.0
    %67 = vmatprep.subr.mxu0 0.0
    %68 = vmatpush1.msra.mxu0 0.0
    %69 = vmatprep.subr.mxu0 0.0
    %70 = vmatpush1.msra.mxu0 0.0
    %71 = vmatprep.subr.mxu0 0.0
    %72 = vmatpush1.msra.mxu0 0.0
    %73 = vmatprep.subr.mxu0 0.0
    %74 = vmatpush1.msra.mxu0 0.0
    %75 = vmatprep.subr.mxu0 0.0
    %76 = vmatpush1.msra.mxu0 0.0
    %77 = vmatprep.subr.mxu0 0.0
    %78 = vmatpush1.msra.mxu0 0.0
    %79 = vmatprep.subr.mxu0 0.0
    %80 = vmatpush1.msra.mxu0 0.0
    %81 = vmatprep.subr.mxu0 0.0
    %82 = vmatpush1.msra.mxu0 0.0
    %83 = vmatprep.subr.mxu0 0.0
    %84 = vmatpush1.msra.mxu0 0.0
    %85 = vmatprep.subr.mxu0 0.0
    %86 = vmatpush1.msra.mxu0 0.0
    %87 = vmatprep.subr.mxu0 0.0
    %88 = vmatpush1.msra.mxu0 0.0
    %89 = vmatprep.subr.mxu0 0.0
    %90 = vmatpush1.msra.mxu0 0.0
    %91 = vmatprep.subr.mxu0 0.0
    %92 = vmatpush1.msra.mxu0 0.0
    %93 = vmatprep.subr.mxu0 0.0
    %94 = vmatpush1.msra.mxu0 0.0
    %95 = vmatprep.subr.mxu0 0.0
    %96 = vmatpush1.msra.mxu0 0.0
    %97 = vmatprep.subr.mxu0 0.0
    %98 = vmatpush1.msra.mxu0 0.0
    %99 = vmatprep.subr.mxu0 0.0
    %100 = vmatpush1.msra.mxu0 0.0
    %101 = vmatprep.subr.mxu0 0.0
    %102 = vmatpush1.msra.mxu0 0.0
    %103 = vmatprep.subr.mxu0 0.0
    %104 = vmatpush1.msra.mxu0 0.0
    %105 = vmatprep.subr.mxu0 0.0
    %106 = vmatpush1.msra.mxu0 0.0
    %107 = vmatprep.subr.mxu0 0.0
    %108 = vmatpush1.msra.mxu0 0.0
    %109 = vmatprep.subr.mxu0 0.0
    %110 = vmatpush1.msra.mxu0 0.0
    %111 = vmatprep.mubr.f32.mxu0 0.0
    %v112 = vand.u32 %v38, 4294901760
    %v113 = vsub.f32 %v38, %v112
    %v114 = vand.u32 %v113, 4294901760
    %v115 = vsub.f32 %v113, %v114
    %v116 = vand.u32 %v115, 4294901760
    %117 = vmatmul.mubr.f32.gmra.mrb[0].mxu0 %v116
    %v118 = vpop.f32.mrb[0].mxu0
    %v119 = vadd.f32 %v35, %v118
    %v120 = vpop.f32.mrb[0].mxu0
    %121 = vmatprep.mubr.f32.mxu0 0.0
    %v122 = vand.u32 %v41, 4294901760
    %v123 = vsub.f32 %v41, %v122
    %v124 = vand.u32 %v123, 4294901760
    %v125 = vsub.f32 %v123, %v124
    %v126 = vand.u32 %v125, 4294901760
    %127 = vmatmul.mubr.f32.gmra.mrb[0].mxu0 %v126
    %v128 = vpop.f32.mrb[0].mxu0
    %v129 = vadd.f32 %v35, %v128
    %v130 = vpop.f32.mrb[0].mxu0
    %131 = vdwg.mxu0
    %132 = vmatprep.subr.mxu0 0.0
    %v133 = vand.u32 %v14, 4294901760
    %v134 = vsub.f32 %v14, %v133
    %v135 = vand.u32 %v134, 4294901760
    %v136 = vsub.f32 %v134, %v135
    %v137 = vand.u32 %v136, 4294901760
    %138 = vmatpush1.msra.mxu0 %v137
    %139 = vmatprep.subr.mxu0 0.0
    %v140 = vand.u32 %v15, 4294901760
    %v141 = vsub.f32 %v15, %v140
    %v142 = vand.u32 %v141, 4294901760
    %v143 = vsub.f32 %v141, %v142
    %v144 = vand.u32 %v143, 4294901760
    %145 = vmatpush1.msra.mxu0 %v144
    %146 = vmatprep.subr.mxu0 0.0
    %v147 = vand.u32 %v16, 4294901760
    %v148 = vsub.f32 %v16, %v147
    %v149 = vand.u32 %v148, 4294901760
    %v150 = vsub.f32 %v148, %v149
    %v151 = vand.u32 %v150, 4294901760
    %152 = vmatpush1.msra.mxu0 %v151
    %153 = vmatprep.subr.mxu0 0.0
    %v154 = vand.u32 %v17, 4294901760
    %v155 = vsub.f32 %v17, %v154
    %v156 = vand.u32 %v155, 4294901760
    %v157 = vsub.f32 %v155, %v156
    %v158 = vand.u32 %v157, 4294901760
    %159 = vmatpush1.msra.mxu0 %v158
    %160 = vmatprep.subr.mxu0 0.0
    %161 = vmatpush1.msra.mxu0 0.0
    %162 = vmatprep.subr.mxu0 0.0
    %163 = vmatpush1.msra.mxu0 0.0
    %164 = vmatprep.subr.mxu0 0.0
    %165 = vmatpush1.msra.mxu0 0.0
    %166 = vmatprep.subr.mxu0 0.0
    %167 = vmatpush1.msra.mxu0 0.0
    %168 = vmatprep.subr.mxu0 0.0
    %169 = vmatpush1.msra.mxu0 0.0
    %170 = vmatprep.subr.mxu0 0.0
    %171 = vmatpush1.msra.mxu0 0.0
    %172 = vmatprep.subr.mxu0 0.0
    %173 = vmatpush1.msra.mxu0 0.0
    %174 = vmatprep.subr.mxu0 0.0
    %175 = vmatpush1.msra.mxu0 0.0
    %176 = vmatprep.subr.mxu0 0.0
    %177 = vmatpush1.msra.mxu0 0.0
    %178 = vmatprep.subr.mxu0 0.0
    %179 = vmatpush1.msra.mxu0 0.0
    %180 = vmatprep.subr.mxu0 0.0
    %181 = vmatpush1.msra.mxu0 0.0
    %182 = vmatprep.subr.mxu0 0.0
    %183 = vmatpush1.msra.mxu0 0.0
    %184 = vmatprep.subr.mxu0 0.0
    %185 = vmatpush1.msra.mxu0 0.0
    %186 = vmatprep.subr.mxu0 0.0
    %187 = vmatpush1.msra.mxu0 0.0
    %188 = vmatprep.subr.mxu0 0.0
    %189 = vmatpush1.msra.mxu0 0.0
    %190 = vmatprep.subr.mxu0 0.0
    %191 = vmatpush1.msra.mxu0 0.0
    %192 = vmatprep.subr.mxu0 0.0
    %193 = vmatpush1.msra.mxu0 0.0
    %194 = vmatprep.subr.mxu0 0.0
    %195 = vmatpush1.msra.mxu0 0.0
    %196 = vmatprep.subr.mxu0 0.0
    %197 = vmatpush1.msra.mxu0 0.0
    %198 = vmatprep.subr.mxu0 0.0
    %199 = vmatpush1.msra.mxu0 0.0
    %200 = vmatprep.subr.mxu0 0.0
    %201 = vmatpush1.msra.mxu0 0.0
    %202 = vmatprep.subr.mxu0 0.0
    %203 = vmatpush1.msra.mxu0 0.0
    %204 = vmatprep.subr.mxu0 0.0
    %205 = vmatpush1.msra.mxu0 0.0
    %206 = vmatprep.subr.mxu0 0.0
    %207 = vmatpush1.msra.mxu0 0.0
    %208 = vmatprep.subr.mxu0 0.0
    %209 = vmatpush1.msra.mxu0 0.0
    %210 = vmatprep.subr.mxu0 0.0
    %211 = vmatpush1.msra.mxu0 0.0
    %212 = vmatprep.subr.mxu0 0.0
    %213 = vmatpush1.msra.mxu0 0.0
    %214 = vmatprep.subr.mxu0 0.0
    %215 = vmatpush1.msra.mxu0 0.0
    %216 = vmatprep.mubr.f32.mxu0 0.0
    %v217 = vand.u32 %v38, 4294901760
    %218 = vmatmul.mubr.f32.gmra.mrb[0].mxu0 %v217
    %v219 = vpop.f32.mrb[0].mxu0
    %v220 = vadd.f32 %v119, %v219
    %v221 = vpop.f32.mrb[0].mxu0
    %222 = vmatprep.mubr.f32.mxu0 0.0
    %v223 = vand.u32 %v41, 4294901760
    %224 = vmatmul.mubr.f32.gmra.mrb[0].mxu0 %v223
    %v225 = vpop.f32.mrb[0].mxu0
    %v226 = vadd.f32 %v129, %v225
    %v227 = vpop.f32.mrb[0].mxu0
    %228 = vdwg.mxu0
    %229 = vmatprep.subr.mxu0 0.0
    %v230 = vand.u32 %v14, 4294901760
    %v231 = vsub.f32 %v14, %v230
    %232 = vmatpush1.msra.mxu0 %v231
    %233 = vmatprep.subr.mxu0 0.0
    %v234 = vand.u32 %v15, 4294901760
    %v235 = vsub.f32 %v15, %v234
    %236 = vmatpush1.msra.mxu0 %v235
    %237 = vmatprep.subr.mxu0 0.0
    %v238 = vand.u32 %v16, 4294901760
    %v239 = vsub.f32 %v16, %v238
    %240 = vmatpush1.msra.mxu0 %v239
    %241 = vmatprep.subr.mxu0 0.0
    %v242 = vand.u32 %v17, 4294901760
    %v243 = vsub.f32 %v17, %v242
    %244 = vmatpush1.msra.mxu0 %v243
    %245 = vmatprep.subr.mxu0 0.0
    %246 = vmatpush1.msra.mxu0 0.0
    %247 = vmatprep.subr.mxu0 0.0
    %248 = vmatpush1.msra.mxu0 0.0
    %249 = vmatprep.subr.mxu0 0.0
    %250 = vmatpush1.msra.mxu0 0.0
    %251 = vmatprep.subr.mxu0 0.0
    %252 = vmatpush1.msra.mxu0 0.0
    %253 = vmatprep.subr.mxu0 0.0
    %254 = vmatpush1.msra.mxu0 0.0
    %255 = vmatprep.subr.mxu0 0.0
    %256 = vmatpush1.msra.mxu0 0.0
    %257 = vmatprep.subr.mxu0 0.0
    %258 = vmatpush1.msra.mxu0 0.0
    %259 = vmatprep.subr.mxu0 0.0
    %260 = vmatpush1.msra.mxu0 0.0
    %261 = vmatprep.subr.mxu0 0.0
    %262 = vmatpush1.msra.mxu0 0.0
    %263 = vmatprep.subr.mxu0 0.0
    %264 = vmatpush1.msra.mxu0 0.0
    %265 = vmatprep.subr.mxu0 0.0
    %266 = vmatpush1.msra.mxu0 0.0
    %267 = vmatprep.subr.mxu0 0.0
    %268 = vmatpush1.msra.mxu0 0.0
    %269 = vmatprep.subr.mxu0 0.0
    %270 = vmatpush1.msra.mxu0 0.0
    %271 = vmatprep.subr.mxu0 0.0
    %272 = vmatpush1.msra.mxu0 0.0
    %273 = vmatprep.subr.mxu0 0.0
    %274 = vmatpush1.msra.mxu0 0.0
    %275 = vmatprep.subr.mxu0 0.0
    %276 = vmatpush1.msra.mxu0 0.0
    %277 = vmatprep.subr.mxu0 0.0
    %278 = vmatpush1.msra.mxu0 0.0
    %279 = vmatprep.subr.mxu0 0.0
    %280 = vmatpush1.msra.mxu0 0.0
    %281 = vmatprep.subr.mxu0 0.0
    %282 = vmatpush1.msra.mxu0 0.0
    %283 = vmatprep.subr.mxu0 0.0
    %284 = vmatpush1.msra.mxu0 0.0
    %285 = vmatprep.subr.mxu0 0.0
    %286 = vmatpush1.msra.mxu0 0.0
    %287 = vmatprep.subr.mxu0 0.0
    %288 = vmatpush1.msra.mxu0 0.0
    %289 = vmatprep.subr.mxu0 0.0
    %290 = vmatpush1.msra.mxu0 0.0
    %291 = vmatprep.subr.mxu0 0.0
    %292 = vmatpush1.msra.mxu0 0.0
    %293 = vmatprep.subr.mxu0 0.0
    %294 = vmatpush1.msra.mxu0 0.0
    %295 = vmatprep.subr.mxu0 0.0
    %296 = vmatpush1.msra.mxu0 0.0
    %297 = vmatprep.subr.mxu0 0.0
    %298 = vmatpush1.msra.mxu0 0.0
    %299 = vmatprep.subr.mxu0 0.0
    %300 = vmatpush1.msra.mxu0 0.0
    %301 = vmatprep.mubr.f32.mxu0 0.0
    %v302 = vand.u32 %v38, 4294901760
    %v303 = vsub.f32 %v38, %v302
    %304 = vmatmul.mubr.f32.gmra.mrb[0].mxu0 %v303
    %v305 = vpop.f32.mrb[0].mxu0
    %v306 = vadd.f32 %v220, %v305
    %v307 = vpop.f32.mrb[0].mxu0
    %308 = vmatprep.mubr.f32.mxu0 0.0
    %v309 = vand.u32 %v41, 4294901760
    %v310 = vsub.f32 %v41, %v309
    %311 = vmatmul.mubr.f32.gmra.mrb[0].mxu0 %v310
    %v312 = vpop.f32.mrb[0].mxu0
    %v313 = vadd.f32 %v226, %v312
    %v314 = vpop.f32.mrb[0].mxu0
    %315 = vdwg.mxu0
    %316 = vmatprep.subr.mxu0 0.0
    %v317 = vand.u32 %v14, 4294901760
    %318 = vmatpush1.msra.mxu0 %v317
    %319 = vmatprep.subr.mxu0 0.0
    %v320 = vand.u32 %v15, 4294901760
    %321 = vmatpush1.msra.mxu0 %v320
    %322 = vmatprep.subr.mxu0 0.0
    %v323 = vand.u32 %v16, 4294901760
    %324 = vmatpush1.msra.mxu0 %v323
    %325 = vmatprep.subr.mxu0 0.0
    %v326 = vand.u32 %v17, 4294901760
    %327 = vmatpush1.msra.mxu0 %v326
    %328 = vmatprep.subr.mxu0 0.0
    %329 = vmatpush1.msra.mxu0 0.0
    %330 = vmatprep.subr.mxu0 0.0
    %331 = vmatpush1.msra.mxu0 0.0
    %332 = vmatprep.subr.mxu0 0.0
    %333 = vmatpush1.msra.mxu0 0.0
    %334 = vmatprep.subr.mxu0 0.0
    %335 = vmatpush1.msra.mxu0 0.0
    %336 = vmatprep.subr.mxu0 0.0
    %337 = vmatpush1.msra.mxu0 0.0
    %338 = vmatprep.subr.mxu0 0.0
    %339 = vmatpush1.msra.mxu0 0.0
    %340 = vmatprep.subr.mxu0 0.0
    %341 = vmatpush1.msra.mxu0 0.0
    %342 = vmatprep.subr.mxu0 0.0
    %343 = vmatpush1.msra.mxu0 0.0
    %344 = vmatprep.subr.mxu0 0.0
    %345 = vmatpush1.msra.mxu0 0.0
    %346 = vmatprep.subr.mxu0 0.0
    %347 = vmatpush1.msra.mxu0 0.0
    %348 = vmatprep.subr.mxu0 0.0
    %349 = vmatpush1.msra.mxu0 0.0
    %350 = vmatprep.subr.mxu0 0.0
    %351 = vmatpush1.msra.mxu0 0.0
    %352 = vmatprep.subr.mxu0 0.0
    %353 = vmatpush1.msra.mxu0 0.0
    %354 = vmatprep.subr.mxu0 0.0
    %355 = vmatpush1.msra.mxu0 0.0
    %356 = vmatprep.subr.mxu0 0.0
    %357 = vmatpush1.msra.mxu0 0.0
    %358 = vmatprep.subr.mxu0 0.0
    %359 = vmatpush1.msra.mxu0 0.0
    %360 = vmatprep.subr.mxu0 0.0
    %361 = vmatpush1.msra.mxu0 0.0
    %362 = vmatprep.subr.mxu0 0.0
    %363 = vmatpush1.msra.mxu0 0.0
    %364 = vmatprep.subr.mxu0 0.0
    %365 = vmatpush1.msra.mxu0 0.0
    %366 = vmatprep.subr.mxu0 0.0
    %367 = vmatpush1.msra.mxu0 0.0
    %368 = vmatprep.subr.mxu0 0.0
    %369 = vmatpush1.msra.mxu0 0.0
    %370 = vmatprep.subr.mxu0 0.0
    %371 = vmatpush1.msra.mxu0 0.0
    %372 = vmatprep.subr.mxu0 0.0
    %373 = vmatpush1.msra.mxu0 0.0
    %374 = vmatprep.subr.mxu0 0.0
    %375 = vmatpush1.msra.mxu0 0.0
    %376 = vmatprep.subr.mxu0 0.0
    %377 = vmatpush1.msra.mxu0 0.0
    %378 = vmatprep.subr.mxu0 0.0
    %379 = vmatpush1.msra.mxu0 0.0
    %380 = vmatprep.subr.mxu0 0.0
    %381 = vmatpush1.msra.mxu0 0.0
    %382 = vmatprep.subr.mxu0 0.0
    %383 = vmatpush1.msra.mxu0 0.0
    %384 = vmatprep.mubr.f32.mxu0 0.0
    %v385 = vand.u32 %v38, 4294901760
    %v386 = vsub.f32 %v38, %v385
    %v387 = vand.u32 %v386, 4294901760
    %388 = vmatmul.mubr.f32.gmra.mrb[0].mxu0 %v387
    %v389 = vpop.f32.mrb[0].mxu0
    %v390 = vadd.f32 %v306, %v389
    %v391 = vpop.f32.mrb[0].mxu0
    %392 = vmatprep.mubr.f32.mxu0 0.0
    %v393 = vand.u32 %v41, 4294901760
    %v394 = vsub.f32 %v41, %v393
    %v395 = vand.u32 %v394, 4294901760
    %396 = vmatmul.mubr.f32.gmra.mrb[0].mxu0 %v395
    %v397 = vpop.f32.mrb[0].mxu0
    %v398 = vadd.f32 %v313, %v397
    %v399 = vpop.f32.mrb[0].mxu0
    %400 = vdwg.mxu0
    %401 = vmatprep.subr.mxu0 0.0
    %v402 = vand.u32 %v14, 4294901760
    %v403 = vsub.f32 %v14, %v402
    %v404 = vand.u32 %v403, 4294901760
    %405 = vmatpush1.msra.mxu0 %v404
    %406 = vmatprep.subr.mxu0 0.0
    %v407 = vand.u32 %v15, 4294901760
    %v408 = vsub.f32 %v15, %v407
    %v409 = vand.u32 %v408, 4294901760
    %410 = vmatpush1.msra.mxu0 %v409
    %411 = vmatprep.subr.mxu0 0.0
    %v412 = vand.u32 %v16, 4294901760
    %v413 = vsub.f32 %v16, %v412
    %v414 = vand.u32 %v413, 4294901760
    %415 = vmatpush1.msra.mxu0 %v414
    %416 = vmatprep.subr.mxu0 0.0
    %v417 = vand.u32 %v17, 4294901760
    %v418 = vsub.f32 %v17, %v417
    %v419 = vand.u32 %v418, 4294901760
    %420 = vmatpush1.msra.mxu0 %v419
    %421 = vmatprep.subr.mxu0 0.0
    %422 = vmatpush1.msra.mxu0 0.0
    %423 = vmatprep.subr.mxu0 0.0
    %424 = vmatpush1.msra.mxu0 0.0
    %425 = vmatprep.subr.mxu0 0.0
    %426 = vmatpush1.msra.mxu0 0.0
    %427 = vmatprep.subr.mxu0 0.0
    %428 = vmatpush1.msra.mxu0 0.0
    %429 = vmatprep.subr.mxu0 0.0
    %430 = vmatpush1.msra.mxu0 0.0
    %431 = vmatprep.subr.mxu0 0.0
    %432 = vmatpush1.msra.mxu0 0.0
    %433 = vmatprep.subr.mxu0 0.0
    %434 = vmatpush1.msra.mxu0 0.0
    %435 = vmatprep.subr.mxu0 0.0
    %436 = vmatpush1.msra.mxu0 0.0
    %437 = vmatprep.subr.mxu0 0.0
    %438 = vmatpush1.msra.mxu0 0.0
    %439 = vmatprep.subr.mxu0 0.0
    %440 = vmatpush1.msra.mxu0 0.0
    %441 = vmatprep.subr.mxu0 0.0
    %442 = vmatpush1.msra.mxu0 0.0
    %443 = vmatprep.subr.mxu0 0.0
    %444 = vmatpush1.msra.mxu0 0.0
    %445 = vmatprep.subr.mxu0 0.0
    %446 = vmatpush1.msra.mxu0 0.0
    %447 = vmatprep.subr.mxu0 0.0
    %448 = vmatpush1.msra.mxu0 0.0
    %449 = vmatprep.subr.mxu0 0.0
    %450 = vmatpush1.msra.mxu0 0.0
    %451 = vmatprep.subr.mxu0 0.0
    %452 = vmatpush1.msra.mxu0 0.0
    %453 = vmatprep.subr.mxu0 0.0
    %454 = vmatpush1.msra.mxu0 0.0
    %455 = vmatprep.subr.mxu0 0.0
    %456 = vmatpush1.msra.mxu0 0.0
    %457 = vmatprep.subr.mxu0 0.0
    %458 = vmatpush1.msra.mxu0 0.0
    %459 = vmatprep.subr.mxu0 0.0
    %460 = vmatpush1.msra.mxu0 0.0
    %461 = vmatprep.subr.mxu0 0.0
    %462 = vmatpush1.msra.mxu0 0.0
    %463 = vmatprep.subr.mxu0 0.0
    %464 = vmatpush1.msra.mxu0 0.0
    %465 = vmatprep.subr.mxu0 0.0
    %466 = vmatpush1.msra.mxu0 0.0
    %467 = vmatprep.subr.mxu0 0.0
    %468 = vmatpush1.msra.mxu0 0.0
    %469 = vmatprep.subr.mxu0 0.0
    %470 = vmatpush1.msra.mxu0 0.0
    %471 = vmatprep.subr.mxu0 0.0
    %472 = vmatpush1.msra.mxu0 0.0
    %473 = vmatprep.subr.mxu0 0.0
    %474 = vmatpush1.msra.mxu0 0.0
    %475 = vmatprep.subr.mxu0 0.0
    %476 = vmatpush1.msra.mxu0 0.0
    %477 = vmatprep.mubr.f32.mxu0 0.0
    %v478 = vand.u32 %v38, 4294901760
    %479 = vmatmul.mubr.f32.gmra.mrb[0].mxu0 %v478
    %v480 = vpop.f32.mrb[0].mxu0
    %v481 = vadd.f32 %v390, %v480
    %v482 = vpop.f32.mrb[0].mxu0
    %483 = vmatprep.mubr.f32.mxu0 0.0
    %v484 = vand.u32 %v41, 4294901760
    %485 = vmatmul.mubr.f32.gmra.mrb[0].mxu0 %v484
    %v486 = vpop.f32.mrb[0].mxu0
    %v487 = vadd.f32 %v398, %v486
    %v488 = vpop.f32.mrb[0].mxu0
    %489 = vdwg.mxu0
    %490 = vmatprep.subr.mxu0 0.0
    %v491 = vand.u32 %v14, 4294901760
    %492 = vmatpush1.msra.mxu0 %v491
    %493 = vmatprep.subr.mxu0 0.0
    %v494 = vand.u32 %v15, 4294901760
    %495 = vmatpush1.msra.mxu0 %v494
    %496 = vmatprep.subr.mxu0 0.0
    %v497 = vand.u32 %v16, 4294901760
    %498 = vmatpush1.msra.mxu0 %v497
    %499 = vmatprep.subr.mxu0 0.0
    %v500 = vand.u32 %v17, 4294901760
    %501 = vmatpush1.msra.mxu0 %v500
    %502 = vmatprep.subr.mxu0 0.0
    %503 = vmatpush1.msra.mxu0 0.0
    %504 = vmatprep.subr.mxu0 0.0
    %505 = vmatpush1.msra.mxu0 0.0
    %506 = vmatprep.subr.mxu0 0.0
    %507 = vmatpush1.msra.mxu0 0.0
    %508 = vmatprep.subr.mxu0 0.0
    %509 = vmatpush1.msra.mxu0 0.0
    %510 = vmatprep.subr.mxu0 0.0
    %511 = vmatpush1.msra.mxu0 0.0
    %512 = vmatprep.subr.mxu0 0.0
    %513 = vmatpush1.msra.mxu0 0.0
    %514 = vmatprep.subr.mxu0 0.0
    %515 = vmatpush1.msra.mxu0 0.0
    %516 = vmatprep.subr.mxu0 0.0
    %517 = vmatpush1.msra.mxu0 0.0
    %518 = vmatprep.subr.mxu0 0.0
    %519 = vmatpush1.msra.mxu0 0.0
    %520 = vmatprep.subr.mxu0 0.0
    %521 = vmatpush1.msra.mxu0 0.0
    %522 = vmatprep.subr.mxu0 0.0
    %523 = vmatpush1.msra.mxu0 0.0
    %524 = vmatprep.subr.mxu0 0.0
    %525 = vmatpush1.msra.mxu0 0.0
    %526 = vmatprep.subr.mxu0 0.0
    %527 = vmatpush1.msra.mxu0 0.0
    %528 = vmatprep.subr.mxu0 0.0
    %529 = vmatpush1.msra.mxu0 0.0
    %530 = vmatprep.subr.mxu0 0.0
    %531 = vmatpush1.msra.mxu0 0.0
    %532 = vmatprep.subr.mxu0 0.0
    %533 = vmatpush1.msra.mxu0 0.0
    %534 = vmatprep.subr.mxu0 0.0
    %535 = vmatpush1.msra.mxu0 0.0
    %536 = vmatprep.subr.mxu0 0.0
    %537 = vmatpush1.msra.mxu0 0.0
    %538 = vmatprep.subr.mxu0 0.0
    %539 = vmatpush1.msra.mxu0 0.0
    %540 = vmatprep.subr.mxu0 0.0
    %541 = vmatpush1.msra.mxu0 0.0
    %542 = vmatprep.subr.mxu0 0.0
    %543 = vmatpush1.msra.mxu0 0.0
    %544 = vmatprep.subr.mxu0 0.0
    %545 = vmatpush1.msra.mxu0 0.0
    %546 = vmatprep.subr.mxu0 0.0
    %547 = vmatpush1.msra.mxu0 0.0
    %548 = vmatprep.subr.mxu0 0.0
    %549 = vmatpush1.msra.mxu0 0.0
    %550 = vmatprep.subr.mxu0 0.0
    %551 = vmatpush1.msra.mxu0 0.0
    %552 = vmatprep.subr.mxu0 0.0
    %553 = vmatpush1.msra.mxu0 0.0
    %554 = vmatprep.subr.mxu0 0.0
    %555 = vmatpush1.msra.mxu0 0.0
    %556 = vmatprep.subr.mxu0 0.0
    %557 = vmatpush1.msra.mxu0 0.0
    %558 = vmatprep.mubr.f32.mxu0 0.0
    %v559 = vand.u32 %v38, 4294901760
    %560 = vmatmul.mubr.f32.gmra.mrb[0].mxu0 %v559
    %v561 = vpop.f32.mrb[0].mxu0
    %v562 = vadd.f32 %v481, %v561
    %v563 = vpop.f32.mrb[0].mxu0
    %564 = vmatprep.mubr.f32.mxu0 0.0
    %v565 = vand.u32 %v41, 4294901760
    %566 = vmatmul.mubr.f32.gmra.mrb[0].mxu0 %v565
    %v567 = vpop.f32.mrb[0].mxu0
    %v568 = vadd.f32 %v487, %v567
    %v569 = vpop.f32.mrb[0].mxu0
    %570 = vdwg.mxu0
    %vm571 = vcmask 523264
    %v572 = vsel %vm571, %v562, 0.0
    %573 = vadd.xlane.f32.xlu0 %v572
    %v574 = vpop.xlane.xlu0 %573
    %v575 = vrot.slane %v574, 4
    %v576 = vadd.f32 %v574, %v575
    %v577 = vrot.slane %v576, 2
    %v578 = vadd.f32 %v576, %v577
    %v579 = vrot.slane %v578, 1
    %v580 = vadd.f32 %v578, %v579
    %s581 = vtos %v580
    %s582 = smul.f32 %s581, 0.001953125
    %v583 = vstv %s582
    %v584 = vsub.f32 %v562, %v583
    %v585 = vmul.f32 %v584, %v584
    %v586 = vsel %vm571, %v585, 0.0
    %587 = vadd.xlane.f32.xlu0 %v586
    %v588 = vpop.xlane.xlu0 %587
    %v589 = vrot.slane %v588, 4
    %v590 = vadd.f32 %v588, %v589
    %v591 = vrot.slane %v590, 2
    %v592 = vadd.f32 %v590, %v591
    %v593 = vrot.slane %v592, 1
    %v594 = vadd.f32 %v592, %v593
    %s595 = vtos %v594
    %s596 = smul.f32 %s595, 0.001953125
    %s597 = sadd.f32 %s596, 1e-05
    %v598 = vstv %s597
    %v599 = vrsqrt.pop %v598
    %s600 = vtos %v599
    %v601 = vstv %s600
    %v602 = vmul.f32 %v584, %v601
    %v603 = vsel %vm571, %v568, 0.0
    %604 = vadd.xlane.f32.xlu0 %v603
    %v605 = vpop.xlane.xlu0 %604
    %v606 = vrot.slane %v605, 4
    %v607 = vadd.f32 %v605, %v606
    %v608 = vrot.slane %v607, 2
    %v609 = vadd.f32 %v607, %v608
    %v610 = vrot.slane %v609, 1
    %v611 = vadd.f32 %v609, %v610
    %s612 = vtos %v611
    %s613 = smul.f32 %s612, 0.001953125
    %v614 = vstv %s613
    %v615 = vsub.f32 %v568, %v614
    %v616 = vmul.f32 %v615, %v615
    %v617 = vsel %vm571, %v616, 0.0
    %618 = vadd.xlane.f32.xlu0 %v617
    %v619 = vpop.xlane.xlu0 %618
    %v620 = vrot.slane %v619, 4
    %v621 = vadd.f32 %v619, %v620
    %v622 = vrot.slane %v621, 2
    %v623 = vadd.f32 %v621, %v622
    %v624 = vrot.slane %v623, 1
    %v625 = vadd.f32 %v623, %v624
    %s626 = vtos %v625
    %s627 = smul.f32 %s626, 0.001953125
    %s628 = sadd.f32 %s627, 1e-05
    %v629 = vstv %s628
    %v630 = vrsqrt.pop %v629
    %s631 = vtos %v630
    %v632 = vstv %s631
    %v633 = vmul.f32 %v615, %v632
    %v634 = vmul.f32 %v602, %v22
    %v635 = vmul.f32 %v633, %v23
    %v636 = vadd.f32 %v634, %v24
    %v637 = vadd.f32 %v635, %v25
    %640 = vrot.lane.b32.xlu0 %v636, 112
    %v641 = vpop.permute.xlu0 %640
    %642 = vrot.lane.b32.xlu0 %v637, 112
    %v643 = vpop.permute.xlu0 %642
    %vm644 = vcmask 31744
    %v645 = vsel %vm644, %v636, 0
    %v647 = vsel %vm644, %v637, 0
    %v649 = vsel %vm644, %v641, 0
    %v651 = vsel %vm644, %v643, 0
    %653 = vmatprep.subr.mxu0 0.0
    %v654 = vand.u32 %v649, 4294901760
    %655 = vmatpush1.xpose.msra.mxu0 %v654
    %656 = vmatprep.subr.mxu0 0.0
    %v657 = vand.u32 %v651, 4294901760
    %658 = vmatpush1.xpose.msra.mxu0 %v657
    %659 = vmatprep.subr.mxu0 0.0
    %660 = vmatpush1.xpose.msra.mxu0 0.0
    %661 = vmatprep.subr.mxu0 0.0
    %662 = vmatpush1.xpose.msra.mxu0 0.0
    %663 = vmatprep.subr.mxu0 0.0
    %664 = vmatpush1.xpose.msra.mxu0 0.0
    %665 = vmatprep.subr.mxu0 0.0
    %666 = vmatpush1.xpose.msra.mxu0 0.0
    %667 = vmatprep.subr.mxu0 0.0
    %668 = vmatpush1.xpose.msra.mxu0 0.0
    %669 = vmatprep.subr.mxu0 0.0
    %670 = vmatpush1.xpose.msra.mxu0 0.0
    %671 = vmatprep.subr.mxu0 0.0
    %672 = vmatpush1.xpose.msra.mxu0 0.0
    %673 = vmatprep.subr.mxu0 0.0
    %674 = vmatpush1.xpose.msra.mxu0 0.0
    %675 = vmatprep.subr.mxu0 0.0
    %676 = vmatpush1.xpose.msra.mxu0 0.0
    %677 = vmatprep.subr.mxu0 0.0
    %678 = vmatpush1.xpose.msra.mxu0 0.0
    %679 = vmatprep.subr.mxu0 0.0
    %680 = vmatpush1.xpose.msra.mxu0 0.0
    %681 = vmatprep.subr.mxu0 0.0
    %682 = vmatpush1.xpose.msra.mxu0 0.0
    %683 = vmatprep.subr.mxu0 0.0
    %684 = vmatpush1.xpose.msra.mxu0 0.0
    %685 = vmatprep.subr.mxu0 0.0
    %686 = vmatpush1.xpose.msra.mxu0 0.0
    %687 = vmatprep.subr.mxu0 0.0
    %688 = vmatpush1.xpose.msra.mxu0 0.0
    %689 = vmatprep.subr.mxu0 0.0
    %690 = vmatpush1.xpose.msra.mxu0 0.0
    %691 = vmatprep.subr.mxu0 0.0
    %692 = vmatpush1.xpose.msra.mxu0 0.0
    %693 = vmatprep.subr.mxu0 0.0
    %694 = vmatpush1.xpose.msra.mxu0 0.0
    %695 = vmatprep.subr.mxu0 0.0
    %696 = vmatpush1.xpose.msra.mxu0 0.0
    %697 = vmatprep.subr.mxu0 0.0
    %698 = vmatpush1.xpose.msra.mxu0 0.0
    %699 = vmatprep.subr.mxu0 0.0
    %700 = vmatpush1.xpose.msra.mxu0 0.0
    %701 = vmatprep.subr.mxu0 0.0
    %702 = vmatpush1.xpose.msra.mxu0 0.0
    %703 = vmatprep.subr.mxu0 0.0
    %704 = vmatpush1.xpose.msra.mxu0 0.0
    %705 = vmatprep.subr.mxu0 0.0
    %706 = vmatpush1.xpose.msra.mxu0 0.0
    %707 = vmatprep.subr.mxu0 0.0
    %708 = vmatpush1.xpose.msra.mxu0 0.0
    %709 = vmatprep.subr.mxu0 0.0
    %710 = vmatpush1.xpose.msra.mxu0 0.0
    %711 = vmatprep.subr.mxu0 0.0
    %712 = vmatpush1.xpose.msra.mxu0 0.0
    %713 = vmatprep.subr.mxu0 0.0
    %714 = vmatpush1.xpose.msra.mxu0 0.0
    %715 = vmatprep.subr.mxu0 0.0
    %716 = vmatpush1.xpose.msra.mxu0 0.0
    %717 = vmatprep.subr.mxu0 0.0
    %718 = vmatpush1.xpose.msra.mxu0 0.0
    %719 = vmatprep.mubr.f32.mxu0 0.0
    %v720 = vand.u32 %v645, 4294901760
    %v721 = vsub.f32 %v645, %v720
    %v722 = vand.u32 %v721, 4294901760
    %v723 = vsub.f32 %v721, %v722
    %v724 = vand.u32 %v723, 4294901760
    %725 = vmatmul.mubr.f32.gmra.mrb[0].mxu0 %v724
    %v726 = vpop.f32.mrb[0].mxu0
    %v727 = vadd.f32 %v30, %v726
    %v728 = vpop.f32.mrb[0].mxu0
    %729 = vmatprep.mubr.f32.mxu0 0.0
    %v730 = vand.u32 %v647, 4294901760
    %v731 = vsub.f32 %v647, %v730
    %v732 = vand.u32 %v731, 4294901760
    %v733 = vsub.f32 %v731, %v732
    %v734 = vand.u32 %v733, 4294901760
    %735 = vmatmul.mubr.f32.gmra.mrb[0].mxu0 %v734
    %v736 = vpop.f32.mrb[0].mxu0
    %v737 = vadd.f32 %v31, %v736
    %v738 = vpop.f32.mrb[0].mxu0
    %739 = vdwg.mxu0
    %740 = vmatprep.subr.mxu0 0.0
    %v741 = vand.u32 %v649, 4294901760
    %v742 = vsub.f32 %v649, %v741
    %v743 = vand.u32 %v742, 4294901760
    %v744 = vsub.f32 %v742, %v743
    %v745 = vand.u32 %v744, 4294901760
    %746 = vmatpush1.xpose.msra.mxu0 %v745
    %747 = vmatprep.subr.mxu0 0.0
    %v748 = vand.u32 %v651, 4294901760
    %v749 = vsub.f32 %v651, %v748
    %v750 = vand.u32 %v749, 4294901760
    %v751 = vsub.f32 %v749, %v750
    %v752 = vand.u32 %v751, 4294901760
    %753 = vmatpush1.xpose.msra.mxu0 %v752
    %754 = vmatprep.subr.mxu0 0.0
    %755 = vmatpush1.xpose.msra.mxu0 0.0
    %756 = vmatprep.subr.mxu0 0.0
    %757 = vmatpush1.xpose.msra.mxu0 0.0
    %758 = vmatprep.subr.mxu0 0.0
    %759 = vmatpush1.xpose.msra.mxu0 0.0
    %760 = vmatprep.subr.mxu0 0.0
    %761 = vmatpush1.xpose.msra.mxu0 0.0
    %762 = vmatprep.subr.mxu0 0.0
    %763 = vmatpush1.xpose.msra.mxu0 0.0
    %764 = vmatprep.subr.mxu0 0.0
    %765 = vmatpush1.xpose.msra.mxu0 0.0
    %766 = vmatprep.subr.mxu0 0.0
    %767 = vmatpush1.xpose.msra.mxu0 0.0
    %768 = vmatprep.subr.mxu0 0.0
    %769 = vmatpush1.xpose.msra.mxu0 0.0
    %770 = vmatprep.subr.mxu0 0.0
    %771 = vmatpush1.xpose.msra.mxu0 0.0
    %772 = vmatprep.subr.mxu0 0.0
    %773 = vmatpush1.xpose.msra.mxu0 0.0
    %774 = vmatprep.subr.mxu0 0.0
    %775 = vmatpush1.xpose.msra.mxu0 0.0
    %776 = vmatprep.subr.mxu0 0.0
    %777 = vmatpush1.xpose.msra.mxu0 0.0
    %778 = vmatprep.subr.mxu0 0.0
    %779 = vmatpush1.xpose.msra.mxu0 0.0
    %780 = vmatprep.subr.mxu0 0.0
    %781 = vmatpush1.xpose.msra.mxu0 0.0
    %782 = vmatprep.subr.mxu0 0.0
    %783 = vmatpush1.xpose.msra.mxu0 0.0
    %784 = vmatprep.subr.mxu0 0.0
    %785 = vmatpush1.xpose.msra.mxu0 0.0
    %786 = vmatprep.subr.mxu0 0.0
    %787 = vmatpush1.xpose.msra.mxu0 0.0
    %788 = vmatprep.subr.mxu0 0.0
    %789 = vmatpush1.xpose.msra.mxu0 0.0
    %790 = vmatprep.subr.mxu0 0.0
    %791 = vmatpush1.xpose.msra.mxu0 0.0
    %792 = vmatprep.subr.mxu0 0.0
    %793 = vmatpush1.xpose.msra.mxu0 0.0
    %794 = vmatprep.subr.mxu0 0.0
    %795 = vmatpush1.xpose.msra.mxu0 0.0
    %796 = vmatprep.subr.mxu0 0.0
    %797 = vmatpush1.xpose.msra.mxu0 0.0
    %798 = vmatprep.subr.mxu0 0.0
    %799 = vmatpush1.xpose.msra.mxu0 0.0
    %800 = vmatprep.subr.mxu0 0.0
    %801 = vmatpush1.xpose.msra.mxu0 0.0
    %802 = vmatprep.subr.mxu0 0.0
    %803 = vmatpush1.xpose.msra.mxu0 0.0
    %804 = vmatprep.subr.mxu0 0.0
    %805 = vmatpush1.xpose.msra.mxu0 0.0
    %806 = vmatprep.subr.mxu0 0.0
    %807 = vmatpush1.xpose.msra.mxu0 0.0
    %808 = vmatprep.subr.mxu0 0.0
    %809 = vmatpush1.xpose.msra.mxu0 0.0
    %810 = vmatprep.subr.mxu0 0.0
    %811 = vmatpush1.xpose.msra.mxu0 0.0
    %812 = vmatprep.subr.mxu0 0.0
    %813 = vmatpush1.xpose.msra.mxu0 0.0
    %814 = vmatprep.mubr.f32.mxu0 0.0
    %v815 = vand.u32 %v645, 4294901760
    %816 = vmatmul.mubr.f32.gmra.mrb[0].mxu0 %v815
    %v817 = vpop.f32.mrb[0].mxu0
    %v818 = vadd.f32 %v727, %v817
    %v819 = vpop.f32.mrb[0].mxu0
    %820 = vmatprep.mubr.f32.mxu0 0.0
    %v821 = vand.u32 %v647, 4294901760
    %822 = vmatmul.mubr.f32.gmra.mrb[0].mxu0 %v821
    %v823 = vpop.f32.mrb[0].mxu0
    %v824 = vadd.f32 %v737, %v823
    %v825 = vpop.f32.mrb[0].mxu0
    %826 = vdwg.mxu0
    %827 = vmatprep.subr.mxu0 0.0
    %v828 = vand.u32 %v649, 4294901760
    %v829 = vsub.f32 %v649, %v828
    %830 = vmatpush1.xpose.msra.mxu0 %v829
    %831 = vmatprep.subr.mxu0 0.0
    %v832 = vand.u32 %v651, 4294901760
    %v833 = vsub.f32 %v651, %v832
    %834 = vmatpush1.xpose.msra.mxu0 %v833
    %835 = vmatprep.subr.mxu0 0.0
    %836 = vmatpush1.xpose.msra.mxu0 0.0
    %837 = vmatprep.subr.mxu0 0.0
    %838 = vmatpush1.xpose.msra.mxu0 0.0
    %839 = vmatprep.subr.mxu0 0.0
    %840 = vmatpush1.xpose.msra.mxu0 0.0
    %841 = vmatprep.subr.mxu0 0.0
    %842 = vmatpush1.xpose.msra.mxu0 0.0
    %843 = vmatprep.subr.mxu0 0.0
    %844 = vmatpush1.xpose.msra.mxu0 0.0
    %845 = vmatprep.subr.mxu0 0.0
    %846 = vmatpush1.xpose.msra.mxu0 0.0
    %847 = vmatprep.subr.mxu0 0.0
    %848 = vmatpush1.xpose.msra.mxu0 0.0
    %849 = vmatprep.subr.mxu0 0.0
    %850 = vmatpush1.xpose.msra.mxu0 0.0
    %851 = vmatprep.subr.mxu0 0.0
    %852 = vmatpush1.xpose.msra.mxu0 0.0
    %853 = vmatprep.subr.mxu0 0.0
    %854 = vmatpush1.xpose.msra.mxu0 0.0
    %855 = vmatprep.subr.mxu0 0.0
    %856 = vmatpush1.xpose.msra.mxu0 0.0
    %857 = vmatprep.subr.mxu0 0.0
    %858 = vmatpush1.xpose.msra.mxu0 0.0
    %859 = vmatprep.subr.mxu0 0.0
    %860 = vmatpush1.xpose.msra.mxu0 0.0
    %861 = vmatprep.subr.mxu0 0.0
    %862 = vmatpush1.xpose.msra.mxu0 0.0
    %863 = vmatprep.subr.mxu0 0.0
    %864 = vmatpush1.xpose.msra.mxu0 0.0
    %865 = vmatprep.subr.mxu0 0.0
    %866 = vmatpush1.xpose.msra.mxu0 0.0
    %867 = vmatprep.subr.mxu0 0.0
    %868 = vmatpush1.xpose.msra.mxu0 0.0
    %869 = vmatprep.subr.mxu0 0.0
    %870 = vmatpush1.xpose.msra.mxu0 0.0
    %871 = vmatprep.subr.mxu0 0.0
    %872 = vmatpush1.xpose.msra.mxu0 0.0
    %873 = vmatprep.subr.mxu0 0.0
    %874 = vmatpush1.xpose.msra.mxu0 0.0
    %875 = vmatprep.subr.mxu0 0.0
    %876 = vmatpush1.xpose.msra.mxu0 0.0
    %877 = vmatprep.subr.mxu0 0.0
    %878 = vmatpush1.xpose.msra.mxu0 0.0
    %879 = vmatprep.subr.mxu0 0.0
    %880 = vmatpush1.xpose.msra.mxu0 0.0
    %881 = vmatprep.subr.mxu0 0.0
    %882 = vmatpush1.xpose.msra.mxu0 0.0
    %883 = vmatprep.subr.mxu0 0.0
    %884 = vmatpush1.xpose.msra.mxu0 0.0
    %885 = vmatprep.subr.mxu0 0.0
    %886 = vmatpush1.xpose.msra.mxu0 0.0
    %887 = vmatprep.subr.mxu0 0.0
    %888 = vmatpush1.xpose.msra.mxu0 0.0
    %889 = vmatprep.subr.mxu0 0.0
    %890 = vmatpush1.xpose.msra.mxu0 0.0
    %891 = vmatprep.subr.mxu0 0.0
    %892 = vmatpush1.xpose.msra.mxu0 0.0
    %893 = vmatprep.subr.mxu0 0.0
    %894 = vmatpush1.xpose.msra.mxu0 0.0
    %895 = vmatprep.mubr.f32.mxu0 0.0
    %v896 = vand.u32 %v645, 4294901760
    %v897 = vsub.f32 %v645, %v896
    %898 = vmatmul.mubr.f32.gmra.mrb[0].mxu0 %v897
    %v899 = vpop.f32.mrb[0].mxu0
    %v900 = vadd.f32 %v818, %v899
    %v901 = vpop.f32.mrb[0].mxu0
    %902 = vmatprep.mubr.f32.mxu0 0.0
    %v903 = vand.u32 %v647, 4294901760
    %v904 = vsub.f32 %v647, %v903
    %905 = vmatmul.mubr.f32.gmra.mrb[0].mxu0 %v904
    %v906 = vpop.f32.mrb[0].mxu0
    %v907 = vadd.f32 %v824, %v906
    %v908 = vpop.f32.mrb[0].mxu0
    %909 = vdwg.mxu0
    %910 = vmatprep.subr.mxu0 0.0
    %v911 = vand.u32 %v649, 4294901760
    %912 = vmatpush1.xpose.msra.mxu0 %v911
    %913 = vmatprep.subr.mxu0 0.0
    %v914 = vand.u32 %v651, 4294901760
    %915 = vmatpush1.xpose.msra.mxu0 %v914
    %916 = vmatprep.subr.mxu0 0.0
    %917 = vmatpush1.xpose.msra.mxu0 0.0
    %918 = vmatprep.subr.mxu0 0.0
    %919 = vmatpush1.xpose.msra.mxu0 0.0
    %920 = vmatprep.subr.mxu0 0.0
    %921 = vmatpush1.xpose.msra.mxu0 0.0
    %922 = vmatprep.subr.mxu0 0.0
    %923 = vmatpush1.xpose.msra.mxu0 0.0
    %924 = vmatprep.subr.mxu0 0.0
    %925 = vmatpush1.xpose.msra.mxu0 0.0
    %926 = vmatprep.subr.mxu0 0.0
    %927 = vmatpush1.xpose.msra.mxu0 0.0
    %928 = vmatprep.subr.mxu0 0.0
    %929 = vmatpush1.xpose.msra.mxu0 0.0
    %930 = vmatprep.subr.mxu0 0.0
    %931 = vmatpush1.xpose.msra.mxu0 0.0
    %932 = vmatprep.subr.mxu0 0.0
    %933 = vmatpush1.xpose.msra.mxu0 0.0
    %934 = vmatprep.subr.mxu0 0.0
    %935 = vmatpush1.xpose.msra.mxu0 0.0
    %936 = vmatprep.subr.mxu0 0.0
    %937 = vmatpush1.xpose.msra.mxu0 0.0
    %938 = vmatprep.subr.mxu0 0.0
    %939 = vmatpush1.xpose.msra.mxu0 0.0
    %940 = vmatprep.subr.mxu0 0.0
    %941 = vmatpush1.xpose.msra.mxu0 0.0
    %942 = vmatprep.subr.mxu0 0.0
    %943 = vmatpush1.xpose.msra.mxu0 0.0
    %944 = vmatprep.subr.mxu0 0.0
    %945 = vmatpush1.xpose.msra.mxu0 0.0
    %946 = vmatprep.subr.mxu0 0.0
    %947 = vmatpush1.xpose.msra.mxu0 0.0
    %948 = vmatprep.subr.mxu0 0.0
    %949 = vmatpush1.xpose.msra.mxu0 0.0
    %950 = vmatprep.subr.mxu0 0.0
    %951 = vmatpush1.xpose.msra.mxu0 0.0
    %952 = vmatprep.subr.mxu0 0.0
    %953 = vmatpush1.xpose.msra.mxu0 0.0
    %954 = vmatprep.subr.mxu0 0.0
    %955 = vmatpush1.xpose.msra.mxu0 0.0
    %956 = vmatprep.subr.mxu0 0.0
    %957 = vmatpush1.xpose.msra.mxu0 0.0
    %958 = vmatprep.subr.mxu0 0.0
    %959 = vmatpush1.xpose.msra.mxu0 0.0
    %960 = vmatprep.subr.mxu0 0.0
    %961 = vmatpush1.xpose.msra.mxu0 0.0
    %962 = vmatprep.subr.mxu0 0.0
    %963 = vmatpush1.xpose.msra.mxu0 0.0
    %964 = vmatprep.subr.mxu0 0.0
    %965 = vmatpush1.xpose.msra.mxu0 0.0
    %966 = vmatprep.subr.mxu0 0.0
    %967 = vmatpush1.xpose.msra.mxu0 0.0
    %968 = vmatprep.subr.mxu0 0.0
    %969 = vmatpush1.xpose.msra.mxu0 0.0
    %970 = vmatprep.subr.mxu0 0.0
    %971 = vmatpush1.xpose.msra.mxu0 0.0
    %972 = vmatprep.subr.mxu0 0.0
    %973 = vmatpush1.xpose.msra.mxu0 0.0
    %974 = vmatprep.subr.mxu0 0.0
    %975 = vmatpush1.xpose.msra.mxu0 0.0
    %976 = vmatprep.mubr.f32.mxu0 0.0
    %v977 = vand.u32 %v645, 4294901760
    %v978 = vsub.f32 %v645, %v977
    %v979 = vand.u32 %v978, 4294901760
    %980 = vmatmul.mubr.f32.gmra.mrb[0].mxu0 %v979
    %v981 = vpop.f32.mrb[0].mxu0
    %v982 = vadd.f32 %v900, %v981
    %v983 = vpop.f32.mrb[0].mxu0
    %984 = vmatprep.mubr.f32.mxu0 0.0
    %v985 = vand.u32 %v647, 4294901760
    %v986 = vsub.f32 %v647, %v985
    %v987 = vand.u32 %v986, 4294901760
    %988 = vmatmul.mubr.f32.gmra.mrb[0].mxu0 %v987
    %v989 = vpop.f32.mrb[0].mxu0
    %v990 = vadd.f32 %v907, %v989
    %v991 = vpop.f32.mrb[0].mxu0
    %992 = vdwg.mxu0
    %993 = vmatprep.subr.mxu0 0.0
    %v994 = vand.u32 %v649, 4294901760
    %v995 = vsub.f32 %v649, %v994
    %v996 = vand.u32 %v995, 4294901760
    %997 = vmatpush1.xpose.msra.mxu0 %v996
    %998 = vmatprep.subr.mxu0 0.0
    %v999 = vand.u32 %v651, 4294901760
    %v1000 = vsub.f32 %v651, %v999
    %v1001 = vand.u32 %v1000, 4294901760
    %1002 = vmatpush1.xpose.msra.mxu0 %v1001
    %1003 = vmatprep.subr.mxu0 0.0
    %1004 = vmatpush1.xpose.msra.mxu0 0.0
    %1005 = vmatprep.subr.mxu0 0.0
    %1006 = vmatpush1.xpose.msra.mxu0 0.0
    %1007 = vmatprep.subr.mxu0 0.0
    %1008 = vmatpush1.xpose.msra.mxu0 0.0
    %1009 = vmatprep.subr.mxu0 0.0
    %1010 = vmatpush1.xpose.msra.mxu0 0.0
    %1011 = vmatprep.subr.mxu0 0.0
    %1012 = vmatpush1.xpose.msra.mxu0 0.0
    %1013 = vmatprep.subr.mxu0 0.0
    %1014 = vmatpush1.xpose.msra.mxu0 0.0
    %1015 = vmatprep.subr.mxu0 0.0
    %1016 = vmatpush1.xpose.msra.mxu0 0.0
    %1017 = vmatprep.subr.mxu0 0.0
    %1018 = vmatpush1.xpose.msra.mxu0 0.0
    %1019 = vmatprep.subr.mxu0 0.0
    %1020 = vmatpush1.xpose.msra.mxu0 0.0
    %1021 = vmatprep.subr.mxu0 0.0
    %1022 = vmatpush1.xpose.msra.mxu0 0.0
    %1023 = vmatprep.subr.mxu0 0.0
    %1024 = vmatpush1.xpose.msra.mxu0 0.0
    %1025 = vmatprep.subr.mxu0 0.0
    %1026 = vmatpush1.xpose.msra.mxu0 0.0
    %1027 = vmatprep.subr.mxu0 0.0
    %1028 = vmatpush1.xpose.msra.mxu0 0.0
    %1029 = vmatprep.subr.mxu0 0.0
    %1030 = vmatpush1.xpose.msra.mxu0 0.0
    %1031 = vmatprep.subr.mxu0 0.0
    %1032 = vmatpush1.xpose.msra.mxu0 0.0
    %1033 = vmatprep.subr.mxu0 0.0
    %1034 = vmatpush1.xpose.msra.mxu0 0.0
    %1035 = vmatprep.subr.mxu0 0.0
    %1036 = vmatpush1.xpose.msra.mxu0 0.0
    %1037 = vmatprep.subr.mxu0 0.0
    %1038 = vmatpush1.xpose.msra.mxu0 0.0
    %1039 = vmatprep.subr.mxu0 0.0
    %1040 = vmatpush1.xpose.msra.mxu0 0.0
    %1041 = vmatprep.subr.mxu0 0.0
    %1042 = vmatpush1.xpose.msra.mxu0 0.0
    %1043 = vmatprep.subr.mxu0 0.0
    %1044 = vmatpush1.xpose.msra.mxu0 0.0
    %1045 = vmatprep.subr.mxu0 0.0
    %1046 = vmatpush1.xpose.msra.mxu0 0.0
    %1047 = vmatprep.subr.mxu0 0.0
    %1048 = vmatpush1.xpose.msra.mxu0 0.0
    %1049 = vmatprep.subr.mxu0 0.0
    %1050 = vmatpush1.xpose.msra.mxu0 0.0
    %1051 = vmatprep.subr.mxu0 0.0
    %1052 = vmatpush1.xpose.msra.mxu0 0.0
    %1053 = vmatprep.subr.mxu0 0.0
    %1054 = vmatpush1.xpose.msra.mxu0 0.0
    %1055 = vmatprep.subr.mxu0 0.0
    %1056 = vmatpush1.xpose.msra.mxu0 0.0
    %1057 = vmatprep.subr.mxu0 0.0
    %1058 = vmatpush1.xpose.msra.mxu0 0.0
    %1059 = vmatprep.subr.mxu0 0.0
    %1060 = vmatpush1.xpose.msra.mxu0 0.0
    %1061 = vmatprep.subr.mxu0 0.0
    %1062 = vmatpush1.xpose.msra.mxu0 0.0
    %1063 = vmatprep.mubr.f32.mxu0 0.0
    %v1064 = vand.u32 %v645, 4294901760
    %1065 = vmatmul.mubr.f32.gmra.mrb[0].mxu0 %v1064
    %v1066 = vpop.f32.mrb[0].mxu0
    %v1067 = vadd.f32 %v982, %v1066
    %v1068 = vpop.f32.mrb[0].mxu0
    %1069 = vmatprep.mubr.f32.mxu0 0.0
    %v1070 = vand.u32 %v647, 4294901760
    %1071 = vmatmul.mubr.f32.gmra.mrb[0].mxu0 %v1070
    %v1072 = vpop.f32.mrb[0].mxu0
    %v1073 = vadd.f32 %v990, %v1072
    %v1074 = vpop.f32.mrb[0].mxu0
    %1075 = vdwg.mxu0
    %1076 = vmatprep.subr.mxu0 0.0
    %v1077 = vand.u32 %v649, 4294901760
    %1078 = vmatpush1.xpose.msra.mxu0 %v1077
    %1079 = vmatprep.subr.mxu0 0.0
    %v1080 = vand.u32 %v651, 4294901760
    %1081 = vmatpush1.xpose.msra.mxu0 %v1080
    %1082 = vmatprep.subr.mxu0 0.0
    %1083 = vmatpush1.xpose.msra.mxu0 0.0
    %1084 = vmatprep.subr.mxu0 0.0
    %1085 = vmatpush1.xpose.msra.mxu0 0.0
    %1086 = vmatprep.subr.mxu0 0.0
    %1087 = vmatpush1.xpose.msra.mxu0 0.0
    %1088 = vmatprep.subr.mxu0 0.0
    %1089 = vmatpush1.xpose.msra.mxu0 0.0
    %1090 = vmatprep.subr.mxu0 0.0
    %1091 = vmatpush1.xpose.msra.mxu0 0.0
    %1092 = vmatprep.subr.mxu0 0.0
    %1093 = vmatpush1.xpose.msra.mxu0 0.0
    %1094 = vmatprep.subr.mxu0 0.0
    %1095 = vmatpush1.xpose.msra.mxu0 0.0
    %1096 = vmatprep.subr.mxu0 0.0
    %1097 = vmatpush1.xpose.msra.mxu0 0.0
    %1098 = vmatprep.subr.mxu0 0.0
    %1099 = vmatpush1.xpose.msra.mxu0 0.0
    %1100 = vmatprep.subr.mxu0 0.0
    %1101 = vmatpush1.xpose.msra.mxu0 0.0
    %1102 = vmatprep.subr.mxu0 0.0
    %1103 = vmatpush1.xpose.msra.mxu0 0.0
    %1104 = vmatprep.subr.mxu0 0.0
    %1105 = vmatpush1.xpose.msra.mxu0 0.0
    %1106 = vmatprep.subr.mxu0 0.0
    %1107 = vmatpush1.xpose.msra.mxu0 0.0
    %1108 = vmatprep.subr.mxu0 0.0
    %1109 = vmatpush1.xpose.msra.mxu0 0.0
    %1110 = vmatprep.subr.mxu0 0.0
    %1111 = vmatpush1.xpose.msra.mxu0 0.0
    %1112 = vmatprep.subr.mxu0 0.0
    %1113 = vmatpush1.xpose.msra.mxu0 0.0
    %1114 = vmatprep.subr.mxu0 0.0
    %1115 = vmatpush1.xpose.msra.mxu0 0.0
    %1116 = vmatprep.subr.mxu0 0.0
    %1117 = vmatpush1.xpose.msra.mxu0 0.0
    %1118 = vmatprep.subr.mxu0 0.0
    %1119 = vmatpush1.xpose.msra.mxu0 0.0
    %1120 = vmatprep.subr.mxu0 0.0
    %1121 = vmatpush1.xpose.msra.mxu0 0.0
    %1122 = vmatprep.subr.mxu0 0.0
    %1123 = vmatpush1.xpose.msra.mxu0 0.0
    %1124 = vmatprep.subr.mxu0 0.0
    %1125 = vmatpush1.xpose.msra.mxu0 0.0
    %1126 = vmatprep.subr.mxu0 0.0
    %1127 = vmatpush1.xpose.msra.mxu0 0.0
    %1128 = vmatprep.subr.mxu0 0.0
    %1129 = vmatpush1.xpose.msra.mxu0 0.0
    %1130 = vmatprep.subr.mxu0 0.0
    %1131 = vmatpush1.xpose.msra.mxu0 0.0
    %1132 = vmatprep.subr.mxu0 0.0
    %1133 = vmatpush1.xpose.msra.mxu0 0.0
    %1134 = vmatprep.subr.mxu0 0.0
    %1135 = vmatpush1.xpose.msra.mxu0 0.0
    %1136 = vmatprep.subr.mxu0 0.0
    %1137 = vmatpush1.xpose.msra.mxu0 0.0
    %1138 = vmatprep.subr.mxu0 0.0
    %1139 = vmatpush1.xpose.msra.mxu0 0.0
    %1140 = vmatprep.subr.mxu0 0.0
    %1141 = vmatpush1.xpose.msra.mxu0 0.0
    %1142 = vmatprep.mubr.f32.mxu0 0.0
    %v1143 = vand.u32 %v645, 4294901760
    %1144 = vmatmul.mubr.f32.gmra.mrb[0].mxu0 %v1143
    %v1145 = vpop.f32.mrb[0].mxu0
    %v1146 = vadd.f32 %v1067, %v1145
    %v1147 = vpop.f32.mrb[0].mxu0
    %1148 = vmatprep.mubr.f32.mxu0 0.0
    %v1149 = vand.u32 %v647, 4294901760
    %1150 = vmatmul.mubr.f32.gmra.mrb[0].mxu0 %v1149
    %v1151 = vpop.f32.mrb[0].mxu0
    %v1152 = vadd.f32 %v1073, %v1151
    %v1153 = vpop.f32.mrb[0].mxu0
    %1154 = vdwg.mxu0
    %vm1155 = vcmask 130048
    %v1156 = vsel %vm1155, %v1146, -inf
    %1157 = vmax.xlane.f32.xlu0 %v1156
    %v1158 = vpop.xlane.xlu0 %1157
    %v1159 = vsel %vm1155, %v1152, -inf
    %1160 = vmax.xlane.f32.xlu0 %v1159
    %v1161 = vpop.xlane.xlu0 %1160
    %v1162 = vsub.f32 %v1146, %v1158
    %v1163 = vsub.f32 %v1152, %v1161
    %v1164 = vmul.f32 %v1162, 1.442695
    %v1165 = vpow.pop %v1164
    %v1166 = vmul.f32 %v1163, 1.442695
    %v1167 = vpow.pop %v1166
    %v1168 = vsel %vm1155, %v1165, 0.0
    %1169 = vadd.xlane.f32.xlu0 %v1168
    %v1170 = vpop.xlane.xlu0 %1169
    %v1171 = vsel %vm1155, %v1167, 0.0
    %1172 = vadd.xlane.f32.xlu0 %v1171
    %v1173 = vpop.xlane.xlu0 %1172
    %v1174 = vrcp.pop %v1170
    %v1175 = vmul.f32 %v1165, %v1174
    %v1176 = vrcp.pop %v1173
    %v1177 = vmul.f32 %v1167, %v1176
    %1178 = vrot.lane.b32.xlu0 %v636, 96
    %v1179 = vpop.permute.xlu0 %1178
    %1180 = vrot.lane.b32.xlu0 %v637, 96
    %v1181 = vpop.permute.xlu0 %1180
    %v1185 = vsel %vm1155, %v1175, 0
    %v1188 = vsel %vm1155, %v1177, 0
    %1190 = vmatprep.subr.mxu0 0.0
    %v1191 = vand.u32 %v1179, 4294901760
    %1192 = vmatpush1.msra.mxu0 %v1191
    %1193 = vmatprep.subr.mxu0 0.0
    %v1194 = vand.u32 %v1181, 4294901760
    %1195 = vmatpush1.msra.mxu0 %v1194
    %1196 = vmatprep.subr.mxu0 0.0
    %1197 = vmatpush1.msra.mxu0 0.0
    %1198 = vmatprep.subr.mxu0 0.0
    %1199 = vmatpush1.msra.mxu0 0.0
    %1200 = vmatprep.subr.mxu0 0.0
    %1201 = vmatpush1.msra.mxu0 0.0
    %1202 = vmatprep.subr.mxu0 0.0
    %1203 = vmatpush1.msra.mxu0 0.0
    %1204 = vmatprep.subr.mxu0 0.0
    %1205 = vmatpush1.msra.mxu0 0.0
    %1206 = vmatprep.subr.mxu0 0.0
    %1207 = vmatpush1.msra.mxu0 0.0
    %1208 = vmatprep.subr.mxu0 0.0
    %1209 = vmatpush1.msra.mxu0 0.0
    %1210 = vmatprep.subr.mxu0 0.0
    %1211 = vmatpush1.msra.mxu0 0.0
    %1212 = vmatprep.subr.mxu0 0.0
    %1213 = vmatpush1.msra.mxu0 0.0
    %1214 = vmatprep.subr.mxu0 0.0
    %1215 = vmatpush1.msra.mxu0 0.0
    %1216 = vmatprep.subr.mxu0 0.0
    %1217 = vmatpush1.msra.mxu0 0.0
    %1218 = vmatprep.subr.mxu0 0.0
    %1219 = vmatpush1.msra.mxu0 0.0
    %1220 = vmatprep.subr.mxu0 0.0
    %1221 = vmatpush1.msra.mxu0 0.0
    %1222 = vmatprep.subr.mxu0 0.0
    %1223 = vmatpush1.msra.mxu0 0.0
    %1224 = vmatprep.subr.mxu0 0.0
    %1225 = vmatpush1.msra.mxu0 0.0
    %1226 = vmatprep.subr.mxu0 0.0
    %1227 = vmatpush1.msra.mxu0 0.0
    %1228 = vmatprep.subr.mxu0 0.0
    %1229 = vmatpush1.msra.mxu0 0.0
    %1230 = vmatprep.subr.mxu0 0.0
    %1231 = vmatpush1.msra.mxu0 0.0
    %1232 = vmatprep.subr.mxu0 0.0
    %1233 = vmatpush1.msra.mxu0 0.0
    %1234 = vmatprep.subr.mxu0 0.0
    %1235 = vmatpush1.msra.mxu0 0.0
    %1236 = vmatprep.subr.mxu0 0.0
    %1237 = vmatpush1.msra.mxu0 0.0
    %1238 = vmatprep.subr.mxu0 0.0
    %1239 = vmatpush1.msra.mxu0 0.0
    %1240 = vmatprep.subr.mxu0 0.0
    %1241 = vmatpush1.msra.mxu0 0.0
    %1242 = vmatprep.subr.mxu0 0.0
    %1243 = vmatpush1.msra.mxu0 0.0
    %1244 = vmatprep.subr.mxu0 0.0
    %1245 = vmatpush1.msra.mxu0 0.0
    %1246 = vmatprep.subr.mxu0 0.0
    %1247 = vmatpush1.msra.mxu0 0.0
    %1248 = vmatprep.subr.mxu0 0.0
    %1249 = vmatpush1.msra.mxu0 0.0
    %1250 = vmatprep.subr.mxu0 0.0
    %1251 = vmatpush1.msra.mxu0 0.0
    %1252 = vmatprep.subr.mxu0 0.0
    %1253 = vmatpush1.msra.mxu0 0.0
    %1254 = vmatprep.subr.mxu0 0.0
    %1255 = vmatpush1.msra.mxu0 0.0
    %1256 = vmatprep.mubr.f32.mxu0 0.0
    %v1257 = vand.u32 %v1185, 4294901760
    %v1258 = vsub.f32 %v1185, %v1257
    %v1259 = vand.u32 %v1258, 4294901760
    %v1260 = vsub.f32 %v1258, %v1259
    %v1261 = vand.u32 %v1260, 4294901760
    %1262 = vmatmul.mubr.f32.gmra.mrb[0].mxu0 %v1261
    %v1263 = vpop.f32.mrb[0].mxu0
    %v1264 = vadd.f32 0.0, %v1263
    %v1265 = vpop.f32.mrb[0].mxu0
    %1266 = vmatprep.mubr.f32.mxu0 0.0
    %v1267 = vand.u32 %v1188, 4294901760
    %v1268 = vsub.f32 %v1188, %v1267
    %v1269 = vand.u32 %v1268, 4294901760
    %v1270 = vsub.f32 %v1268, %v1269
    %v1271 = vand.u32 %v1270, 4294901760
    %1272 = vmatmul.mubr.f32.gmra.mrb[0].mxu0 %v1271
    %v1273 = vpop.f32.mrb[0].mxu0
    %v1274 = vadd.f32 0.0, %v1273
    %v1275 = vpop.f32.mrb[0].mxu0
    %1276 = vdwg.mxu0
    %1277 = vmatprep.subr.mxu0 0.0
    %v1278 = vand.u32 %v1179, 4294901760
    %v1279 = vsub.f32 %v1179, %v1278
    %v1280 = vand.u32 %v1279, 4294901760
    %v1281 = vsub.f32 %v1279, %v1280
    %v1282 = vand.u32 %v1281, 4294901760
    %1283 = vmatpush1.msra.mxu0 %v1282
    %1284 = vmatprep.subr.mxu0 0.0
    %v1285 = vand.u32 %v1181, 4294901760
    %v1286 = vsub.f32 %v1181, %v1285
    %v1287 = vand.u32 %v1286, 4294901760
    %v1288 = vsub.f32 %v1286, %v1287
    %v1289 = vand.u32 %v1288, 4294901760
    %1290 = vmatpush1.msra.mxu0 %v1289
    %1291 = vmatprep.subr.mxu0 0.0
    %1292 = vmatpush1.msra.mxu0 0.0
    %1293 = vmatprep.subr.mxu0 0.0
    %1294 = vmatpush1.msra.mxu0 0.0
    %1295 = vmatprep.subr.mxu0 0.0
    %1296 = vmatpush1.msra.mxu0 0.0
    %1297 = vmatprep.subr.mxu0 0.0
    %1298 = vmatpush1.msra.mxu0 0.0
    %1299 = vmatprep.subr.mxu0 0.0
    %1300 = vmatpush1.msra.mxu0 0.0
    %1301 = vmatprep.subr.mxu0 0.0
    %1302 = vmatpush1.msra.mxu0 0.0
    %1303 = vmatprep.subr.mxu0 0.0
    %1304 = vmatpush1.msra.mxu0 0.0
    %1305 = vmatprep.subr.mxu0 0.0
    %1306 = vmatpush1.msra.mxu0 0.0
    %1307 = vmatprep.subr.mxu0 0.0
    %1308 = vmatpush1.msra.mxu0 0.0
    %1309 = vmatprep.subr.mxu0 0.0
    %1310 = vmatpush1.msra.mxu0 0.0
    %1311 = vmatprep.subr.mxu0 0.0
    %1312 = vmatpush1.msra.mxu0 0.0
    %1313 = vmatprep.subr.mxu0 0.0
    %1314 = vmatpush1.msra.mxu0 0.0
    %1315 = vmatprep.subr.mxu0 0.0
    %1316 = vmatpush1.msra.mxu0 0.0
    %1317 = vmatprep.subr.mxu0 0.0
    %1318 = vmatpush1.msra.mxu0 0.0
    %1319 = vmatprep.subr.mxu0 0.0
    %1320 = vmatpush1.msra.mxu0 0.0
    %1321 = vmatprep.subr.mxu0 0.0
    %1322 = vmatpush1.msra.mxu0 0.0
    %1323 = vmatprep.subr.mxu0 0.0
    %1324 = vmatpush1.msra.mxu0 0.0
    %1325 = vmatprep.subr.mxu0 0.0
    %1326 = vmatpush1.msra.mxu0 0.0
    %1327 = vmatprep.subr.mxu0 0.0
    %1328 = vmatpush1.msra.mxu0 0.0
    %1329 = vmatprep.subr.mxu0 0.0
    %1330 = vmatpush1.msra.mxu0 0.0
    %1331 = vmatprep.subr.mxu0 0.0
    %1332 = vmatpush1.msra.mxu0 0.0
    %1333 = vmatprep.subr.mxu0 0.0
    %1334 = vmatpush1.msra.mxu0 0.0
    %1335 = vmatprep.subr.mxu0 0.0
    %1336 = vmatpush1.msra.mxu0 0.0
    %1337 = vmatprep.subr.mxu0 0.0
    %1338 = vmatpush1.msra.mxu0 0.0
    %1339 = vmatprep.subr.mxu0 0.0
    %1340 = vmatpush1.msra.mxu0 0.0
    %1341 = vmatprep.subr.mxu0 0.0
    %1342 = vmatpush1.msra.mxu0 0.0
    %1343 = vmatprep.subr.mxu0 0.0
    %1344 = vmatpush1.msra.mxu0 0.0
    %1345 = vmatprep.subr.mxu0 0.0
    %1346 = vmatpush1.msra.mxu0 0.0
    %1347 = vmatprep.subr.mxu0 0.0
    %1348 = vmatpush1.msra.mxu0 0.0
    %1349 = vmatprep.subr.mxu0 0.0
    %1350 = vmatpush1.msra.mxu0 0.0
    %1351 = vmatprep.mubr.f32.mxu0 0.0
    %v1352 = vand.u32 %v1185, 4294901760
    %1353 = vmatmul.mubr.f32.gmra.mrb[0].mxu0 %v1352
    %v1354 = vpop.f32.mrb[0].mxu0
    %v1355 = vadd.f32 %v1264, %v1354
    %v1356 = vpop.f32.mrb[0].mxu0
    %1357 = vmatprep.mubr.f32.mxu0 0.0
    %v1358 = vand.u32 %v1188, 4294901760
    %1359 = vmatmul.mubr.f32.gmra.mrb[0].mxu0 %v1358
    %v1360 = vpop.f32.mrb[0].mxu0
    %v1361 = vadd.f32 %v1274, %v1360
    %v1362 = vpop.f32.mrb[0].mxu0
    %1363 = vdwg.mxu0
    %1364 = vmatprep.subr.mxu0 0.0
    %v1365 = vand.u32 %v1179, 4294901760
    %v1366 = vsub.f32 %v1179, %v1365
    %1367 = vmatpush1.msra.mxu0 %v1366
    %1368 = vmatprep.subr.mxu0 0.0
    %v1369 = vand.u32 %v1181, 4294901760
    %v1370 = vsub.f32 %v1181, %v1369
    %1371 = vmatpush1.msra.mxu0 %v1370
    %1372 = vmatprep.subr.mxu0 0.0
    %1373 = vmatpush1.msra.mxu0 0.0
    %1374 = vmatprep.subr.mxu0 0.0
    %1375 = vmatpush1.msra.mxu0 0.0
    %1376 = vmatprep.subr.mxu0 0.0
    %1377 = vmatpush1.msra.mxu0 0.0
    %1378 = vmatprep.subr.mxu0 0.0
    %1379 = vmatpush1.msra.mxu0 0.0
    %1380 = vmatprep.subr.mxu0 0.0
    %1381 = vmatpush1.msra.mxu0 0.0
    %1382 = vmatprep.subr.mxu0 0.0
    %1383 = vmatpush1.msra.mxu0 0.0
    %1384 = vmatprep.subr.mxu0 0.0
    %1385 = vmatpush1.msra.mxu0 0.0
    %1386 = vmatprep.subr.mxu0 0.0
    %1387 = vmatpush1.msra.mxu0 0.0
    %1388 = vmatprep.subr.mxu0 0.0
    %1389 = vmatpush1.msra.mxu0 0.0
    %1390 = vmatprep.subr.mxu0 0.0
    %1391 = vmatpush1.msra.mxu0 0.0
    %1392 = vmatprep.subr.mxu0 0.0
    %1393 = vmatpush1.msra.mxu0 0.0
    %1394 = vmatprep.subr.mxu0 0.0
    %1395 = vmatpush1.msra.mxu0 0.0
    %1396 = vmatprep.subr.mxu0 0.0
    %1397 = vmatpush1.msra.mxu0 0.0
    %1398 = vmatprep.subr.mxu0 0.0
    %1399 = vmatpush1.msra.mxu0 0.0
    %1400 = vmatprep.subr.mxu0 0.0
    %1401 = vmatpush1.msra.mxu0 0.0
    %1402 = vmatprep.subr.mxu0 0.0
    %1403 = vmatpush1.msra.mxu0 0.0
    %1404 = vmatprep.subr.mxu0 0.0
    %1405 = vmatpush1.msra.mxu0 0.0
    %1406 = vmatprep.subr.mxu0 0.0
    %1407 = vmatpush1.msra.mxu0 0.0
    %1408 = vmatprep.subr.mxu0 0.0
    %1409 = vmatpush1.msra.mxu0 0.0
    %1410 = vmatprep.subr.mxu0 0.0
    %1411 = vmatpush1.msra.mxu0 0.0
    %1412 = vmatprep.subr.mxu0 0.0
    %1413 = vmatpush1.msra.mxu0 0.0
    %1414 = vmatprep.subr.mxu0 0.0
    %1415 = vmatpush1.msra.mxu0 0.0
    %1416 = vmatprep.subr.mxu0 0.0
    %1417 = vmatpush1.msra.mxu0 0.0
    %1418 = vmatprep.subr.mxu0 0.0
    %1419 = vmatpush1.msra.mxu0 0.0
    %1420 = vmatprep.subr.mxu0 0.0
    %1421 = vmatpush1.msra.mxu0 0.0
    %1422 = vmatprep.subr.mxu0 0.0
    %1423 = vmatpush1.msra.mxu0 0.0
    %1424 = vmatprep.subr.mxu0 0.0
    %1425 = vmatpush1.msra.mxu0 0.0
    %1426 = vmatprep.subr.mxu0 0.0
    %1427 = vmatpush1.msra.mxu0 0.0
    %1428 = vmatprep.subr.mxu0 0.0
    %1429 = vmatpush1.msra.mxu0 0.0
    %1430 = vmatprep.subr.mxu0 0.0
    %1431 = vmatpush1.msra.mxu0 0.0
    %1432 = vmatprep.mubr.f32.mxu0 0.0
    %v1433 = vand.u32 %v1185, 4294901760
    %v1434 = vsub.f32 %v1185, %v1433
    %1435 = vmatmul.mubr.f32.gmra.mrb[0].mxu0 %v1434
    %v1436 = vpop.f32.mrb[0].mxu0
    %v1437 = vadd.f32 %v1355, %v1436
    %v1438 = vpop.f32.mrb[0].mxu0
    %1439 = vmatprep.mubr.f32.mxu0 0.0
    %v1440 = vand.u32 %v1188, 4294901760
    %v1441 = vsub.f32 %v1188, %v1440
    %1442 = vmatmul.mubr.f32.gmra.mrb[0].mxu0 %v1441
    %v1443 = vpop.f32.mrb[0].mxu0
    %v1444 = vadd.f32 %v1361, %v1443
    %v1445 = vpop.f32.mrb[0].mxu0
    %1446 = vdwg.mxu0
    %1447 = vmatprep.subr.mxu0 0.0
    %v1448 = vand.u32 %v1179, 4294901760
    %1449 = vmatpush1.msra.mxu0 %v1448
    %1450 = vmatprep.subr.mxu0 0.0
    %v1451 = vand.u32 %v1181, 4294901760
    %1452 = vmatpush1.msra.mxu0 %v1451
    %1453 = vmatprep.subr.mxu0 0.0
    %1454 = vmatpush1.msra.mxu0 0.0
    %1455 = vmatprep.subr.mxu0 0.0
    %1456 = vmatpush1.msra.mxu0 0.0
    %1457 = vmatprep.subr.mxu0 0.0
    %1458 = vmatpush1.msra.mxu0 0.0
    %1459 = vmatprep.subr.mxu0 0.0
    %1460 = vmatpush1.msra.mxu0 0.0
    %1461 = vmatprep.subr.mxu0 0.0
    %1462 = vmatpush1.msra.mxu0 0.0
    %1463 = vmatprep.subr.mxu0 0.0
    %1464 = vmatpush1.msra.mxu0 0.0
    %1465 = vmatprep.subr.mxu0 0.0
    %1466 = vmatpush1.msra.mxu0 0.0
    %1467 = vmatprep.subr.mxu0 0.0
    %1468 = vmatpush1.msra.mxu0 0.0
    %1469 = vmatprep.subr.mxu0 0.0
    %1470 = vmatpush1.msra.mxu0 0.0
    %1471 = vmatprep.subr.mxu0 0.0
    %1472 = vmatpush1.msra.mxu0 0.0
    %1473 = vmatprep.subr.mxu0 0.0
    %1474 = vmatpush1.msra.mxu0 0.0
    %1475 = vmatprep.subr.mxu0 0.0
    %1476 = vmatpush1.msra.mxu0 0.0
    %1477 = vmatprep.subr.mxu0 0.0
    %1478 = vmatpush1.msra.mxu0 0.0
    %1479 = vmatprep.subr.mxu0 0.0
    %1480 = vmatpush1.msra.mxu0 0.0
    %1481 = vmatprep.subr.mxu0 0.0
    %1482 = vmatpush1.msra.mxu0 0.0
    %1483 = vmatprep.subr.mxu0 0.0
    %1484 = vmatpush1.msra.mxu0 0.0
    %1485 = vmatprep.subr.mxu0 0.0
    %1486 = vmatpush1.msra.mxu0 0.0
    %1487 = vmatprep.subr.mxu0 0.0
    %1488 = vmatpush1.msra.mxu0 0.0
    %1489 = vmatprep.subr.mxu0 0.0
    %1490 = vmatpush1.msra.mxu0 0.0
    %1491 = vmatprep.subr.mxu0 0.0
    %1492 = vmatpush1.msra.mxu0 0.0
    %1493 = vmatprep.subr.mxu0 0.0
    %1494 = vmatpush1.msra.mxu0 0.0
    %1495 = vmatprep.subr.mxu0 0.0
    %1496 = vmatpush1.msra.mxu0 0.0
    %1497 = vmatprep.subr.mxu0 0.0
    %1498 = vmatpush1.msra.mxu0 0.0
    %1499 = vmatprep.subr.mxu0 0.0
    %1500 = vmatpush1.msra.mxu0 0.0
    %1501 = vmatprep.subr.mxu0 0.0
    %1502 = vmatpush1.msra.mxu0 0.0
    %1503 = vmatprep.subr.mxu0 0.0
    %1504 = vmatpush1.msra.mxu0 0.0
    %1505 = vmatprep.subr.mxu0 0.0
    %1506 = vmatpush1.msra.mxu0 0.0
    %1507 = vmatprep.subr.mxu0 0.0
    %1508 = vmatpush1.msra.mxu0 0.0
    %1509 = vmatprep.subr.mxu0 0.0
    %1510 = vmatpush1.msra.mxu0 0.0
    %1511 = vmatprep.subr.mxu0 0.0
    %1512 = vmatpush1.msra.mxu0 0.0
    %1513 = vmatprep.mubr.f32.mxu0 0.0
    %v1514 = vand.u32 %v1185, 4294901760
    %v1515 = vsub.f32 %v1185, %v1514
    %v1516 = vand.u32 %v1515, 4294901760
    %1517 = vmatmul.mubr.f32.gmra.mrb[0].mxu0 %v1516
    %v1518 = vpop.f32.mrb[0].mxu0
    %v1519 = vadd.f32 %v1437, %v1518
    %v1520 = vpop.f32.mrb[0].mxu0
    %1521 = vmatprep.mubr.f32.mxu0 0.0
    %v1522 = vand.u32 %v1188, 4294901760
    %v1523 = vsub.f32 %v1188, %v1522
    %v1524 = vand.u32 %v1523, 4294901760
    %1525 = vmatmul.mubr.f32.gmra.mrb[0].mxu0 %v1524
    %v1526 = vpop.f32.mrb[0].mxu0
    %v1527 = vadd.f32 %v1444, %v1526
    %v1528 = vpop.f32.mrb[0].mxu0
    %1529 = vdwg.mxu0
    %1530 = vmatprep.subr.mxu0 0.0
    %v1531 = vand.u32 %v1179, 4294901760
    %v1532 = vsub.f32 %v1179, %v1531
    %v1533 = vand.u32 %v1532, 4294901760
    %1534 = vmatpush1.msra.mxu0 %v1533
    %1535 = vmatprep.subr.mxu0 0.0
    %v1536 = vand.u32 %v1181, 4294901760
    %v1537 = vsub.f32 %v1181, %v1536
    %v1538 = vand.u32 %v1537, 4294901760
    %1539 = vmatpush1.msra.mxu0 %v1538
    %1540 = vmatprep.subr.mxu0 0.0
    %1541 = vmatpush1.msra.mxu0 0.0
    %1542 = vmatprep.subr.mxu0 0.0
    %1543 = vmatpush1.msra.mxu0 0.0
    %1544 = vmatprep.subr.mxu0 0.0
    %1545 = vmatpush1.msra.mxu0 0.0
    %1546 = vmatprep.subr.mxu0 0.0
    %1547 = vmatpush1.msra.mxu0 0.0
    %1548 = vmatprep.subr.mxu0 0.0
    %1549 = vmatpush1.msra.mxu0 0.0
    %1550 = vmatprep.subr.mxu0 0.0
    %1551 = vmatpush1.msra.mxu0 0.0
    %1552 = vmatprep.subr.mxu0 0.0
    %1553 = vmatpush1.msra.mxu0 0.0
    %1554 = vmatprep.subr.mxu0 0.0
    %1555 = vmatpush1.msra.mxu0 0.0
    %1556 = vmatprep.subr.mxu0 0.0
    %1557 = vmatpush1.msra.mxu0 0.0
    %1558 = vmatprep.subr.mxu0 0.0
    %1559 = vmatpush1.msra.mxu0 0.0
    %1560 = vmatprep.subr.mxu0 0.0
    %1561 = vmatpush1.msra.mxu0 0.0
    %1562 = vmatprep.subr.mxu0 0.0
    %1563 = vmatpush1.msra.mxu0 0.0
    %1564 = vmatprep.subr.mxu0 0.0
    %1565 = vmatpush1.msra.mxu0 0.0
    %1566 = vmatprep.subr.mxu0 0.0
    %1567 = vmatpush1.msra.mxu0 0.0
    %1568 = vmatprep.subr.mxu0 0.0
    %1569 = vmatpush1.msra.mxu0 0.0
    %1570 = vmatprep.subr.mxu0 0.0
    %1571 = vmatpush1.msra.mxu0 0.0
    %1572 = vmatprep.subr.mxu0 0.0
    %1573 = vmatpush1.msra.mxu0 0.0
    %1574 = vmatprep.subr.mxu0 0.0
    %1575 = vmatpush1.msra.mxu0 0.0
    %1576 = vmatprep.subr.mxu0 0.0
    %1577 = vmatpush1.msra.mxu0 0.0
    %1578 = vmatprep.subr.mxu0 0.0
    %1579 = vmatpush1.msra.mxu0 0.0
    %1580 = vmatprep.subr.mxu0 0.0
    %1581 = vmatpush1.msra.mxu0 0.0
    %1582 = vmatprep.subr.mxu0 0.0
    %1583 = vmatpush1.msra.mxu0 0.0
    %1584 = vmatprep.subr.mxu0 0.0
    %1585 = vmatpush1.msra.mxu0 0.0
    %1586 = vmatprep.subr.mxu0 0.0
    %1587 = vmatpush1.msra.mxu0 0.0
    %1588 = vmatprep.subr.mxu0 0.0
    %1589 = vmatpush1.msra.mxu0 0.0
    %1590 = vmatprep.subr.mxu0 0.0
    %1591 = vmatpush1.msra.mxu0 0.0
    %1592 = vmatprep.subr.mxu0 0.0
    %1593 = vmatpush1.msra.mxu0 0.0
    %1594 = vmatprep.subr.mxu0 0.0
    %1595 = vmatpush1.msra.mxu0 0.0
    %1596 = vmatprep.subr.mxu0 0.0
    %1597 = vmatpush1.msra.mxu0 0.0
    %1598 = vmatprep.subr.mxu0 0.0
    %1599 = vmatpush1.msra.mxu0 0.0
    %1600 = vmatprep.mubr.f32.mxu0 0.0
    %v1601 = vand.u32 %v1185, 4294901760
    %1602 = vmatmul.mubr.f32.gmra.mrb[0].mxu0 %v1601
    %v1603 = vpop.f32.mrb[0].mxu0
    %v1604 = vadd.f32 %v1519, %v1603
    %v1605 = vpop.f32.mrb[0].mxu0
    %1606 = vmatprep.mubr.f32.mxu0 0.0
    %v1607 = vand.u32 %v1188, 4294901760
    %1608 = vmatmul.mubr.f32.gmra.mrb[0].mxu0 %v1607
    %v1609 = vpop.f32.mrb[0].mxu0
    %v1610 = vadd.f32 %v1527, %v1609
    %v1611 = vpop.f32.mrb[0].mxu0
    %1612 = vdwg.mxu0
    %1613 = vmatprep.subr.mxu0 0.0
    %v1614 = vand.u32 %v1179, 4294901760
    %1615 = vmatpush1.msra.mxu0 %v1614
    %1616 = vmatprep.subr.mxu0 0.0
    %v1617 = vand.u32 %v1181, 4294901760
    %1618 = vmatpush1.msra.mxu0 %v1617
    %1619 = vmatprep.subr.mxu0 0.0
    %1620 = vmatpush1.msra.mxu0 0.0
    %1621 = vmatprep.subr.mxu0 0.0
    %1622 = vmatpush1.msra.mxu0 0.0
    %1623 = vmatprep.subr.mxu0 0.0
    %1624 = vmatpush1.msra.mxu0 0.0
    %1625 = vmatprep.subr.mxu0 0.0
    %1626 = vmatpush1.msra.mxu0 0.0
    %1627 = vmatprep.subr.mxu0 0.0
    %1628 = vmatpush1.msra.mxu0 0.0
    %1629 = vmatprep.subr.mxu0 0.0
    %1630 = vmatpush1.msra.mxu0 0.0
    %1631 = vmatprep.subr.mxu0 0.0
    %1632 = vmatpush1.msra.mxu0 0.0
    %1633 = vmatprep.subr.mxu0 0.0
    %1634 = vmatpush1.msra.mxu0 0.0
    %1635 = vmatprep.subr.mxu0 0.0
    %1636 = vmatpush1.msra.mxu0 0.0
    %1637 = vmatprep.subr.mxu0 0.0
    %1638 = vmatpush1.msra.mxu0 0.0
    %1639 = vmatprep.subr.mxu0 0.0
    %1640 = vmatpush1.msra.mxu0 0.0
    %1641 = vmatprep.subr.mxu0 0.0
    %1642 = vmatpush1.msra.mxu0 0.0
    %1643 = vmatprep.subr.mxu0 0.0
    %1644 = vmatpush1.msra.mxu0 0.0
    %1645 = vmatprep.subr.mxu0 0.0
    %1646 = vmatpush1.msra.mxu0 0.0
    %1647 = vmatprep.subr.mxu0 0.0
    %1648 = vmatpush1.msra.mxu0 0.0
    %1649 = vmatprep.subr.mxu0 0.0
    %1650 = vmatpush1.msra.mxu0 0.0
    %1651 = vmatprep.subr.mxu0 0.0
    %1652 = vmatpush1.msra.mxu0 0.0
    %1653 = vmatprep.subr.mxu0 0.0
    %1654 = vmatpush1.msra.mxu0 0.0
    %1655 = vmatprep.subr.mxu0 0.0
    %1656 = vmatpush1.msra.mxu0 0.0
    %1657 = vmatprep.subr.mxu0 0.0
    %1658 = vmatpush1.msra.mxu0 0.0
    %1659 = vmatprep.subr.mxu0 0.0
    %1660 = vmatpush1.msra.mxu0 0.0
    %1661 = vmatprep.subr.mxu0 0.0
    %1662 = vmatpush1.msra.mxu0 0.0
    %1663 = vmatprep.subr.mxu0 0.0
    %1664 = vmatpush1.msra.mxu0 0.0
    %1665 = vmatprep.subr.mxu0 0.0
    %1666 = vmatpush1.msra.mxu0 0.0
    %1667 = vmatprep.subr.mxu0 0.0
    %1668 = vmatpush1.msra.mxu0 0.0
    %1669 = vmatprep.subr.mxu0 0.0
    %1670 = vmatpush1.msra.mxu0 0.0
    %1671 = vmatprep.subr.mxu0 0.0
    %1672 = vmatpush1.msra.mxu0 0.0
    %1673 = vmatprep.subr.mxu0 0.0
    %1674 = vmatpush1.msra.mxu0 0.0
    %1675 = vmatprep.subr.mxu0 0.0
    %1676 = vmatpush1.msra.mxu0 0.0
    %1677 = vmatprep.subr.mxu0 0.0
    %1678 = vmatpush1.msra.mxu0 0.0
    %1679 = vmatprep.mubr.f32.mxu0 0.0
    %v1680 = vand.u32 %v1185, 4294901760
    %1681 = vmatmul.mubr.f32.gmra.mrb[0].mxu0 %v1680
    %v1682 = vpop.f32.mrb[0].mxu0
    %v1683 = vadd.f32 %v1604, %v1682
    %v1684 = vpop.f32.mrb[0].mxu0
    %1685 = vmatprep.mubr.f32.mxu0 0.0
    %v1686 = vand.u32 %v1188, 4294901760
    %1687 = vmatmul.mubr.f32.gmra.mrb[0].mxu0 %v1686
    %v1688 = vpop.f32.mrb[0].mxu0
    %v1689 = vadd.f32 %v1610, %v1688
    %v1690 = vpop.f32.mrb[0].mxu0
    %1691 = vdwg.mxu0
    %1692 = vrot.lane.b32.xlu0 %v636, 124
    %v1693 = vpop.permute.xlu0 %1692
    %1694 = vrot.lane.b32.xlu0 %v637, 124
    %v1695 = vpop.permute.xlu0 %1694
    %1696 = vrot.lane.b32.xlu0 %v636, 108
    %v1697 = vpop.permute.xlu0 %1696
    %1698 = vrot.lane.b32.xlu0 %v637, 108
    %v1699 = vpop.permute.xlu0 %1698
    %v1700 = vsel %vm644, %v1693, 0
    %v1702 = vsel %vm644, %v1695, 0
    %v1704 = vsel %vm644, %v1697, 0
    %v1706 = vsel %vm644, %v1699, 0
    %1708 = vmatprep.subr.mxu0 0.0
    %v1709 = vand.u32 %v1704, 4294901760
    %1710 = vmatpush1.xpose.msra.mxu0 %v1709
    %1711 = vmatprep.subr.mxu0 0.0
    %v1712 = vand.u32 %v1706, 4294901760
    %1713 = vmatpush1.xpose.msra.mxu0 %v1712
    %1714 = vmatprep.subr.mxu0 0.0
    %1715 = vmatpush1.xpose.msra.mxu0 0.0
    %1716 = vmatprep.subr.mxu0 0.0
    %1717 = vmatpush1.xpose.msra.mxu0 0.0
    %1718 = vmatprep.subr.mxu0 0.0
    %1719 = vmatpush1.xpose.msra.mxu0 0.0
    %1720 = vmatprep.subr.mxu0 0.0
    %1721 = vmatpush1.xpose.msra.mxu0 0.0
    %1722 = vmatprep.subr.mxu0 0.0
    %1723 = vmatpush1.xpose.msra.mxu0 0.0
    %1724 = vmatprep.subr.mxu0 0.0
    %1725 = vmatpush1.xpose.msra.mxu0 0.0
    %1726 = vmatprep.subr.mxu0 0.0
    %1727 = vmatpush1.xpose.msra.mxu0 0.0
    %1728 = vmatprep.subr.mxu0 0.0
    %1729 = vmatpush1.xpose.msra.mxu0 0.0
    %1730 = vmatprep.subr.mxu0 0.0
    %1731 = vmatpush1.xpose.msra.mxu0 0.0
    %1732 = vmatprep.subr.mxu0 0.0
    %1733 = vmatpush1.xpose.msra.mxu0 0.0
    %1734 = vmatprep.subr.mxu0 0.0
    %1735 = vmatpush1.xpose.msra.mxu0 0.0
    %1736 = vmatprep.subr.mxu0 0.0
    %1737 = vmatpush1.xpose.msra.mxu0 0.0
    %1738 = vmatprep.subr.mxu0 0.0
    %1739 = vmatpush1.xpose.msra.mxu0 0.0
    %1740 = vmatprep.subr.mxu0 0.0
    %1741 = vmatpush1.xpose.msra.mxu0 0.0
    %1742 = vmatprep.subr.mxu0 0.0
    %1743 = vmatpush1.xpose.msra.mxu0 0.0
    %1744 = vmatprep.subr.mxu0 0.0
    %1745 = vmatpush1.xpose.msra.mxu0 0.0
    %1746 = vmatprep.subr.mxu0 0.0
    %1747 = vmatpush1.xpose.msra.mxu0 0.0
    %1748 = vmatprep.subr.mxu0 0.0
    %1749 = vmatpush1.xpose.msra.mxu0 0.0
    %1750 = vmatprep.subr.mxu0 0.0
    %1751 = vmatpush1.xpose.msra.mxu0 0.0
    %1752 = vmatprep.subr.mxu0 0.0
    %1753 = vmatpush1.xpose.msra.mxu0 0.0
    %1754 = vmatprep.subr.mxu0 0.0
    %1755 = vmatpush1.xpose.msra.mxu0 0.0
    %1756 = vmatprep.subr.mxu0 0.0
    %1757 = vmatpush1.xpose.msra.mxu0 0.0
    %1758 = vmatprep.subr.mxu0 0.0
    %1759 = vmatpush1.xpose.msra.mxu0 0.0
    %1760 = vmatprep.subr.mxu0 0.0
    %1761 = vmatpush1.xpose.msra.mxu0 0.0
    %1762 = vmatprep.subr.mxu0 0.0
    %1763 = vmatpush1.xpose.msra.mxu0 0.0
    %1764 = vmatprep.subr.mxu0 0.0
    %1765 = vmatpush1.xpose.msra.mxu0 0.0
    %1766 = vmatprep.subr.mxu0 0.0
    %1767 = vmatpush1.xpose.msra.mxu0 0.0
    %1768 = vmatprep.subr.mxu0 0.0
    %1769 = vmatpush1.xpose.msra.mxu0 0.0
    %1770 = vmatprep.subr.mxu0 0.0
    %1771 = vmatpush1.xpose.msra.mxu0 0.0
    %1772 = vmatprep.subr.mxu0 0.0
    %1773 = vmatpush1.xpose.msra.mxu0 0.0
    %1774 = vmatprep.mubr.f32.mxu0 0.0
    %v1775 = vand.u32 %v1700, 4294901760
    %v1776 = vsub.f32 %v1700, %v1775
    %v1777 = vand.u32 %v1776, 4294901760
    %v1778 = vsub.f32 %v1776, %v1777
    %v1779 = vand.u32 %v1778, 4294901760
    %1780 = vmatmul.mubr.f32.gmra.mrb[0].mxu0 %v1779
    %v1781 = vpop.f32.mrb[0].mxu0
    %v1782 = vadd.f32 %v30, %v1781
    %v1783 = vpop.f32.mrb[0].mxu0
    %1784 = vmatprep.mubr.f32.mxu0 0.0
    %v1785 = vand.u32 %v1702, 4294901760
    %v1786 = vsub.f32 %v1702, %v1785
    %v1787 = vand.u32 %v1786, 4294901760
    %v1788 = vsub.f32 %v1786, %v1787
    %v1789 = vand.u32 %v1788, 4294901760
    %1790 = vmatmul.mubr.f32.gmra.mrb[0].mxu0 %v1789
    %v1791 = vpop.f32.mrb[0].mxu0
    %v1792 = vadd.f32 %v31, %v1791
    %v1793 = vpop.f32.mrb[0].mxu0
    %1794 = vdwg.mxu0
    %1795 = vmatprep.subr.mxu0 0.0
    %v1796 = vand.u32 %v1704, 4294901760
    %v1797 = vsub.f32 %v1704, %v1796
    %v1798 = vand.u32 %v1797, 4294901760
    %v1799 = vsub.f32 %v1797, %v1798
    %v1800 = vand.u32 %v1799, 4294901760
    %1801 = vmatpush1.xpose.msra.mxu0 %v1800
    %1802 = vmatprep.subr.mxu0 0.0
    %v1803 = vand.u32 %v1706, 4294901760
    %v1804 = vsub.f32 %v1706, %v1803
    %v1805 = vand.u32 %v1804, 4294901760
    %v1806 = vsub.f32 %v1804, %v1805
    %v1807 = vand.u32 %v1806, 4294901760
    %1808 = vmatpush1.xpose.msra.mxu0 %v1807
    %1809 = vmatprep.subr.mxu0 0.0
    %1810 = vmatpush1.xpose.msra.mxu0 0.0
    %1811 = vmatprep.subr.mxu0 0.0
    %1812 = vmatpush1.xpose.msra.mxu0 0.0
    %1813 = vmatprep.subr.mxu0 0.0
    %1814 = vmatpush1.xpose.msra.mxu0 0.0
    %1815 = vmatprep.subr.mxu0 0.0
    %1816 = vmatpush1.xpose.msra.mxu0 0.0
    %1817 = vmatprep.subr.mxu0 0.0
    %1818 = vmatpush1.xpose.msra.mxu0 0.0
    %1819 = vmatprep.subr.mxu0 0.0
    %1820 = vmatpush1.xpose.msra.mxu0 0.0
    %1821 = vmatprep.subr.mxu0 0.0
    %1822 = vmatpush1.xpose.msra.mxu0 0.0
    %1823 = vmatprep.subr.mxu0 0.0
    %1824 = vmatpush1.xpose.msra.mxu0 0.0
    %1825 = vmatprep.subr.mxu0 0.0
    %1826 = vmatpush1.xpose.msra.mxu0 0.0
    %1827 = vmatprep.subr.mxu0 0.0
    %1828 = vmatpush1.xpose.msra.mxu0 0.0
    %1829 = vmatprep.subr.mxu0 0.0
    %1830 = vmatpush1.xpose.msra.mxu0 0.0
    %1831 = vmatprep.subr.mxu0 0.0
    %1832 = vmatpush1.xpose.msra.mxu0 0.0
    %1833 = vmatprep.subr.mxu0 0.0
    %1834 = vmatpush1.xpose.msra.mxu0 0.0
    %1835 = vmatprep.subr.mxu0 0.0
    %1836 = vmatpush1.xpose.msra.mxu0 0.0
    %1837 = vmatprep.subr.mxu0 0.0
    %1838 = vmatpush1.xpose.msra.mxu0 0.0
    %1839 = vmatprep.subr.mxu0 0.0
    %1840 = vmatpush1.xpose.msra.mxu0 0.0
    %1841 = vmatprep.subr.mxu0 0.0
    %1842 = vmatpush1.xpose.msra.mxu0 0.0
    %1843 = vmatprep.subr.mxu0 0.0
    %1844 = vmatpush1.xpose.msra.mxu0 0.0
    %1845 = vmatprep.subr.mxu0 0.0
    %1846 = vmatpush1.xpose.msra.mxu0 0.0
    %1847 = vmatprep.subr.mxu0 0.0
    %1848 = vmatpush1.xpose.msra.mxu0 0.0
    %1849 = vmatprep.subr.mxu0 0.0
    %1850 = vmatpush1.xpose.msra.mxu0 0.0
    %1851 = vmatprep.subr.mxu0 0.0
    %1852 = vmatpush1.xpose.msra.mxu0 0.0
    %1853 = vmatprep.subr.mxu0 0.0
    %1854 = vmatpush1.xpose.msra.mxu0 0.0
    %1855 = vmatprep.subr.mxu0 0.0
    %1856 = vmatpush1.xpose.msra.mxu0 0.0
    %1857 = vmatprep.subr.mxu0 0.0
    %1858 = vmatpush1.xpose.msra.mxu0 0.0
    %1859 = vmatprep.subr.mxu0 0.0
    %1860 = vmatpush1.xpose.msra.mxu0 0.0
    %1861 = vmatprep.subr.mxu0 0.0
    %1862 = vmatpush1.xpose.msra.mxu0 0.0
    %1863 = vmatprep.subr.mxu0 0.0
    %1864 = vmatpush1.xpose.msra.mxu0 0.0
    %1865 = vmatprep.subr.mxu0 0.0
    %1866 = vmatpush1.xpose.msra.mxu0 0.0
    %1867 = vmatprep.subr.mxu0 0.0
    %1868 = vmatpush1.xpose.msra.mxu0 0.0
    %1869 = vmatprep.mubr.f32.mxu0 0.0
    %v1870 = vand.u32 %v1700, 4294901760
    %1871 = vmatmul.mubr.f32.gmra.mrb[0].mxu0 %v1870
    %v1872 = vpop.f32.mrb[0].mxu0
    %v1873 = vadd.f32 %v1782, %v1872
    %v1874 = vpop.f32.mrb[0].mxu0
    %1875 = vmatprep.mubr.f32.mxu0 0.0
    %v1876 = vand.u32 %v1702, 4294901760
    %1877 = vmatmul.mubr.f32.gmra.mrb[0].mxu0 %v1876
    %v1878 = vpop.f32.mrb[0].mxu0
    %v1879 = vadd.f32 %v1792, %v1878
    %v1880 = vpop.f32.mrb[0].mxu0
    %1881 = vdwg.mxu0
    %1882 = vmatprep.subr.mxu0 0.0
    %v1883 = vand.u32 %v1704, 4294901760
    %v1884 = vsub.f32 %v1704, %v1883
    %1885 = vmatpush1.xpose.msra.mxu0 %v1884
    %1886 = vmatprep.subr.mxu0 0.0
    %v1887 = vand.u32 %v1706, 4294901760
    %v1888 = vsub.f32 %v1706, %v1887
    %1889 = vmatpush1.xpose.msra.mxu0 %v1888
    %1890 = vmatprep.subr.mxu0 0.0
    %1891 = vmatpush1.xpose.msra.mxu0 0.0
    %1892 = vmatprep.subr.mxu0 0.0
    %1893 = vmatpush1.xpose.msra.mxu0 0.0
    %1894 = vmatprep.subr.mxu0 0.0
    %1895 = vmatpush1.xpose.msra.mxu0 0.0
    %1896 = vmatprep.subr.mxu0 0.0
    %1897 = vmatpush1.xpose.msra.mxu0 0.0
    %1898 = vmatprep.subr.mxu0 0.0
    %1899 = vmatpush1.xpose.msra.mxu0 0.0
    %1900 = vmatprep.subr.mxu0 0.0
    %1901 = vmatpush1.xpose.msra.mxu0 0.0
    %1902 = vmatprep.subr.mxu0 0.0
    %1903 = vmatpush1.xpose.msra.mxu0 0.0
    %1904 = vmatprep.subr.mxu0 0.0
    %1905 = vmatpush1.xpose.msra.mxu0 0.0
    %1906 = vmatprep.subr.mxu0 0.0
    %1907 = vmatpush1.xpose.msra.mxu0 0.0
    %1908 = vmatprep.subr.mxu0 0.0
    %1909 = vmatpush1.xpose.msra.mxu0 0.0
    %1910 = vmatprep.subr.mxu0 0.0
    %1911 = vmatpush1.xpose.msra.mxu0 0.0
    %1912 = vmatprep.subr.mxu0 0.0
    %1913 = vmatpush1.xpose.msra.mxu0 0.0
    %1914 = vmatprep.subr.mxu0 0.0
    %1915 = vmatpush1.xpose.msra.mxu0 0.0
    %1916 = vmatprep.subr.mxu0 0.0
    %1917 = vmatpush1.xpose.msra.mxu0 0.0
    %1918 = vmatprep.subr.mxu0 0.0
    %1919 = vmatpush1.xpose.msra.mxu0 0.0
    %1920 = vmatprep.subr.mxu0 0.0
    %1921 = vmatpush1.xpose.msra.mxu0 0.0
    %1922 = vmatprep.subr.mxu0 0.0
    %1923 = vmatpush1.xpose.msra.mxu0 0.0
    %1924 = vmatprep.subr.mxu0 0.0
    %1925 = vmatpush1.xpose.msra.mxu0 0.0
    %1926 = vmatprep.subr.mxu0 0.0
    %1927 = vmatpush1.xpose.msra.mxu0 0.0
    %1928 = vmatprep.subr.mxu0 0.0
    %1929 = vmatpush1.xpose.msra.mxu0 0.0
    %1930 = vmatprep.subr.mxu0 0.0
    %1931 = vmatpush1.xpose.msra.mxu0 0.0
    %1932 = vmatprep.subr.mxu0 0.0
    %1933 = vmatpush1.xpose.msra.mxu0 0.0
    %1934 = vmatprep.subr.mxu0 0.0
    %1935 = vmatpush1.xpose.msra.mxu0 0.0
    %1936 = vmatprep.subr.mxu0 0.0
    %1937 = vmatpush1.xpose.msra.mxu0 0.0
    %1938 = vmatprep.subr.mxu0 0.0
    %1939 = vmatpush1.xpose.msra.mxu0 0.0
    %1940 = vmatprep.subr.mxu0 0.0
    %1941 = vmatpush1.xpose.msra.mxu0 0.0
    %1942 = vmatprep.subr.mxu0 0.0
    %1943 = vmatpush1.xpose.msra.mxu0 0.0
    %1944 = vmatprep.subr.mxu0 0.0
    %1945 = vmatpush1.xpose.msra.mxu0 0.0
    %1946 = vmatprep.subr.mxu0 0.0
    %1947 = vmatpush1.xpose.msra.mxu0 0.0
    %1948 = vmatprep.subr.mxu0 0.0
    %1949 = vmatpush1.xpose.msra.mxu0 0.0
    %1950 = vmatprep.mubr.f32.mxu0 0.0
    %v1951 = vand.u32 %v1700, 4294901760
    %v1952 = vsub.f32 %v1700, %v1951
    %1953 = vmatmul.mubr.f32.gmra.mrb[0].mxu0 %v1952
    %v1954 = vpop.f32.mrb[0].mxu0
    %v1955 = vadd.f32 %v1873, %v1954
    %v1956 = vpop.f32.mrb[0].mxu0
    %1957 = vmatprep.mubr.f32.mxu0 0.0
    %v1958 = vand.u32 %v1702, 4294901760
    %v1959 = vsub.f32 %v1702, %v1958
    %1960 = vmatmul.mubr.f32.gmra.mrb[0].mxu0 %v1959
    %v1961 = vpop.f32.mrb[0].mxu0
    %v1962 = vadd.f32 %v1879, %v1961
    %v1963 = vpop.f32.mrb[0].mxu0
    %1964 = vdwg.mxu0
    %1965 = vmatprep.subr.mxu0 0.0
    %v1966 = vand.u32 %v1704, 4294901760
    %1967 = vmatpush1.xpose.msra.mxu0 %v1966
    %1968 = vmatprep.subr.mxu0 0.0
    %v1969 = vand.u32 %v1706, 4294901760
    %1970 = vmatpush1.xpose.msra.mxu0 %v1969
    %1971 = vmatprep.subr.mxu0 0.0
    %1972 = vmatpush1.xpose.msra.mxu0 0.0
    %1973 = vmatprep.subr.mxu0 0.0
    %1974 = vmatpush1.xpose.msra.mxu0 0.0
    %1975 = vmatprep.subr.mxu0 0.0
    %1976 = vmatpush1.xpose.msra.mxu0 0.0
    %1977 = vmatprep.subr.mxu0 0.0
    %1978 = vmatpush1.xpose.msra.mxu0 0.0
    %1979 = vmatprep.subr.mxu0 0.0
    %1980 = vmatpush1.xpose.msra.mxu0 0.0
    %1981 = vmatprep.subr.mxu0 0.0
    %1982 = vmatpush1.xpose.msra.mxu0 0.0
    %1983 = vmatprep.subr.mxu0 0.0
    %1984 = vmatpush1.xpose.msra.mxu0 0.0
    %1985 = vmatprep.subr.mxu0 0.0
    %1986 = vmatpush1.xpose.msra.mxu0 0.0
    %1987 = vmatprep.subr.mxu0 0.0
    %1988 = vmatpush1.xpose.msra.mxu0 0.0
    %1989 = vmatprep.subr.mxu0 0.0
    %1990 = vmatpush1.xpose.msra.mxu0 0.0
    %1991 = vmatprep.subr.mxu0 0.0
    %1992 = vmatpush1.xpose.msra.mxu0 0.0
    %1993 = vmatprep.subr.mxu0 0.0
    %1994 = vmatpush1.xpose.msra.mxu0 0.0
    %1995 = vmatprep.subr.mxu0 0.0
    %1996 = vmatpush1.xpose.msra.mxu0 0.0
    %1997 = vmatprep.subr.mxu0 0.0
    %1998 = vmatpush1.xpose.msra.mxu0 0.0
    %1999 = vmatprep.subr.mxu0 0.0
    %2000 = vmatpush1.xpose.msra.mxu0 0.0
    %2001 = vmatprep.subr.mxu0 0.0
    %2002 = vmatpush1.xpose.msra.mxu0 0.0
    %2003 = vmatprep.subr.mxu0 0.0
    %2004 = vmatpush1.xpose.msra.mxu0 0.0
    %2005 = vmatprep.subr.mxu0 0.0
    %2006 = vmatpush1.xpose.msra.mxu0 0.0
    %2007 = vmatprep.subr.mxu0 0.0
    %2008 = vmatpush1.xpose.msra.mxu0 0.0
    %2009 = vmatprep.subr.mxu0 0.0
    %2010 = vmatpush1.xpose.msra.mxu0 0.0
    %2011 = vmatprep.subr.mxu0 0.0
    %2012 = vmatpush1.xpose.msra.mxu0 0.0
    %2013 = vmatprep.subr.mxu0 0.0
    %2014 = vmatpush1.xpose.msra.mxu0 0.0
    %2015 = vmatprep.subr.mxu0 0.0
    %2016 = vmatpush1.xpose.msra.mxu0 0.0
    %2017 = vmatprep.subr.mxu0 0.0
    %2018 = vmatpush1.xpose.msra.mxu0 0.0
    %2019 = vmatprep.subr.mxu0 0.0
    %2020 = vmatpush1.xpose.msra.mxu0 0.0
    %2021 = vmatprep.subr.mxu0 0.0
    %2022 = vmatpush1.xpose.msra.mxu0 0.0
    %2023 = vmatprep.subr.mxu0 0.0
    %2024 = vmatpush1.xpose.msra.mxu0 0.0
    %2025 = vmatprep.subr.mxu0 0.0
    %2026 = vmatpush1.xpose.msra.mxu0 0.0
    %2027 = vmatprep.subr.mxu0 0.0
    %2028 = vmatpush1.xpose.msra.mxu0 0.0
    %2029 = vmatprep.subr.mxu0 0.0
    %2030 = vmatpush1.xpose.msra.mxu0 0.0
    %2031 = vmatprep.mubr.f32.mxu0 0.0
    %v2032 = vand.u32 %v1700, 4294901760
    %v2033 = vsub.f32 %v1700, %v2032
    %v2034 = vand.u32 %v2033, 4294901760
    %2035 = vmatmul.mubr.f32.gmra.mrb[0].mxu0 %v2034
    %v2036 = vpop.f32.mrb[0].mxu0
    %v2037 = vadd.f32 %v1955, %v2036
    %v2038 = vpop.f32.mrb[0].mxu0
    %2039 = vmatprep.mubr.f32.mxu0 0.0
    %v2040 = vand.u32 %v1702, 4294901760
    %v2041 = vsub.f32 %v1702, %v2040
    %v2042 = vand.u32 %v2041, 4294901760
    %2043 = vmatmul.mubr.f32.gmra.mrb[0].mxu0 %v2042
    %v2044 = vpop.f32.mrb[0].mxu0
    %v2045 = vadd.f32 %v1962, %v2044
    %v2046 = vpop.f32.mrb[0].mxu0
    %2047 = vdwg.mxu0
    %2048 = vmatprep.subr.mxu0 0.0
    %v2049 = vand.u32 %v1704, 4294901760
    %v2050 = vsub.f32 %v1704, %v2049
    %v2051 = vand.u32 %v2050, 4294901760
    %2052 = vmatpush1.xpose.msra.mxu0 %v2051
    %2053 = vmatprep.subr.mxu0 0.0
    %v2054 = vand.u32 %v1706, 4294901760
    %v2055 = vsub.f32 %v1706, %v2054
    %v2056 = vand.u32 %v2055, 4294901760
    %2057 = vmatpush1.xpose.msra.mxu0 %v2056
    %2058 = vmatprep.subr.mxu0 0.0
    %2059 = vmatpush1.xpose.msra.mxu0 0.0
    %2060 = vmatprep.subr.mxu0 0.0
    %2061 = vmatpush1.xpose.msra.mxu0 0.0
    %2062 = vmatprep.subr.mxu0 0.0
    %2063 = vmatpush1.xpose.msra.mxu0 0.0
    %2064 = vmatprep.subr.mxu0 0.0
    %2065 = vmatpush1.xpose.msra.mxu0 0.0
    %2066 = vmatprep.subr.mxu0 0.0
    %2067 = vmatpush1.xpose.msra.mxu0 0.0
    %2068 = vmatprep.subr.mxu0 0.0
    %2069 = vmatpush1.xpose.msra.mxu0 0.0
    %2070 = vmatprep.subr.mxu0 0.0
    %2071 = vmatpush1.xpose.msra.mxu0 0.0
    %2072 = vmatprep.subr.mxu0 0.0
    %2073 = vmatpush1.xpose.msra.mxu0 0.0
    %2074 = vmatprep.subr.mxu0 0.0
    %2075 = vmatpush1.xpose.msra.mxu0 0.0
    %2076 = vmatprep.subr.mxu0 0.0
    %2077 = vmatpush1.xpose.msra.mxu0 0.0
    %2078 = vmatprep.subr.mxu0 0.0
    %2079 = vmatpush1.xpose.msra.mxu0 0.0
    %2080 = vmatprep.subr.mxu0 0.0
    %2081 = vmatpush1.xpose.msra.mxu0 0.0
    %2082 = vmatprep.subr.mxu0 0.0
    %2083 = vmatpush1.xpose.msra.mxu0 0.0
    %2084 = vmatprep.subr.mxu0 0.0
    %2085 = vmatpush1.xpose.msra.mxu0 0.0
    %2086 = vmatprep.subr.mxu0 0.0
    %2087 = vmatpush1.xpose.msra.mxu0 0.0
    %2088 = vmatprep.subr.mxu0 0.0
    %2089 = vmatpush1.xpose.msra.mxu0 0.0
    %2090 = vmatprep.subr.mxu0 0.0
    %2091 = vmatpush1.xpose.msra.mxu0 0.0
    %2092 = vmatprep.subr.mxu0 0.0
    %2093 = vmatpush1.xpose.msra.mxu0 0.0
    %2094 = vmatprep.subr.mxu0 0.0
    %2095 = vmatpush1.xpose.msra.mxu0 0.0
    %2096 = vmatprep.subr.mxu0 0.0
    %2097 = vmatpush1.xpose.msra.mxu0 0.0
    %2098 = vmatprep.subr.mxu0 0.0
    %2099 = vmatpush1.xpose.msra.mxu0 0.0
    %2100 = vmatprep.subr.mxu0 0.0
    %2101 = vmatpush1.xpose.msra.mxu0 0.0
    %2102 = vmatprep.subr.mxu0 0.0
    %2103 = vmatpush1.xpose.msra.mxu0 0.0
    %2104 = vmatprep.subr.mxu0 0.0
    %2105 = vmatpush1.xpose.msra.mxu0 0.0
    %2106 = vmatprep.subr.mxu0 0.0
    %2107 = vmatpush1.xpose.msra.mxu0 0.0
    %2108 = vmatprep.subr.mxu0 0.0
    %2109 = vmatpush1.xpose.msra.mxu0 0.0
    %2110 = vmatprep.subr.mxu0 0.0
    %2111 = vmatpush1.xpose.msra.mxu0 0.0
    %2112 = vmatprep.subr.mxu0 0.0
    %2113 = vmatpush1.xpose.msra.mxu0 0.0
    %2114 = vmatprep.subr.mxu0 0.0
    %2115 = vmatpush1.xpose.msra.mxu0 0.0
    %2116 = vmatprep.subr.mxu0 0.0
    %2117 = vmatpush1.xpose.msra.mxu0 0.0
    %2118 = vmatprep.mubr.f32.mxu0 0.0
    %v2119 = vand.u32 %v1700, 4294901760
    %2120 = vmatmul.mubr.f32.gmra.mrb[0].mxu0 %v2119
    %v2121 = vpop.f32.mrb[0].mxu0
    %v2122 = vadd.f32 %v2037, %v2121
    %v2123 = vpop.f32.mrb[0].mxu0
    %2124 = vmatprep.mubr.f32.mxu0 0.0
    %v2125 = vand.u32 %v1702, 4294901760
    %2126 = vmatmul.mubr.f32.gmra.mrb[0].mxu0 %v2125
    %v2127 = vpop.f32.mrb[0].mxu0
    %v2128 = vadd.f32 %v2045, %v2127
    %v2129 = vpop.f32.mrb[0].mxu0
    %2130 = vdwg.mxu0
    %2131 = vmatprep.subr.mxu0 0.0
    %v2132 = vand.u32 %v1704, 4294901760
    %2133 = vmatpush1.xpose.msra.mxu0 %v2132
    %2134 = vmatprep.subr.mxu0 0.0
    %v2135 = vand.u32 %v1706, 4294901760
    %2136 = vmatpush1.xpose.msra.mxu0 %v2135
    %2137 = vmatprep.subr.mxu0 0.0
    %2138 = vmatpush1.xpose.msra.mxu0 0.0
    %2139 = vmatprep.subr.mxu0 0.0
    %2140 = vmatpush1.xpose.msra.mxu0 0.0
    %2141 = vmatprep.subr.mxu0 0.0
    %2142 = vmatpush1.xpose.msra.mxu0 0.0
    %2143 = vmatprep.subr.mxu0 0.0
    %2144 = vmatpush1.xpose.msra.mxu0 0.0
    %2145 = vmatprep.subr.mxu0 0.0
    %2146 = vmatpush1.xpose.msra.mxu0 0.0
    %2147 = vmatprep.subr.mxu0 0.0
    %2148 = vmatpush1.xpose.msra.mxu0 0.0
    %2149 = vmatprep.subr.mxu0 0.0
    %2150 = vmatpush1.xpose.msra.mxu0 0.0
    %2151 = vmatprep.subr.mxu0 0.0
    %2152 = vmatpush1.xpose.msra.mxu0 0.0
    %2153 = vmatprep.subr.mxu0 0.0
    %2154 = vmatpush1.xpose.msra.mxu0 0.0
    %2155 = vmatprep.subr.mxu0 0.0
    %2156 = vmatpush1.xpose.msra.mxu0 0.0
    %2157 = vmatprep.subr.mxu0 0.0
    %2158 = vmatpush1.xpose.msra.mxu0 0.0
    %2159 = vmatprep.subr.mxu0 0.0
    %2160 = vmatpush1.xpose.msra.mxu0 0.0
    %2161 = vmatprep.subr.mxu0 0.0
    %2162 = vmatpush1.xpose.msra.mxu0 0.0
    %2163 = vmatprep.subr.mxu0 0.0
    %2164 = vmatpush1.xpose.msra.mxu0 0.0
    %2165 = vmatprep.subr.mxu0 0.0
    %2166 = vmatpush1.xpose.msra.mxu0 0.0
    %2167 = vmatprep.subr.mxu0 0.0
    %2168 = vmatpush1.xpose.msra.mxu0 0.0
    %2169 = vmatprep.subr.mxu0 0.0
    %2170 = vmatpush1.xpose.msra.mxu0 0.0
    %2171 = vmatprep.subr.mxu0 0.0
    %2172 = vmatpush1.xpose.msra.mxu0 0.0
    %2173 = vmatprep.subr.mxu0 0.0
    %2174 = vmatpush1.xpose.msra.mxu0 0.0
    %2175 = vmatprep.subr.mxu0 0.0
    %2176 = vmatpush1.xpose.msra.mxu0 0.0
    %2177 = vmatprep.subr.mxu0 0.0
    %2178 = vmatpush1.xpose.msra.mxu0 0.0
    %2179 = vmatprep.subr.mxu0 0.0
    %2180 = vmatpush1.xpose.msra.mxu0 0.0
    %2181 = vmatprep.subr.mxu0 0.0
    %2182 = vmatpush1.xpose.msra.mxu0 0.0
    %2183 = vmatprep.subr.mxu0 0.0
    %2184 = vmatpush1.xpose.msra.mxu0 0.0
    %2185 = vmatprep.subr.mxu0 0.0
    %2186 = vmatpush1.xpose.msra.mxu0 0.0
    %2187 = vmatprep.subr.mxu0 0.0
    %2188 = vmatpush1.xpose.msra.mxu0 0.0
    %2189 = vmatprep.subr.mxu0 0.0
    %2190 = vmatpush1.xpose.msra.mxu0 0.0
    %2191 = vmatprep.subr.mxu0 0.0
    %2192 = vmatpush1.xpose.msra.mxu0 0.0
    %2193 = vmatprep.subr.mxu0 0.0
    %2194 = vmatpush1.xpose.msra.mxu0 0.0
    %2195 = vmatprep.subr.mxu0 0.0
    %2196 = vmatpush1.xpose.msra.mxu0 0.0
    %2197 = vmatprep.mubr.f32.mxu0 0.0
    %v2198 = vand.u32 %v1700, 4294901760
    %2199 = vmatmul.mubr.f32.gmra.mrb[0].mxu0 %v2198
    %v2200 = vpop.f32.mrb[0].mxu0
    %v2201 = vadd.f32 %v2122, %v2200
    %v2202 = vpop.f32.mrb[0].mxu0
    %2203 = vmatprep.mubr.f32.mxu0 0.0
    %v2204 = vand.u32 %v1702, 4294901760
    %2205 = vmatmul.mubr.f32.gmra.mrb[0].mxu0 %v2204
    %v2206 = vpop.f32.mrb[0].mxu0
    %v2207 = vadd.f32 %v2128, %v2206
    %v2208 = vpop.f32.mrb[0].mxu0
    %2209 = vdwg.mxu0
    %v2210 = vsel %vm1155, %v2201, -inf
    %2211 = vmax.xlane.f32.xlu0 %v2210
    %v2212 = vpop.xlane.xlu0 %2211
    %v2213 = vsel %vm1155, %v2207, -inf
    %2214 = vmax.xlane.f32.xlu0 %v2213
    %v2215 = vpop.xlane.xlu0 %2214
    %v2216 = vsub.f32 %v2201, %v2212
    %v2217 = vsub.f32 %v2207, %v2215
    %v2218 = vmul.f32 %v2216, 1.442695
    %v2219 = vpow.pop %v2218
    %v2220 = vmul.f32 %v2217, 1.442695
    %v2221 = vpow.pop %v2220
    %v2222 = vsel %vm1155, %v2219, 0.0
    %2223 = vadd.xlane.f32.xlu0 %v2222
    %v2224 = vpop.xlane.xlu0 %2223
    %v2225 = vsel %vm1155, %v2221, 0.0
    %2226 = vadd.xlane.f32.xlu0 %v2225
    %v2227 = vpop.xlane.xlu0 %2226
    %v2228 = vrcp.pop %v2224
    %v2229 = vmul.f32 %v2219, %v2228
    %v2230 = vrcp.pop %v2227
    %v2231 = vmul.f32 %v2221, %v2230
    %2232 = vrot.lane.b32.xlu0 %v636, 88
    %v2233 = vpop.permute.xlu0 %2232
    %2234 = vrot.lane.b32.xlu0 %v637, 88
    %v2235 = vpop.permute.xlu0 %2234
    %v2239 = vsel %vm1155, %v2229, 0
    %v2242 = vsel %vm1155, %v2231, 0
    %2244 = vmatprep.subr.mxu0 0.0
    %v2245 = vand.u32 %v2233, 4294901760
    %2246 = vmatpush1.msra.mxu0 %v2245
    %2247 = vmatprep.subr.mxu0 0.0
    %v2248 = vand.u32 %v2235, 4294901760
    %2249 = vmatpush1.msra.mxu0 %v2248
    %2250 = vmatprep.subr.mxu0 0.0
    %2251 = vmatpush1.msra.mxu0 0.0
    %2252 = vmatprep.subr.mxu0 0.0
    %2253 = vmatpush1.msra.mxu0 0.0
    %2254 = vmatprep.subr.mxu0 0.0
    %2255 = vmatpush1.msra.mxu0 0.0
    %2256 = vmatprep.subr.mxu0 0.0
    %2257 = vmatpush1.msra.mxu0 0.0
    %2258 = vmatprep.subr.mxu0 0.0
    %2259 = vmatpush1.msra.mxu0 0.0
    %2260 = vmatprep.subr.mxu0 0.0
    %2261 = vmatpush1.msra.mxu0 0.0
    %2262 = vmatprep.subr.mxu0 0.0
    %2263 = vmatpush1.msra.mxu0 0.0
    %2264 = vmatprep.subr.mxu0 0.0
    %2265 = vmatpush1.msra.mxu0 0.0
    %2266 = vmatprep.subr.mxu0 0.0
    %2267 = vmatpush1.msra.mxu0 0.0
    %2268 = vmatprep.subr.mxu0 0.0
    %2269 = vmatpush1.msra.mxu0 0.0
    %2270 = vmatprep.subr.mxu0 0.0
    %2271 = vmatpush1.msra.mxu0 0.0
    %2272 = vmatprep.subr.mxu0 0.0
    %2273 = vmatpush1.msra.mxu0 0.0
    %2274 = vmatprep.subr.mxu0 0.0
    %2275 = vmatpush1.msra.mxu0 0.0
    %2276 = vmatprep.subr.mxu0 0.0
    %2277 = vmatpush1.msra.mxu0 0.0
    %2278 = vmatprep.subr.mxu0 0.0
    %2279 = vmatpush1.msra.mxu0 0.0
    %2280 = vmatprep.subr.mxu0 0.0
    %2281 = vmatpush1.msra.mxu0 0.0
    %2282 = vmatprep.subr.mxu0 0.0
    %2283 = vmatpush1.msra.mxu0 0.0
    %2284 = vmatprep.subr.mxu0 0.0
    %2285 = vmatpush1.msra.mxu0 0.0
    %2286 = vmatprep.subr.mxu0 0.0
    %2287 = vmatpush1.msra.mxu0 0.0
    %2288 = vmatprep.subr.mxu0 0.0
    %2289 = vmatpush1.msra.mxu0 0.0
    %2290 = vmatprep.subr.mxu0 0.0
    %2291 = vmatpush1.msra.mxu0 0.0
    %2292 = vmatprep.subr.mxu0 0.0
    %2293 = vmatpush1.msra.mxu0 0.0
    %2294 = vmatprep.subr.mxu0 0.0
    %2295 = vmatpush1.msra.mxu0 0.0
    %2296 = vmatprep.subr.mxu0 0.0
    %2297 = vmatpush1.msra.mxu0 0.0
    %2298 = vmatprep.subr.mxu0 0.0
    %2299 = vmatpush1.msra.mxu0 0.0
    %2300 = vmatprep.subr.mxu0 0.0
    %2301 = vmatpush1.msra.mxu0 0.0
    %2302 = vmatprep.subr.mxu0 0.0
    %2303 = vmatpush1.msra.mxu0 0.0
    %2304 = vmatprep.subr.mxu0 0.0
    %2305 = vmatpush1.msra.mxu0 0.0
    %2306 = vmatprep.subr.mxu0 0.0
    %2307 = vmatpush1.msra.mxu0 0.0
    %2308 = vmatprep.subr.mxu0 0.0
    %2309 = vmatpush1.msra.mxu0 0.0
    %2310 = vmatprep.mubr.f32.mxu0 0.0
    %v2311 = vand.u32 %v2239, 4294901760
    %v2312 = vsub.f32 %v2239, %v2311
    %v2313 = vand.u32 %v2312, 4294901760
    %v2314 = vsub.f32 %v2312, %v2313
    %v2315 = vand.u32 %v2314, 4294901760
    %2316 = vmatmul.mubr.f32.gmra.mrb[0].mxu0 %v2315
    %v2317 = vpop.f32.mrb[0].mxu0
    %v2318 = vadd.f32 0.0, %v2317
    %v2319 = vpop.f32.mrb[0].mxu0
    %2320 = vmatprep.mubr.f32.mxu0 0.0
    %v2321 = vand.u32 %v2242, 4294901760
    %v2322 = vsub.f32 %v2242, %v2321
    %v2323 = vand.u32 %v2322, 4294901760
    %v2324 = vsub.f32 %v2322, %v2323
    %v2325 = vand.u32 %v2324, 4294901760
    %2326 = vmatmul.mubr.f32.gmra.mrb[0].mxu0 %v2325
    %v2327 = vpop.f32.mrb[0].mxu0
    %v2328 = vadd.f32 0.0, %v2327
    %v2329 = vpop.f32.mrb[0].mxu0
    %2330 = vdwg.mxu0
    %2331 = vmatprep.subr.mxu0 0.0
    %v2332 = vand.u32 %v2233, 4294901760
    %v2333 = vsub.f32 %v2233, %v2332
    %v2334 = vand.u32 %v2333, 4294901760
    %v2335 = vsub.f32 %v2333, %v2334
    %v2336 = vand.u32 %v2335, 4294901760
    %2337 = vmatpush1.msra.mxu0 %v2336
    %2338 = vmatprep.subr.mxu0 0.0
    %v2339 = vand.u32 %v2235, 4294901760
    %v2340 = vsub.f32 %v2235, %v2339
    %v2341 = vand.u32 %v2340, 4294901760
    %v2342 = vsub.f32 %v2340, %v2341
    %v2343 = vand.u32 %v2342, 4294901760
    %2344 = vmatpush1.msra.mxu0 %v2343
    %2345 = vmatprep.subr.mxu0 0.0
    %2346 = vmatpush1.msra.mxu0 0.0
    %2347 = vmatprep.subr.mxu0 0.0
    %2348 = vmatpush1.msra.mxu0 0.0
    %2349 = vmatprep.subr.mxu0 0.0
    %2350 = vmatpush1.msra.mxu0 0.0
    %2351 = vmatprep.subr.mxu0 0.0
    %2352 = vmatpush1.msra.mxu0 0.0
    %2353 = vmatprep.subr.mxu0 0.0
    %2354 = vmatpush1.msra.mxu0 0.0
    %2355 = vmatprep.subr.mxu0 0.0
    %2356 = vmatpush1.msra.mxu0 0.0
    %2357 = vmatprep.subr.mxu0 0.0
    %2358 = vmatpush1.msra.mxu0 0.0
    %2359 = vmatprep.subr.mxu0 0.0
    %2360 = vmatpush1.msra.mxu0 0.0
    %2361 = vmatprep.subr.mxu0 0.0
    %2362 = vmatpush1.msra.mxu0 0.0
    %2363 = vmatprep.subr.mxu0 0.0
    %2364 = vmatpush1.msra.mxu0 0.0
    %2365 = vmatprep.subr.mxu0 0.0
    %2366 = vmatpush1.msra.mxu0 0.0
    %2367 = vmatprep.subr.mxu0 0.0
    %2368 = vmatpush1.msra.mxu0 0.0
    %2369 = vmatprep.subr.mxu0 0.0
    %2370 = vmatpush1.msra.mxu0 0.0
    %2371 = vmatprep.subr.mxu0 0.0
    %2372 = vmatpush1.msra.mxu0 0.0
    %2373 = vmatprep.subr.mxu0 0.0
    %2374 = vmatpush1.msra.mxu0 0.0
    %2375 = vmatprep.subr.mxu0 0.0
    %2376 = vmatpush1.msra.mxu0 0.0
    %2377 = vmatprep.subr.mxu0 0.0
    %2378 = vmatpush1.msra.mxu0 0.0
    %2379 = vmatprep.subr.mxu0 0.0
    %2380 = vmatpush1.msra.mxu0 0.0
    %2381 = vmatprep.subr.mxu0 0.0
    %2382 = vmatpush1.msra.mxu0 0.0
    %2383 = vmatprep.subr.mxu0 0.0
    %2384 = vmatpush1.msra.mxu0 0.0
    %2385 = vmatprep.subr.mxu0 0.0
    %2386 = vmatpush1.msra.mxu0 0.0
    %2387 = vmatprep.subr.mxu0 0.0
    %2388 = vmatpush1.msra.mxu0 0.0
    %2389 = vmatprep.subr.mxu0 0.0
    %2390 = vmatpush1.msra.mxu0 0.0
    %2391 = vmatprep.subr.mxu0 0.0
    %2392 = vmatpush1.msra.mxu0 0.0
    %2393 = vmatprep.subr.mxu0 0.0
    %2394 = vmatpush1.msra.mxu0 0.0
    %2395 = vmatprep.subr.mxu0 0.0
    %2396 = vmatpush1.msra.mxu0 0.0
    %2397 = vmatprep.subr.mxu0 0.0
    %2398 = vmatpush1.msra.mxu0 0.0
    %2399 = vmatprep.subr.mxu0 0.0
    %2400 = vmatpush1.msra.mxu0 0.0
    %2401 = vmatprep.subr.mxu0 0.0
    %2402 = vmatpush1.msra.mxu0 0.0
    %2403 = vmatprep.subr.mxu0 0.0
    %2404 = vmatpush1.msra.mxu0 0.0
    %2405 = vmatprep.mubr.f32.mxu0 0.0
    %v2406 = vand.u32 %v2239, 4294901760
    %2407 = vmatmul.mubr.f32.gmra.mrb[0].mxu0 %v2406
    %v2408 = vpop.f32.mrb[0].mxu0
    %v2409 = vadd.f32 %v2318, %v2408
    %v2410 = vpop.f32.mrb[0].mxu0
    %2411 = vmatprep.mubr.f32.mxu0 0.0
    %v2412 = vand.u32 %v2242, 4294901760
    %2413 = vmatmul.mubr.f32.gmra.mrb[0].mxu0 %v2412
    %v2414 = vpop.f32.mrb[0].mxu0
    %v2415 = vadd.f32 %v2328, %v2414
    %v2416 = vpop.f32.mrb[0].mxu0
    %2417 = vdwg.mxu0
    %2418 = vmatprep.subr.mxu0 0.0
    %v2419 = vand.u32 %v2233, 4294901760
    %v2420 = vsub.f32 %v2233, %v2419
    %2421 = vmatpush1.msra.mxu0 %v2420
    %2422 = vmatprep.subr.mxu0 0.0
    %v2423 = vand.u32 %v2235, 4294901760
    %v2424 = vsub.f32 %v2235, %v2423
    %2425 = vmatpush1.msra.mxu0 %v2424
    %2426 = vmatprep.subr.mxu0 0.0
    %2427 = vmatpush1.msra.mxu0 0.0
    %2428 = vmatprep.subr.mxu0 0.0
    %2429 = vmatpush1.msra.mxu0 0.0
    %2430 = vmatprep.subr.mxu0 0.0
    %2431 = vmatpush1.msra.mxu0 0.0
    %2432 = vmatprep.subr.mxu0 0.0
    %2433 = vmatpush1.msra.mxu0 0.0
    %2434 = vmatprep.subr.mxu0 0.0
    %2435 = vmatpush1.msra.mxu0 0.0
    %2436 = vmatprep.subr.mxu0 0.0
    %2437 = vmatpush1.msra.mxu0 0.0
    %2438 = vmatprep.subr.mxu0 0.0
    %2439 = vmatpush1.msra.mxu0 0.0
    %2440 = vmatprep.subr.mxu0 0.0
    %2441 = vmatpush1.msra.mxu0 0.0
    %2442 = vmatprep.subr.mxu0 0.0
    %2443 = vmatpush1.msra.mxu0 0.0
    %2444 = vmatprep.subr.mxu0 0.0
    %2445 = vmatpush1.msra.mxu0 0.0
    %2446 = vmatprep.subr.mxu0 0.0
    %2447 = vmatpush1.msra.mxu0 0.0
    %2448 = vmatprep.subr.mxu0 0.0
    %2449 = vmatpush1.msra.mxu0 0.0
    %2450 = vmatprep.subr.mxu0 0.0
    %2451 = vmatpush1.msra.mxu0 0.0
    %2452 = vmatprep.subr.mxu0 0.0
    %2453 = vmatpush1.msra.mxu0 0.0
    %2454 = vmatprep.subr.mxu0 0.0
    %2455 = vmatpush1.msra.mxu0 0.0
    %2456 = vmatprep.subr.mxu0 0.0
    %2457 = vmatpush1.msra.mxu0 0.0
    %2458 = vmatprep.subr.mxu0 0.0
    %2459 = vmatpush1.msra.mxu0 0.0
    %2460 = vmatprep.subr.mxu0 0.0
    %2461 = vmatpush1.msra.mxu0 0.0
    %2462 = vmatprep.subr.mxu0 0.0
    %2463 = vmatpush1.msra.mxu0 0.0
    %2464 = vmatprep.subr.mxu0 0.0
    %2465 = vmatpush1.msra.mxu0 0.0
    %2466 = vmatprep.subr.mxu0 0.0
    %2467 = vmatpush1.msra.mxu0 0.0
    %2468 = vmatprep.subr.mxu0 0.0
    %2469 = vmatpush1.msra.mxu0 0.0
    %2470 = vmatprep.subr.mxu0 0.0
    %2471 = vmatpush1.msra.mxu0 0.0
    %2472 = vmatprep.subr.mxu0 0.0
    %2473 = vmatpush1.msra.mxu0 0.0
    %2474 = vmatprep.subr.mxu0 0.0
    %2475 = vmatpush1.msra.mxu0 0.0
    %2476 = vmatprep.subr.mxu0 0.0
    %2477 = vmatpush1.msra.mxu0 0.0
    %2478 = vmatprep.subr.mxu0 0.0
    %2479 = vmatpush1.msra.mxu0 0.0
    %2480 = vmatprep.subr.mxu0 0.0
    %2481 = vmatpush1.msra.mxu0 0.0
    %2482 = vmatprep.subr.mxu0 0.0
    %2483 = vmatpush1.msra.mxu0 0.0
    %2484 = vmatprep.subr.mxu0 0.0
    %2485 = vmatpush1.msra.mxu0 0.0
    %2486 = vmatprep.mubr.f32.mxu0 0.0
    %v2487 = vand.u32 %v2239, 4294901760
    %v2488 = vsub.f32 %v2239, %v2487
    %2489 = vmatmul.mubr.f32.gmra.mrb[0].mxu0 %v2488
    %v2490 = vpop.f32.mrb[0].mxu0
    %v2491 = vadd.f32 %v2409, %v2490
    %v2492 = vpop.f32.mrb[0].mxu0
    %2493 = vmatprep.mubr.f32.mxu0 0.0
    %v2494 = vand.u32 %v2242, 4294901760
    %v2495 = vsub.f32 %v2242, %v2494
    %2496 = vmatmul.mubr.f32.gmra.mrb[0].mxu0 %v2495
    %v2497 = vpop.f32.mrb[0].mxu0
    %v2498 = vadd.f32 %v2415, %v2497
    %v2499 = vpop.f32.mrb[0].mxu0
    %2500 = vdwg.mxu0
    %2501 = vmatprep.subr.mxu0 0.0
    %v2502 = vand.u32 %v2233, 4294901760
    %2503 = vmatpush1.msra.mxu0 %v2502
    %2504 = vmatprep.subr.mxu0 0.0
    %v2505 = vand.u32 %v2235, 4294901760
    %2506 = vmatpush1.msra.mxu0 %v2505
    %2507 = vmatprep.subr.mxu0 0.0
    %2508 = vmatpush1.msra.mxu0 0.0
    %2509 = vmatprep.subr.mxu0 0.0
    %2510 = vmatpush1.msra.mxu0 0.0
    %2511 = vmatprep.subr.mxu0 0.0
    %2512 = vmatpush1.msra.mxu0 0.0
    %2513 = vmatprep.subr.mxu0 0.0
    %2514 = vmatpush1.msra.mxu0 0.0
    %2515 = vmatprep.subr.mxu0 0.0
    %2516 = vmatpush1.msra.mxu0 0.0
    %2517 = vmatprep.subr.mxu0 0.0
    %2518 = vmatpush1.msra.mxu0 0.0
    %2519 = vmatprep.subr.mxu0 0.0
    %2520 = vmatpush1.msra.mxu0 0.0
    %2521 = vmatprep.subr.mxu0 0.0
    %2522 = vmatpush1.msra.mxu0 0.0
    %2523 = vmatprep.subr.mxu0 0.0
    %2524 = vmatpush1.msra.mxu0 0.0
    %2525 = vmatprep.subr.mxu0 0.0
    %2526 = vmatpush1.msra.mxu0 0.0
    %2527 = vmatprep.subr.mxu0 0.0
    %2528 = vmatpush1.msra.mxu0 0.0
    %2529 = vmatprep.subr.mxu0 0.0
    %2530 = vmatpush1.msra.mxu0 0.0
    %2531 = vmatprep.subr.mxu0 0.0
    %2532 = vmatpush1.msra.mxu0 0.0
    %2533 = vmatprep.subr.mxu0 0.0
    %2534 = vmatpush1.msra.mxu0 0.0
    %2535 = vmatprep.subr.mxu0 0.0
    %2536 = vmatpush1.msra.mxu0 0.0
    %2537 = vmatprep.subr.mxu0 0.0
    %2538 = vmatpush1.msra.mxu0 0.0
    %2539 = vmatprep.subr.mxu0 0.0
    %2540 = vmatpush1.msra.mxu0 0.0
    %2541 = vmatprep.subr.mxu0 0.0
    %2542 = vmatpush1.msra.mxu0 0.0
    %2543 = vmatprep.subr.mxu0 0.0
    %2544 = vmatpush1.msra.mxu0 0.0
    %2545 = vmatprep.subr.mxu0 0.0
    %2546 = vmatpush1.msra.mxu0 0.0
    %2547 = vmatprep.subr.mxu0 0.0
    %2548 = vmatpush1.msra.mxu0 0.0
    %2549 = vmatprep.subr.mxu0 0.0
    %2550 = vmatpush1.msra.mxu0 0.0
    %2551 = vmatprep.subr.mxu0 0.0
    %2552 = vmatpush1.msra.mxu0 0.0
    %2553 = vmatprep.subr.mxu0 0.0
    %2554 = vmatpush1.msra.mxu0 0.0
    %2555 = vmatprep.subr.mxu0 0.0
    %2556 = vmatpush1.msra.mxu0 0.0
    %2557 = vmatprep.subr.mxu0 0.0
    %2558 = vmatpush1.msra.mxu0 0.0
    %2559 = vmatprep.subr.mxu0 0.0
    %2560 = vmatpush1.msra.mxu0 0.0
    %2561 = vmatprep.subr.mxu0 0.0
    %2562 = vmatpush1.msra.mxu0 0.0
    %2563 = vmatprep.subr.mxu0 0.0
    %2564 = vmatpush1.msra.mxu0 0.0
    %2565 = vmatprep.subr.mxu0 0.0
    %2566 = vmatpush1.msra.mxu0 0.0
    %2567 = vmatprep.mubr.f32.mxu0 0.0
    %v2568 = vand.u32 %v2239, 4294901760
    %v2569 = vsub.f32 %v2239, %v2568
    %v2570 = vand.u32 %v2569, 4294901760
    %2571 = vmatmul.mubr.f32.gmra.mrb[0].mxu0 %v2570
    %v2572 = vpop.f32.mrb[0].mxu0
    %v2573 = vadd.f32 %v2491, %v2572
    %v2574 = vpop.f32.mrb[0].mxu0
    %2575 = vmatprep.mubr.f32.mxu0 0.0
    %v2576 = vand.u32 %v2242, 4294901760
    %v2577 = vsub.f32 %v2242, %v2576
    %v2578 = vand.u32 %v2577, 4294901760
    %2579 = vmatmul.mubr.f32.gmra.mrb[0].mxu0 %v2578
    %v2580 = vpop.f32.mrb[0].mxu0
    %v2581 = vadd.f32 %v2498, %v2580
    %v2582 = vpop.f32.mrb[0].mxu0
    %2583 = vdwg.mxu0
    %2584 = vmatprep.subr.mxu0 0.0
    %v2585 = vand.u32 %v2233, 4294901760
    %v2586 = vsub.f32 %v2233, %v2585
    %v2587 = vand.u32 %v2586, 4294901760
    %2588 = vmatpush1.msra.mxu0 %v2587
    %2589 = vmatprep.subr.mxu0 0.0
    %v2590 = vand.u32 %v2235, 4294901760
    %v2591 = vsub.f32 %v2235, %v2590
    %v2592 = vand.u32 %v2591, 4294901760
    %2593 = vmatpush1.msra.mxu0 %v2592
    %2594 = vmatprep.subr.mxu0 0.0
    %2595 = vmatpush1.msra.mxu0 0.0
    %2596 = vmatprep.subr.mxu0 0.0
    %2597 = vmatpush1.msra.mxu0 0.0
    %2598 = vmatprep.subr.mxu0 0.0
    %2599 = vmatpush1.msra.mxu0 0.0
    %2600 = vmatprep.subr.mxu0 0.0
    %2601 = vmatpush1.msra.mxu0 0.0
    %2602 = vmatprep.subr.mxu0 0.0
    %2603 = vmatpush1.msra.mxu0 0.0
    %2604 = vmatprep.subr.mxu0 0.0
    %2605 = vmatpush1.msra.mxu0 0.0
    %2606 = vmatprep.subr.mxu0 0.0
    %2607 = vmatpush1.msra.mxu0 0.0
    %2608 = vmatprep.subr.mxu0 0.0
    %2609 = vmatpush1.msra.mxu0 0.0
    %2610 = vmatprep.subr.mxu0 0.0
    %2611 = vmatpush1.msra.mxu0 0.0
    %2612 = vmatprep.subr.mxu0 0.0
    %2613 = vmatpush1.msra.mxu0 0.0
    %2614 = vmatprep.subr.mxu0 0.0
    %2615 = vmatpush1.msra.mxu0 0.0
    %2616 = vmatprep.subr.mxu0 0.0
    %2617 = vmatpush1.msra.mxu0 0.0
    %2618 = vmatprep.subr.mxu0 0.0
    %2619 = vmatpush1.msra.mxu0 0.0
    %2620 = vmatprep.subr.mxu0 0.0
    %2621 = vmatpush1.msra.mxu0 0.0
    %2622 = vmatprep.subr.mxu0 0.0
    %2623 = vmatpush1.msra.mxu0 0.0
    %2624 = vmatprep.subr.mxu0 0.0
    %2625 = vmatpush1.msra.mxu0 0.0
    %2626 = vmatprep.subr.mxu0 0.0
    %2627 = vmatpush1.msra.mxu0 0.0
    %2628 = vmatprep.subr.mxu0 0.0
    %2629 = vmatpush1.msra.mxu0 0.0
    %2630 = vmatprep.subr.mxu0 0.0
    %2631 = vmatpush1.msra.mxu0 0.0
    %2632 = vmatprep.subr.mxu0 0.0
    %2633 = vmatpush1.msra.mxu0 0.0
    %2634 = vmatprep.subr.mxu0 0.0
    %2635 = vmatpush1.msra.mxu0 0.0
    %2636 = vmatprep.subr.mxu0 0.0
    %2637 = vmatpush1.msra.mxu0 0.0
    %2638 = vmatprep.subr.mxu0 0.0
    %2639 = vmatpush1.msra.mxu0 0.0
    %2640 = vmatprep.subr.mxu0 0.0
    %2641 = vmatpush1.msra.mxu0 0.0
    %2642 = vmatprep.subr.mxu0 0.0
    %2643 = vmatpush1.msra.mxu0 0.0
    %2644 = vmatprep.subr.mxu0 0.0
    %2645 = vmatpush1.msra.mxu0 0.0
    %2646 = vmatprep.subr.mxu0 0.0
    %2647 = vmatpush1.msra.mxu0 0.0
    %2648 = vmatprep.subr.mxu0 0.0
    %2649 = vmatpush1.msra.mxu0 0.0
    %2650 = vmatprep.subr.mxu0 0.0
    %2651 = vmatpush1.msra.mxu0 0.0
    %2652 = vmatprep.subr.mxu0 0.0
    %2653 = vmatpush1.msra.mxu0 0.0
    %2654 = vmatprep.mubr.f32.mxu0 0.0
    %v2655 = vand.u32 %v2239, 4294901760
    %2656 = vmatmul.mubr.f32.gmra.mrb[0].mxu0 %v2655
    %v2657 = vpop.f32.mrb[0].mxu0
    %v2658 = vadd.f32 %v2573, %v2657
    %v2659 = vpop.f32.mrb[0].mxu0
    %2660 = vmatprep.mubr.f32.mxu0 0.0
    %v2661 = vand.u32 %v2242, 4294901760
    %2662 = vmatmul.mubr.f32.gmra.mrb[0].mxu0 %v2661
    %v2663 = vpop.f32.mrb[0].mxu0
    %v2664 = vadd.f32 %v2581, %v2663
    %v2665 = vpop.f32.mrb[0].mxu0
    %2666 = vdwg.mxu0
    %2667 = vmatprep.subr.mxu0 0.0
    %v2668 = vand.u32 %v2233, 4294901760
    %2669 = vmatpush1.msra.mxu0 %v2668
    %2670 = vmatprep.subr.mxu0 0.0
    %v2671 = vand.u32 %v2235, 4294901760
    %2672 = vmatpush1.msra.mxu0 %v2671
    %2673 = vmatprep.subr.mxu0 0.0
    %2674 = vmatpush1.msra.mxu0 0.0
    %2675 = vmatprep.subr.mxu0 0.0
    %2676 = vmatpush1.msra.mxu0 0.0
    %2677 = vmatprep.subr.mxu0 0.0
    %2678 = vmatpush1.msra.mxu0 0.0
    %2679 = vmatprep.subr.mxu0 0.0
    %2680 = vmatpush1.msra.mxu0 0.0
    %2681 = vmatprep.subr.mxu0 0.0
    %2682 = vmatpush1.msra.mxu0 0.0
    %2683 = vmatprep.subr.mxu0 0.0
    %2684 = vmatpush1.msra.mxu0 0.0
    %2685 = vmatprep.subr.mxu0 0.0
    %2686 = vmatpush1.msra.mxu0 0.0
    %2687 = vmatprep.subr.mxu0 0.0
    %2688 = vmatpush1.msra.mxu0 0.0
    %2689 = vmatprep.subr.mxu0 0.0
    %2690 = vmatpush1.msra.mxu0 0.0
    %2691 = vmatprep.subr.mxu0 0.0
    %2692 = vmatpush1.msra.mxu0 0.0
    %2693 = vmatprep.subr.mxu0 0.0
    %2694 = vmatpush1.msra.mxu0 0.0
    %2695 = vmatprep.subr.mxu0 0.0
    %2696 = vmatpush1.msra.mxu0 0.0
    %2697 = vmatprep.subr.mxu0 0.0
    %2698 = vmatpush1.msra.mxu0 0.0
    %2699 = vmatprep.subr.mxu0 0.0
    %2700 = vmatpush1.msra.mxu0 0.0
    %2701 = vmatprep.subr.mxu0 0.0
    %2702 = vmatpush1.msra.mxu0 0.0
    %2703 = vmatprep.subr.mxu0 0.0
    %2704 = vmatpush1.msra.mxu0 0.0
    %2705 = vmatprep.subr.mxu0 0.0
    %2706 = vmatpush1.msra.mxu0 0.0
    %2707 = vmatprep.subr.mxu0 0.0
    %2708 = vmatpush1.msra.mxu0 0.0
    %2709 = vmatprep.subr.mxu0 0.0
    %2710 = vmatpush1.msra.mxu0 0.0
    %2711 = vmatprep.subr.mxu0 0.0
    %2712 = vmatpush1.msra.mxu0 0.0
    %2713 = vmatprep.subr.mxu0 0.0
    %2714 = vmatpush1.msra.mxu0 0.0
    %2715 = vmatprep.subr.mxu0 0.0
    %2716 = vmatpush1.msra.mxu0 0.0
    %2717 = vmatprep.subr.mxu0 0.0
    %2718 = vmatpush1.msra.mxu0 0.0
    %2719 = vmatprep.subr.mxu0 0.0
    %2720 = vmatpush1.msra.mxu0 0.0
    %2721 = vmatprep.subr.mxu0 0.0
    %2722 = vmatpush1.msra.mxu0 0.0
    %2723 = vmatprep.subr.mxu0 0.0
    %2724 = vmatpush1.msra.mxu0 0.0
    %2725 = vmatprep.subr.mxu0 0.0
    %2726 = vmatpush1.msra.mxu0 0.0
    %2727 = vmatprep.subr.mxu0 0.0
    %2728 = vmatpush1.msra.mxu0 0.0
    %2729 = vmatprep.subr.mxu0 0.0
    %2730 = vmatpush1.msra.mxu0 0.0
    %2731 = vmatprep.subr.mxu0 0.0
    %2732 = vmatpush1.msra.mxu0 0.0
    %2733 = vmatprep.mubr.f32.mxu0 0.0
    %v2734 = vand.u32 %v2239, 4294901760
    %2735 = vmatmul.mubr.f32.gmra.mrb[0].mxu0 %v2734
    %v2736 = vpop.f32.mrb[0].mxu0
    %v2737 = vadd.f32 %v2658, %v2736
    %v2738 = vpop.f32.mrb[0].mxu0
    %2739 = vmatprep.mubr.f32.mxu0 0.0
    %v2740 = vand.u32 %v2242, 4294901760
    %2741 = vmatmul.mubr.f32.gmra.mrb[0].mxu0 %v2740
    %v2742 = vpop.f32.mrb[0].mxu0
    %v2743 = vadd.f32 %v2664, %v2742
    %v2744 = vpop.f32.mrb[0].mxu0
    %2745 = vdwg.mxu0
    %2746 = vrot.lane.b32.xlu0 %v636, 120
    %v2747 = vpop.permute.xlu0 %2746
    %2748 = vrot.lane.b32.xlu0 %v637, 120
    %v2749 = vpop.permute.xlu0 %2748
    %2750 = vrot.lane.b32.xlu0 %v636, 104
    %v2751 = vpop.permute.xlu0 %2750
    %2752 = vrot.lane.b32.xlu0 %v637, 104
    %v2753 = vpop.permute.xlu0 %2752
    %v2754 = vsel %vm644, %v2747, 0
    %v2756 = vsel %vm644, %v2749, 0
    %v2758 = vsel %vm644, %v2751, 0
    %v2760 = vsel %vm644, %v2753, 0
    %2762 = vmatprep.subr.mxu0 0.0
    %v2763 = vand.u32 %v2758, 4294901760
    %2764 = vmatpush1.xpose.msra.mxu0 %v2763
    %2765 = vmatprep.subr.mxu0 0.0
    %v2766 = vand.u32 %v2760, 4294901760
    %2767 = vmatpush1.xpose.msra.mxu0 %v2766
    %2768 = vmatprep.subr.mxu0 0.0
    %2769 = vmatpush1.xpose.msra.mxu0 0.0
    %2770 = vmatprep.subr.mxu0 0.0
    %2771 = vmatpush1.xpose.msra.mxu0 0.0
    %2772 = vmatprep.subr.mxu0 0.0
    %2773 = vmatpush1.xpose.msra.mxu0 0.0
    %2774 = vmatprep.subr.mxu0 0.0
    %2775 = vmatpush1.xpose.msra.mxu0 0.0
    %2776 = vmatprep.subr.mxu0 0.0
    %2777 = vmatpush1.xpose.msra.mxu0 0.0
    %2778 = vmatprep.subr.mxu0 0.0
    %2779 = vmatpush1.xpose.msra.mxu0 0.0
    %2780 = vmatprep.subr.mxu0 0.0
    %2781 = vmatpush1.xpose.msra.mxu0 0.0
    %2782 = vmatprep.subr.mxu0 0.0
    %2783 = vmatpush1.xpose.msra.mxu0 0.0
    %2784 = vmatprep.subr.mxu0 0.0
    %2785 = vmatpush1.xpose.msra.mxu0 0.0
    %2786 = vmatprep.subr.mxu0 0.0
    %2787 = vmatpush1.xpose.msra.mxu0 0.0
    %2788 = vmatprep.subr.mxu0 0.0
    %2789 = vmatpush1.xpose.msra.mxu0 0.0
    %2790 = vmatprep.subr.mxu0 0.0
    %2791 = vmatpush1.xpose.msra.mxu0 0.0
    %2792 = vmatprep.subr.mxu0 0.0
    %2793 = vmatpush1.xpose.msra.mxu0 0.0
    %2794 = vmatprep.subr.mxu0 0.0
    %2795 = vmatpush1.xpose.msra.mxu0 0.0
    %2796 = vmatprep.subr.mxu0 0.0
    %2797 = vmatpush1.xpose.msra.mxu0 0.0
    %2798 = vmatprep.subr.mxu0 0.0
    %2799 = vmatpush1.xpose.msra.mxu0 0.0
    %2800 = vmatprep.subr.mxu0 0.0
    %2801 = vmatpush1.xpose.msra.mxu0 0.0
    %2802 = vmatprep.subr.mxu0 0.0
    %2803 = vmatpush1.xpose.msra.mxu0 0.0
    %2804 = vmatprep.subr.mxu0 0.0
    %2805 = vmatpush1.xpose.msra.mxu0 0.0
    %2806 = vmatprep.subr.mxu0 0.0
    %2807 = vmatpush1.xpose.msra.mxu0 0.0
    %2808 = vmatprep.subr.mxu0 0.0
    %2809 = vmatpush1.xpose.msra.mxu0 0.0
    %2810 = vmatprep.subr.mxu0 0.0
    %2811 = vmatpush1.xpose.msra.mxu0 0.0
    %2812 = vmatprep.subr.mxu0 0.0
    %2813 = vmatpush1.xpose.msra.mxu0 0.0
    %2814 = vmatprep.subr.mxu0 0.0
    %2815 = vmatpush1.xpose.msra.mxu0 0.0
    %2816 = vmatprep.subr.mxu0 0.0
    %2817 = vmatpush1.xpose.msra.mxu0 0.0
    %2818 = vmatprep.subr.mxu0 0.0
    %2819 = vmatpush1.xpose.msra.mxu0 0.0
    %2820 = vmatprep.subr.mxu0 0.0
    %2821 = vmatpush1.xpose.msra.mxu0 0.0
    %2822 = vmatprep.subr.mxu0 0.0
    %2823 = vmatpush1.xpose.msra.mxu0 0.0
    %2824 = vmatprep.subr.mxu0 0.0
    %2825 = vmatpush1.xpose.msra.mxu0 0.0
    %2826 = vmatprep.subr.mxu0 0.0
    %2827 = vmatpush1.xpose.msra.mxu0 0.0
    %2828 = vmatprep.mubr.f32.mxu0 0.0
    %v2829 = vand.u32 %v2754, 4294901760
    %v2830 = vsub.f32 %v2754, %v2829
    %v2831 = vand.u32 %v2830, 4294901760
    %v2832 = vsub.f32 %v2830, %v2831
    %v2833 = vand.u32 %v2832, 4294901760
    %2834 = vmatmul.mubr.f32.gmra.mrb[0].mxu0 %v2833
    %v2835 = vpop.f32.mrb[0].mxu0
    %v2836 = vadd.f32 %v30, %v2835
    %v2837 = vpop.f32.mrb[0].mxu0
    %2838 = vmatprep.mubr.f32.mxu0 0.0
    %v2839 = vand.u32 %v2756, 4294901760
    %v2840 = vsub.f32 %v2756, %v2839
    %v2841 = vand.u32 %v2840, 4294901760
    %v2842 = vsub.f32 %v2840, %v2841
    %v2843 = vand.u32 %v2842, 4294901760
    %2844 = vmatmul.mubr.f32.gmra.mrb[0].mxu0 %v2843
    %v2845 = vpop.f32.mrb[0].mxu0
    %v2846 = vadd.f32 %v31, %v2845
    %v2847 = vpop.f32.mrb[0].mxu0
    %2848 = vdwg.mxu0
    %2849 = vmatprep.subr.mxu0 0.0
    %v2850 = vand.u32 %v2758, 4294901760
    %v2851 = vsub.f32 %v2758, %v2850
    %v2852 = vand.u32 %v2851, 4294901760
    %v2853 = vsub.f32 %v2851, %v2852
    %v2854 = vand.u32 %v2853, 4294901760
    %2855 = vmatpush1.xpose.msra.mxu0 %v2854
    %2856 = vmatprep.subr.mxu0 0.0
    %v2857 = vand.u32 %v2760, 4294901760
    %v2858 = vsub.f32 %v2760, %v2857
    %v2859 = vand.u32 %v2858, 4294901760
    %v2860 = vsub.f32 %v2858, %v2859
    %v2861 = vand.u32 %v2860, 4294901760
    %2862 = vmatpush1.xpose.msra.mxu0 %v2861
    %2863 = vmatprep.subr.mxu0 0.0
    %2864 = vmatpush1.xpose.msra.mxu0 0.0
    %2865 = vmatprep.subr.mxu0 0.0
    %2866 = vmatpush1.xpose.msra.mxu0 0.0
    %2867 = vmatprep.subr.mxu0 0.0
    %2868 = vmatpush1.xpose.msra.mxu0 0.0
    %2869 = vmatprep.subr.mxu0 0.0
    %2870 = vmatpush1.xpose.msra.mxu0 0.0
    %2871 = vmatprep.subr.mxu0 0.0
    %2872 = vmatpush1.xpose.msra.mxu0 0.0
    %2873 = vmatprep.subr.mxu0 0.0
    %2874 = vmatpush1.xpose.msra.mxu0 0.0
    %2875 = vmatprep.subr.mxu0 0.0
    %2876 = vmatpush1.xpose.msra.mxu0 0.0
    %2877 = vmatprep.subr.mxu0 0.0
    %2878 = vmatpush1.xpose.msra.mxu0 0.0
    %2879 = vmatprep.subr.mxu0 0.0
    %2880 = vmatpush1.xpose.msra.mxu0 0.0
    %2881 = vmatprep.subr.mxu0 0.0
    %2882 = vmatpush1.xpose.msra.mxu0 0.0
    %2883 = vmatprep.subr.mxu0 0.0
    %2884 = vmatpush1.xpose.msra.mxu0 0.0
    %2885 = vmatprep.subr.mxu0 0.0
    %2886 = vmatpush1.xpose.msra.mxu0 0.0
    %2887 = vmatprep.subr.mxu0 0.0
    %2888 = vmatpush1.xpose.msra.mxu0 0.0
    %2889 = vmatprep.subr.mxu0 0.0
    %2890 = vmatpush1.xpose.msra.mxu0 0.0
    %2891 = vmatprep.subr.mxu0 0.0
    %2892 = vmatpush1.xpose.msra.mxu0 0.0
    %2893 = vmatprep.subr.mxu0 0.0
    %2894 = vmatpush1.xpose.msra.mxu0 0.0
    %2895 = vmatprep.subr.mxu0 0.0
    %2896 = vmatpush1.xpose.msra.mxu0 0.0
    %2897 = vmatprep.subr.mxu0 0.0
    %2898 = vmatpush1.xpose.msra.mxu0 0.0
    %2899 = vmatprep.subr.mxu0 0.0
    %2900 = vmatpush1.xpose.msra.mxu0 0.0
    %2901 = vmatprep.subr.mxu0 0.0
    %2902 = vmatpush1.xpose.msra.mxu0 0.0
    %2903 = vmatprep.subr.mxu0 0.0
    %2904 = vmatpush1.xpose.msra.mxu0 0.0
    %2905 = vmatprep.subr.mxu0 0.0
    %2906 = vmatpush1.xpose.msra.mxu0 0.0
    %2907 = vmatprep.subr.mxu0 0.0
    %2908 = vmatpush1.xpose.msra.mxu0 0.0
    %2909 = vmatprep.subr.mxu0 0.0
    %2910 = vmatpush1.xpose.msra.mxu0 0.0
    %2911 = vmatprep.subr.mxu0 0.0
    %2912 = vmatpush1.xpose.msra.mxu0 0.0
    %2913 = vmatprep.subr.mxu0 0.0
    %2914 = vmatpush1.xpose.msra.mxu0 0.0
    %2915 = vmatprep.subr.mxu0 0.0
    %2916 = vmatpush1.xpose.msra.mxu0 0.0
    %2917 = vmatprep.subr.mxu0 0.0
    %2918 = vmatpush1.xpose.msra.mxu0 0.0
    %2919 = vmatprep.subr.mxu0 0.0
    %2920 = vmatpush1.xpose.msra.mxu0 0.0
    %2921 = vmatprep.subr.mxu0 0.0
    %2922 = vmatpush1.xpose.msra.mxu0 0.0
    %2923 = vmatprep.mubr.f32.mxu0 0.0
    %v2924 = vand.u32 %v2754, 4294901760
    %2925 = vmatmul.mubr.f32.gmra.mrb[0].mxu0 %v2924
    %v2926 = vpop.f32.mrb[0].mxu0
    %v2927 = vadd.f32 %v2836, %v2926
    %v2928 = vpop.f32.mrb[0].mxu0
    %2929 = vmatprep.mubr.f32.mxu0 0.0
    %v2930 = vand.u32 %v2756, 4294901760
    %2931 = vmatmul.mubr.f32.gmra.mrb[0].mxu0 %v2930
    %v2932 = vpop.f32.mrb[0].mxu0
    %v2933 = vadd.f32 %v2846, %v2932
    %v2934 = vpop.f32.mrb[0].mxu0
    %2935 = vdwg.mxu0
    %2936 = vmatprep.subr.mxu0 0.0
    %v2937 = vand.u32 %v2758, 4294901760
    %v2938 = vsub.f32 %v2758, %v2937
    %2939 = vmatpush1.xpose.msra.mxu0 %v2938
    %2940 = vmatprep.subr.mxu0 0.0
    %v2941 = vand.u32 %v2760, 4294901760
    %v2942 = vsub.f32 %v2760, %v2941
    %2943 = vmatpush1.xpose.msra.mxu0 %v2942
    %2944 = vmatprep.subr.mxu0 0.0
    %2945 = vmatpush1.xpose.msra.mxu0 0.0
    %2946 = vmatprep.subr.mxu0 0.0
    %2947 = vmatpush1.xpose.msra.mxu0 0.0
    %2948 = vmatprep.subr.mxu0 0.0
    %2949 = vmatpush1.xpose.msra.mxu0 0.0
    %2950 = vmatprep.subr.mxu0 0.0
    %2951 = vmatpush1.xpose.msra.mxu0 0.0
    %2952 = vmatprep.subr.mxu0 0.0
    %2953 = vmatpush1.xpose.msra.mxu0 0.0
    %2954 = vmatprep.subr.mxu0 0.0
    %2955 = vmatpush1.xpose.msra.mxu0 0.0
    %2956 = vmatprep.subr.mxu0 0.0
    %2957 = vmatpush1.xpose.msra.mxu0 0.0
    %2958 = vmatprep.subr.mxu0 0.0
    %2959 = vmatpush1.xpose.msra.mxu0 0.0
    %2960 = vmatprep.subr.mxu0 0.0
    %2961 = vmatpush1.xpose.msra.mxu0 0.0
    %2962 = vmatprep.subr.mxu0 0.0
    %2963 = vmatpush1.xpose.msra.mxu0 0.0
    %2964 = vmatprep.subr.mxu0 0.0
    %2965 = vmatpush1.xpose.msra.mxu0 0.0
    %2966 = vmatprep.subr.mxu0 0.0
    %2967 = vmatpush1.xpose.msra.mxu0 0.0
    %2968 = vmatprep.subr.mxu0 0.0
    %2969 = vmatpush1.xpose.msra.mxu0 0.0
    %2970 = vmatprep.subr.mxu0 0.0
    %2971 = vmatpush1.xpose.msra.mxu0 0.0
    %2972 = vmatprep.subr.mxu0 0.0
    %2973 = vmatpush1.xpose.msra.mxu0 0.0
    %2974 = vmatprep.subr.mxu0 0.0
    %2975 = vmatpush1.xpose.msra.mxu0 0.0
    %2976 = vmatprep.subr.mxu0 0.0
    %2977 = vmatpush1.xpose.msra.mxu0 0.0
    %2978 = vmatprep.subr.mxu0 0.0
    %2979 = vmatpush1.xpose.msra.mxu0 0.0
    %2980 = vmatprep.subr.mxu0 0.0
    %2981 = vmatpush1.xpose.msra.mxu0 0.0
    %2982 = vmatprep.subr.mxu0 0.0
    %2983 = vmatpush1.xpose.msra.mxu0 0.0
    %2984 = vmatprep.subr.mxu0 0.0
    %2985 = vmatpush1.xpose.msra.mxu0 0.0
    %2986 = vmatprep.subr.mxu0 0.0
    %2987 = vmatpush1.xpose.msra.mxu0 0.0
    %2988 = vmatprep.subr.mxu0 0.0
    %2989 = vmatpush1.xpose.msra.mxu0 0.0
    %2990 = vmatprep.subr.mxu0 0.0
    %2991 = vmatpush1.xpose.msra.mxu0 0.0
    %2992 = vmatprep.subr.mxu0 0.0
    %2993 = vmatpush1.xpose.msra.mxu0 0.0
    %2994 = vmatprep.subr.mxu0 0.0
    %2995 = vmatpush1.xpose.msra.mxu0 0.0
    %2996 = vmatprep.subr.mxu0 0.0
    %2997 = vmatpush1.xpose.msra.mxu0 0.0
    %2998 = vmatprep.subr.mxu0 0.0
    %2999 = vmatpush1.xpose.msra.mxu0 0.0
    %3000 = vmatprep.subr.mxu0 0.0
    %3001 = vmatpush1.xpose.msra.mxu0 0.0
    %3002 = vmatprep.subr.mxu0 0.0
    %3003 = vmatpush1.xpose.msra.mxu0 0.0
    %3004 = vmatprep.mubr.f32.mxu0 0.0
    %v3005 = vand.u32 %v2754, 4294901760
    %v3006 = vsub.f32 %v2754, %v3005
    %3007 = vmatmul.mubr.f32.gmra.mrb[0].mxu0 %v3006
    %v3008 = vpop.f32.mrb[0].mxu0
    %v3009 = vadd.f32 %v2927, %v3008
    %v3010 = vpop.f32.mrb[0].mxu0
    %3011 = vmatprep.mubr.f32.mxu0 0.0
    %v3012 = vand.u32 %v2756, 4294901760
    %v3013 = vsub.f32 %v2756, %v3012
    %3014 = vmatmul.mubr.f32.gmra.mrb[0].mxu0 %v3013
    %v3015 = vpop.f32.mrb[0].mxu0
    %v3016 = vadd.f32 %v2933, %v3015
    %v3017 = vpop.f32.mrb[0].mxu0
    %3018 = vdwg.mxu0
    %3019 = vmatprep.subr.mxu0 0.0
    %v3020 = vand.u32 %v2758, 4294901760
    %3021 = vmatpush1.xpose.msra.mxu0 %v3020
    %3022 = vmatprep.subr.mxu0 0.0
    %v3023 = vand.u32 %v2760, 4294901760
    %3024 = vmatpush1.xpose.msra.mxu0 %v3023
    %3025 = vmatprep.subr.mxu0 0.0
    %3026 = vmatpush1.xpose.msra.mxu0 0.0
    %3027 = vmatprep.subr.mxu0 0.0
    %3028 = vmatpush1.xpose.msra.mxu0 0.0
    %3029 = vmatprep.subr.mxu0 0.0
    %3030 = vmatpush1.xpose.msra.mxu0 0.0
    %3031 = vmatprep.subr.mxu0 0.0
    %3032 = vmatpush1.xpose.msra.mxu0 0.0
    %3033 = vmatprep.subr.mxu0 0.0
    %3034 = vmatpush1.xpose.msra.mxu0 0.0
    %3035 = vmatprep.subr.mxu0 0.0
    %3036 = vmatpush1.xpose.msra.mxu0 0.0
    %3037 = vmatprep.subr.mxu0 0.0
    %3038 = vmatpush1.xpose.msra.mxu0 0.0
    %3039 = vmatprep.subr.mxu0 0.0
    %3040 = vmatpush1.xpose.msra.mxu0 0.0
    %3041 = vmatprep.subr.mxu0 0.0
    %3042 = vmatpush1.xpose.msra.mxu0 0.0
    %3043 = vmatprep.subr.mxu0 0.0
    %3044 = vmatpush1.xpose.msra.mxu0 0.0
    %3045 = vmatprep.subr.mxu0 0.0
    %3046 = vmatpush1.xpose.msra.mxu0 0.0
    %3047 = vmatprep.subr.mxu0 0.0
    %3048 = vmatpush1.xpose.msra.mxu0 0.0
    %3049 = vmatprep.subr.mxu0 0.0
    %3050 = vmatpush1.xpose.msra.mxu0 0.0
    %3051 = vmatprep.subr.mxu0 0.0
    %3052 = vmatpush1.xpose.msra.mxu0 0.0
    %3053 = vmatprep.subr.mxu0 0.0
    %3054 = vmatpush1.xpose.msra.mxu0 0.0
    %3055 = vmatprep.subr.mxu0 0.0
    %3056 = vmatpush1.xpose.msra.mxu0 0.0
    %3057 = vmatprep.subr.mxu0 0.0
    %3058 = vmatpush1.xpose.msra.mxu0 0.0
    %3059 = vmatprep.subr.mxu0 0.0
    %3060 = vmatpush1.xpose.msra.mxu0 0.0
    %3061 = vmatprep.subr.mxu0 0.0
    %3062 = vmatpush1.xpose.msra.mxu0 0.0
    %3063 = vmatprep.subr.mxu0 0.0
    %3064 = vmatpush1.xpose.msra.mxu0 0.0
    %3065 = vmatprep.subr.mxu0 0.0
    %3066 = vmatpush1.xpose.msra.mxu0 0.0
    %3067 = vmatprep.subr.mxu0 0.0
    %3068 = vmatpush1.xpose.msra.mxu0 0.0
    %3069 = vmatprep.subr.mxu0 0.0
    %3070 = vmatpush1.xpose.msra.mxu0 0.0
    %3071 = vmatprep.subr.mxu0 0.0
    %3072 = vmatpush1.xpose.msra.mxu0 0.0
    %3073 = vmatprep.subr.mxu0 0.0
    %3074 = vmatpush1.xpose.msra.mxu0 0.0
    %3075 = vmatprep.subr.mxu0 0.0
    %3076 = vmatpush1.xpose.msra.mxu0 0.0
    %3077 = vmatprep.subr.mxu0 0.0
    %3078 = vmatpush1.xpose.msra.mxu0 0.0
    %3079 = vmatprep.subr.mxu0 0.0
    %3080 = vmatpush1.xpose.msra.mxu0 0.0
    %3081 = vmatprep.subr.mxu0 0.0
    %3082 = vmatpush1.xpose.msra.mxu0 0.0
    %3083 = vmatprep.subr.mxu0 0.0
    %3084 = vmatpush1.xpose.msra.mxu0 0.0
    %3085 = vmatprep.mubr.f32.mxu0 0.0
    %v3086 = vand.u32 %v2754, 4294901760
    %v3087 = vsub.f32 %v2754, %v3086
    %v3088 = vand.u32 %v3087, 4294901760
    %3089 = vmatmul.mubr.f32.gmra.mrb[0].mxu0 %v3088
    %v3090 = vpop.f32.mrb[0].mxu0
    %v3091 = vadd.f32 %v3009, %v3090
    %v3092 = vpop.f32.mrb[0].mxu0
    %3093 = vmatprep.mubr.f32.mxu0 0.0
    %v3094 = vand.u32 %v2756, 4294901760
    %v3095 = vsub.f32 %v2756, %v3094
    %v3096 = vand.u32 %v3095, 4294901760
    %3097 = vmatmul.mubr.f32.gmra.mrb[0].mxu0 %v3096
    %v3098 = vpop.f32.mrb[0].mxu0
    %v3099 = vadd.f32 %v3016, %v3098
    %v3100 = vpop.f32.mrb[0].mxu0
    %3101 = vdwg.mxu0
    %3102 = vmatprep.subr.mxu0 0.0
    %v3103 = vand.u32 %v2758, 4294901760
    %v3104 = vsub.f32 %v2758, %v3103
    %v3105 = vand.u32 %v3104, 4294901760
    %3106 = vmatpush1.xpose.msra.mxu0 %v3105
    %3107 = vmatprep.subr.mxu0 0.0
    %v3108 = vand.u32 %v2760, 4294901760
    %v3109 = vsub.f32 %v2760, %v3108
    %v3110 = vand.u32 %v3109, 4294901760
    %3111 = vmatpush1.xpose.msra.mxu0 %v3110
    %3112 = vmatprep.subr.mxu0 0.0
    %3113 = vmatpush1.xpose.msra.mxu0 0.0
    %3114 = vmatprep.subr.mxu0 0.0
    %3115 = vmatpush1.xpose.msra.mxu0 0.0
    %3116 = vmatprep.subr.mxu0 0.0
    %3117 = vmatpush1.xpose.msra.mxu0 0.0
    %3118 = vmatprep.subr.mxu0 0.0
    %3119 = vmatpush1.xpose.msra.mxu0 0.0
    %3120 = vmatprep.subr.mxu0 0.0
    %3121 = vmatpush1.xpose.msra.mxu0 0.0
    %3122 = vmatprep.subr.mxu0 0.0
    %3123 = vmatpush1.xpose.msra.mxu0 0.0
    %3124 = vmatprep.subr.mxu0 0.0
    %3125 = vmatpush1.xpose.msra.mxu0 0.0
    %3126 = vmatprep.subr.mxu0 0.0
    %3127 = vmatpush1.xpose.msra.mxu0 0.0
    %3128 = vmatprep.subr.mxu0 0.0
    %3129 = vmatpush1.xpose.msra.mxu0 0.0
    %3130 = vmatprep.subr.mxu0 0.0
    %3131 = vmatpush1.xpose.msra.mxu0 0.0
    %3132 = vmatprep.subr.mxu0 0.0
    %3133 = vmatpush1.xpose.msra.mxu0 0.0
    %3134 = vmatprep.subr.mxu0 0.0
    %3135 = vmatpush1.xpose.msra.mxu0 0.0
    %3136 = vmatprep.subr.mxu0 0.0
    %3137 = vmatpush1.xpose.msra.mxu0 0.0
    %3138 = vmatprep.subr.mxu0 0.0
    %3139 = vmatpush1.xpose.msra.mxu0 0.0
    %3140 = vmatprep.subr.mxu0 0.0
    %3141 = vmatpush1.xpose.msra.mxu0 0.0
    %3142 = vmatprep.subr.mxu0 0.0
    %3143 = vmatpush1.xpose.msra.mxu0 0.0
    %3144 = vmatprep.subr.mxu0 0.0
    %3145 = vmatpush1.xpose.msra.mxu0 0.0
    %3146 = vmatprep.subr.mxu0 0.0
    %3147 = vmatpush1.xpose.msra.mxu0 0.0
    %3148 = vmatprep.subr.mxu0 0.0
    %3149 = vmatpush1.xpose.msra.mxu0 0.0
    %3150 = vmatprep.subr.mxu0 0.0
    %3151 = vmatpush1.xpose.msra.mxu0 0.0
    %3152 = vmatprep.subr.mxu0 0.0
    %3153 = vmatpush1.xpose.msra.mxu0 0.0
    %3154 = vmatprep.subr.mxu0 0.0
    %3155 = vmatpush1.xpose.msra.mxu0 0.0
    %3156 = vmatprep.subr.mxu0 0.0
    %3157 = vmatpush1.xpose.msra.mxu0 0.0
    %3158 = vmatprep.subr.mxu0 0.0
    %3159 = vmatpush1.xpose.msra.mxu0 0.0
    %3160 = vmatprep.subr.mxu0 0.0
    %3161 = vmatpush1.xpose.msra.mxu0 0.0
    %3162 = vmatprep.subr.mxu0 0.0
    %3163 = vmatpush1.xpose.msra.mxu0 0.0
    %3164 = vmatprep.subr.mxu0 0.0
    %3165 = vmatpush1.xpose.msra.mxu0 0.0
    %3166 = vmatprep.subr.mxu0 0.0
    %3167 = vmatpush1.xpose.msra.mxu0 0.0
    %3168 = vmatprep.subr.mxu0 0.0
    %3169 = vmatpush1.xpose.msra.mxu0 0.0
    %3170 = vmatprep.subr.mxu0 0.0
    %3171 = vmatpush1.xpose.msra.mxu0 0.0
    %3172 = vmatprep.mubr.f32.mxu0 0.0
    %v3173 = vand.u32 %v2754, 4294901760
    %3174 = vmatmul.mubr.f32.gmra.mrb[0].mxu0 %v3173
    %v3175 = vpop.f32.mrb[0].mxu0
    %v3176 = vadd.f32 %v3091, %v3175
    %v3177 = vpop.f32.mrb[0].mxu0
    %3178 = vmatprep.mubr.f32.mxu0 0.0
    %v3179 = vand.u32 %v2756, 4294901760
    %3180 = vmatmul.mubr.f32.gmra.mrb[0].mxu0 %v3179
    %v3181 = vpop.f32.mrb[0].mxu0
    %v3182 = vadd.f32 %v3099, %v3181
    %v3183 = vpop.f32.mrb[0].mxu0
    %3184 = vdwg.mxu0
    %3185 = vmatprep.subr.mxu0 0.0
    %v3186 = vand.u32 %v2758, 4294901760
    %3187 = vmatpush1.xpose.msra.mxu0 %v3186
    %3188 = vmatprep.subr.mxu0 0.0
    %v3189 = vand.u32 %v2760, 4294901760
    %3190 = vmatpush1.xpose.msra.mxu0 %v3189
    %3191 = vmatprep.subr.mxu0 0.0
    %3192 = vmatpush1.xpose.msra.mxu0 0.0
    %3193 = vmatprep.subr.mxu0 0.0
    %3194 = vmatpush1.xpose.msra.mxu0 0.0
    %3195 = vmatprep.subr.mxu0 0.0
    %3196 = vmatpush1.xpose.msra.mxu0 0.0
    %3197 = vmatprep.subr.mxu0 0.0
    %3198 = vmatpush1.xpose.msra.mxu0 0.0
    %3199 = vmatprep.subr.mxu0 0.0
    %3200 = vmatpush1.xpose.msra.mxu0 0.0
    %3201 = vmatprep.subr.mxu0 0.0
    %3202 = vmatpush1.xpose.msra.mxu0 0.0
    %3203 = vmatprep.subr.mxu0 0.0
    %3204 = vmatpush1.xpose.msra.mxu0 0.0
    %3205 = vmatprep.subr.mxu0 0.0
    %3206 = vmatpush1.xpose.msra.mxu0 0.0
    %3207 = vmatprep.subr.mxu0 0.0
    %3208 = vmatpush1.xpose.msra.mxu0 0.0
    %3209 = vmatprep.subr.mxu0 0.0
    %3210 = vmatpush1.xpose.msra.mxu0 0.0
    %3211 = vmatprep.subr.mxu0 0.0
    %3212 = vmatpush1.xpose.msra.mxu0 0.0
    %3213 = vmatprep.subr.mxu0 0.0
    %3214 = vmatpush1.xpose.msra.mxu0 0.0
    %3215 = vmatprep.subr.mxu0 0.0
    %3216 = vmatpush1.xpose.msra.mxu0 0.0
    %3217 = vmatprep.subr.mxu0 0.0
    %3218 = vmatpush1.xpose.msra.mxu0 0.0
    %3219 = vmatprep.subr.mxu0 0.0
    %3220 = vmatpush1.xpose.msra.mxu0 0.0
    %3221 = vmatprep.subr.mxu0 0.0
    %3222 = vmatpush1.xpose.msra.mxu0 0.0
    %3223 = vmatprep.subr.mxu0 0.0
    %3224 = vmatpush1.xpose.msra.mxu0 0.0
    %3225 = vmatprep.subr.mxu0 0.0
    %3226 = vmatpush1.xpose.msra.mxu0 0.0
    %3227 = vmatprep.subr.mxu0 0.0
    %3228 = vmatpush1.xpose.msra.mxu0 0.0
    %3229 = vmatprep.subr.mxu0 0.0
    %3230 = vmatpush1.xpose.msra.mxu0 0.0
    %3231 = vmatprep.subr.mxu0 0.0
    %3232 = vmatpush1.xpose.msra.mxu0 0.0
    %3233 = vmatprep.subr.mxu0 0.0
    %3234 = vmatpush1.xpose.msra.mxu0 0.0
    %3235 = vmatprep.subr.mxu0 0.0
    %3236 = vmatpush1.xpose.msra.mxu0 0.0
    %3237 = vmatprep.subr.mxu0 0.0
    %3238 = vmatpush1.xpose.msra.mxu0 0.0
    %3239 = vmatprep.subr.mxu0 0.0
    %3240 = vmatpush1.xpose.msra.mxu0 0.0
    %3241 = vmatprep.subr.mxu0 0.0
    %3242 = vmatpush1.xpose.msra.mxu0 0.0
    %3243 = vmatprep.subr.mxu0 0.0
    %3244 = vmatpush1.xpose.msra.mxu0 0.0
    %3245 = vmatprep.subr.mxu0 0.0
    %3246 = vmatpush1.xpose.msra.mxu0 0.0
    %3247 = vmatprep.subr.mxu0 0.0
    %3248 = vmatpush1.xpose.msra.mxu0 0.0
    %3249 = vmatprep.subr.mxu0 0.0
    %3250 = vmatpush1.xpose.msra.mxu0 0.0
    %3251 = vmatprep.mubr.f32.mxu0 0.0
    %v3252 = vand.u32 %v2754, 4294901760
    %3253 = vmatmul.mubr.f32.gmra.mrb[0].mxu0 %v3252
    %v3254 = vpop.f32.mrb[0].mxu0
    %v3255 = vadd.f32 %v3176, %v3254
    %v3256 = vpop.f32.mrb[0].mxu0
    %3257 = vmatprep.mubr.f32.mxu0 0.0
    %v3258 = vand.u32 %v2756, 4294901760
    %3259 = vmatmul.mubr.f32.gmra.mrb[0].mxu0 %v3258
    %v3260 = vpop.f32.mrb[0].mxu0
    %v3261 = vadd.f32 %v3182, %v3260
    %v3262 = vpop.f32.mrb[0].mxu0
    %3263 = vdwg.mxu0
    %v3264 = vsel %vm1155, %v3255, -inf
    %3265 = vmax.xlane.f32.xlu0 %v3264
    %v3266 = vpop.xlane.xlu0 %3265
    %v3267 = vsel %vm1155, %v3261, -inf
    %3268 = vmax.xlane.f32.xlu0 %v3267
    %v3269 = vpop.xlane.xlu0 %3268
    %v3270 = vsub.f32 %v3255, %v3266
    %v3271 = vsub.f32 %v3261, %v3269
    %v3272 = vmul.f32 %v3270, 1.442695
    %v3273 = vpow.pop %v3272
    %v3274 = vmul.f32 %v3271, 1.442695
    %v3275 = vpow.pop %v3274
    %v3276 = vsel %vm1155, %v3273, 0.0
    %3277 = vadd.xlane.f32.xlu0 %v3276
    %v3278 = vpop.xlane.xlu0 %3277
    %v3279 = vsel %vm1155, %v3275, 0.0
    %3280 = vadd.xlane.f32.xlu0 %v3279
    %v3281 = vpop.xlane.xlu0 %3280
    %v3282 = vrcp.pop %v3278
    %v3283 = vmul.f32 %v3273, %v3282
    %v3284 = vrcp.pop %v3281
    %v3285 = vmul.f32 %v3275, %v3284
    %3286 = vrot.lane.b32.xlu0 %v636, 80
    %v3287 = vpop.permute.xlu0 %3286
    %3288 = vrot.lane.b32.xlu0 %v637, 80
    %v3289 = vpop.permute.xlu0 %3288
    %v3293 = vsel %vm1155, %v3283, 0
    %v3296 = vsel %vm1155, %v3285, 0
    %3298 = vmatprep.subr.mxu0 0.0
    %v3299 = vand.u32 %v3287, 4294901760
    %3300 = vmatpush1.msra.mxu0 %v3299
    %3301 = vmatprep.subr.mxu0 0.0
    %v3302 = vand.u32 %v3289, 4294901760
    %3303 = vmatpush1.msra.mxu0 %v3302
    %3304 = vmatprep.subr.mxu0 0.0
    %3305 = vmatpush1.msra.mxu0 0.0
    %3306 = vmatprep.subr.mxu0 0.0
    %3307 = vmatpush1.msra.mxu0 0.0
    %3308 = vmatprep.subr.mxu0 0.0
    %3309 = vmatpush1.msra.mxu0 0.0
    %3310 = vmatprep.subr.mxu0 0.0
    %3311 = vmatpush1.msra.mxu0 0.0
    %3312 = vmatprep.subr.mxu0 0.0
    %3313 = vmatpush1.msra.mxu0 0.0
    %3314 = vmatprep.subr.mxu0 0.0
    %3315 = vmatpush1.msra.mxu0 0.0
    %3316 = vmatprep.subr.mxu0 0.0
    %3317 = vmatpush1.msra.mxu0 0.0
    %3318 = vmatprep.subr.mxu0 0.0
    %3319 = vmatpush1.msra.mxu0 0.0
    %3320 = vmatprep.subr.mxu0 0.0
    %3321 = vmatpush1.msra.mxu0 0.0
    %3322 = vmatprep.subr.mxu0 0.0
    %3323 = vmatpush1.msra.mxu0 0.0
    %3324 = vmatprep.subr.mxu0 0.0
    %3325 = vmatpush1.msra.mxu0 0.0
    %3326 = vmatprep.subr.mxu0 0.0
    %3327 = vmatpush1.msra.mxu0 0.0
    %3328 = vmatprep.subr.mxu0 0.0
    %3329 = vmatpush1.msra.mxu0 0.0
    %3330 = vmatprep.subr.mxu0 0.0
    %3331 = vmatpush1.msra.mxu0 0.0
    %3332 = vmatprep.subr.mxu0 0.0
    %3333 = vmatpush1.msra.mxu0 0.0
    %3334 = vmatprep.subr.mxu0 0.0
    %3335 = vmatpush1.msra.mxu0 0.0
    %3336 = vmatprep.subr.mxu0 0.0
    %3337 = vmatpush1.msra.mxu0 0.0
    %3338 = vmatprep.subr.mxu0 0.0
    %3339 = vmatpush1.msra.mxu0 0.0
    %3340 = vmatprep.subr.mxu0 0.0
    %3341 = vmatpush1.msra.mxu0 0.0
    %3342 = vmatprep.subr.mxu0 0.0
    %3343 = vmatpush1.msra.mxu0 0.0
    %3344 = vmatprep.subr.mxu0 0.0
    %3345 = vmatpush1.msra.mxu0 0.0
    %3346 = vmatprep.subr.mxu0 0.0
    %3347 = vmatpush1.msra.mxu0 0.0
    %3348 = vmatprep.subr.mxu0 0.0
    %3349 = vmatpush1.msra.mxu0 0.0
    %3350 = vmatprep.subr.mxu0 0.0
    %3351 = vmatpush1.msra.mxu0 0.0
    %3352 = vmatprep.subr.mxu0 0.0
    %3353 = vmatpush1.msra.mxu0 0.0
    %3354 = vmatprep.subr.mxu0 0.0
    %3355 = vmatpush1.msra.mxu0 0.0
    %3356 = vmatprep.subr.mxu0 0.0
    %3357 = vmatpush1.msra.mxu0 0.0
    %3358 = vmatprep.subr.mxu0 0.0
    %3359 = vmatpush1.msra.mxu0 0.0
    %3360 = vmatprep.subr.mxu0 0.0
    %3361 = vmatpush1.msra.mxu0 0.0
    %3362 = vmatprep.subr.mxu0 0.0
    %3363 = vmatpush1.msra.mxu0 0.0
    %3364 = vmatprep.mubr.f32.mxu0 0.0
    %v3365 = vand.u32 %v3293, 4294901760
    %v3366 = vsub.f32 %v3293, %v3365
    %v3367 = vand.u32 %v3366, 4294901760
    %v3368 = vsub.f32 %v3366, %v3367
    %v3369 = vand.u32 %v3368, 4294901760
    %3370 = vmatmul.mubr.f32.gmra.mrb[0].mxu0 %v3369
    %v3371 = vpop.f32.mrb[0].mxu0
    %v3372 = vadd.f32 0.0, %v3371
    %v3373 = vpop.f32.mrb[0].mxu0
    %3374 = vmatprep.mubr.f32.mxu0 0.0
    %v3375 = vand.u32 %v3296, 4294901760
    %v3376 = vsub.f32 %v3296, %v3375
    %v3377 = vand.u32 %v3376, 4294901760
    %v3378 = vsub.f32 %v3376, %v3377
    %v3379 = vand.u32 %v3378, 4294901760
    %3380 = vmatmul.mubr.f32.gmra.mrb[0].mxu0 %v3379
    %v3381 = vpop.f32.mrb[0].mxu0
    %v3382 = vadd.f32 0.0, %v3381
    %v3383 = vpop.f32.mrb[0].mxu0
    %3384 = vdwg.mxu0
    %3385 = vmatprep.subr.mxu0 0.0
    %v3386 = vand.u32 %v3287, 4294901760
    %v3387 = vsub.f32 %v3287, %v3386
    %v3388 = vand.u32 %v3387, 4294901760
    %v3389 = vsub.f32 %v3387, %v3388
    %v3390 = vand.u32 %v3389, 4294901760
    %3391 = vmatpush1.msra.mxu0 %v3390
    %3392 = vmatprep.subr.mxu0 0.0
    %v3393 = vand.u32 %v3289, 4294901760
    %v3394 = vsub.f32 %v3289, %v3393
    %v3395 = vand.u32 %v3394, 4294901760
    %v3396 = vsub.f32 %v3394, %v3395
    %v3397 = vand.u32 %v3396, 4294901760
    %3398 = vmatpush1.msra.mxu0 %v3397
    %3399 = vmatprep.subr.mxu0 0.0
    %3400 = vmatpush1.msra.mxu0 0.0
    %3401 = vmatprep.subr.mxu0 0.0
    %3402 = vmatpush1.msra.mxu0 0.0
    %3403 = vmatprep.subr.mxu0 0.0
    %3404 = vmatpush1.msra.mxu0 0.0
    %3405 = vmatprep.subr.mxu0 0.0
    %3406 = vmatpush1.msra.mxu0 0.0
    %3407 = vmatprep.subr.mxu0 0.0
    %3408 = vmatpush1.msra.mxu0 0.0
    %3409 = vmatprep.subr.mxu0 0.0
    %3410 = vmatpush1.msra.mxu0 0.0
    %3411 = vmatprep.subr.mxu0 0.0
    %3412 = vmatpush1.msra.mxu0 0.0
    %3413 = vmatprep.subr.mxu0 0.0
    %3414 = vmatpush1.msra.mxu0 0.0
    %3415 = vmatprep.subr.mxu0 0.0
    %3416 = vmatpush1.msra.mxu0 0.0
    %3417 = vmatprep.subr.mxu0 0.0
    %3418 = vmatpush1.msra.mxu0 0.0
    %3419 = vmatprep.subr.mxu0 0.0
    %3420 = vmatpush1.msra.mxu0 0.0
    %3421 = vmatprep.subr.mxu0 0.0
    %3422 = vmatpush1.msra.mxu0 0.0
    %3423 = vmatprep.subr.mxu0 0.0
    %3424 = vmatpush1.msra.mxu0 0.0
    %3425 = vmatprep.subr.mxu0 0.0
    %3426 = vmatpush1.msra.mxu0 0.0
    %3427 = vmatprep.subr.mxu0 0.0
    %3428 = vmatpush1.msra.mxu0 0.0
    %3429 = vmatprep.subr.mxu0 0.0
    %3430 = vmatpush1.msra.mxu0 0.0
    %3431 = vmatprep.subr.mxu0 0.0
    %3432 = vmatpush1.msra.mxu0 0.0
    %3433 = vmatprep.subr.mxu0 0.0
    %3434 = vmatpush1.msra.mxu0 0.0
    %3435 = vmatprep.subr.mxu0 0.0
    %3436 = vmatpush1.msra.mxu0 0.0
    %3437 = vmatprep.subr.mxu0 0.0
    %3438 = vmatpush1.msra.mxu0 0.0
    %3439 = vmatprep.subr.mxu0 0.0
    %3440 = vmatpush1.msra.mxu0 0.0
    %3441 = vmatprep.subr.mxu0 0.0
    %3442 = vmatpush1.msra.mxu0 0.0
    %3443 = vmatprep.subr.mxu0 0.0
    %3444 = vmatpush1.msra.mxu0 0.0
    %3445 = vmatprep.subr.mxu0 0.0
    %3446 = vmatpush1.msra.mxu0 0.0
    %3447 = vmatprep.subr.mxu0 0.0
    %3448 = vmatpush1.msra.mxu0 0.0
    %3449 = vmatprep.subr.mxu0 0.0
    %3450 = vmatpush1.msra.mxu0 0.0
    %3451 = vmatprep.subr.mxu0 0.0
    %3452 = vmatpush1.msra.mxu0 0.0
    %3453 = vmatprep.subr.mxu0 0.0
    %3454 = vmatpush1.msra.mxu0 0.0
    %3455 = vmatprep.subr.mxu0 0.0
    %3456 = vmatpush1.msra.mxu0 0.0
    %3457 = vmatprep.subr.mxu0 0.0
    %3458 = vmatpush1.msra.mxu0 0.0
    %3459 = vmatprep.mubr.f32.mxu0 0.0
    %v3460 = vand.u32 %v3293, 4294901760
    %3461 = vmatmul.mubr.f32.gmra.mrb[0].mxu0 %v3460
    %v3462 = vpop.f32.mrb[0].mxu0
    %v3463 = vadd.f32 %v3372, %v3462
    %v3464 = vpop.f32.mrb[0].mxu0
    %3465 = vmatprep.mubr.f32.mxu0 0.0
    %v3466 = vand.u32 %v3296, 4294901760
    %3467 = vmatmul.mubr.f32.gmra.mrb[0].mxu0 %v3466
    %v3468 = vpop.f32.mrb[0].mxu0
    %v3469 = vadd.f32 %v3382, %v3468
    %v3470 = vpop.f32.mrb[0].mxu0
    %3471 = vdwg.mxu0
    %3472 = vmatprep.subr.mxu0 0.0
    %v3473 = vand.u32 %v3287, 4294901760
    %v3474 = vsub.f32 %v3287, %v3473
    %3475 = vmatpush1.msra.mxu0 %v3474
    %3476 = vmatprep.subr.mxu0 0.0
    %v3477 = vand.u32 %v3289, 4294901760
    %v3478 = vsub.f32 %v3289, %v3477
    %3479 = vmatpush1.msra.mxu0 %v3478
    %3480 = vmatprep.subr.mxu0 0.0
    %3481 = vmatpush1.msra.mxu0 0.0
    %3482 = vmatprep.subr.mxu0 0.0
    %3483 = vmatpush1.msra.mxu0 0.0
    %3484 = vmatprep.subr.mxu0 0.0
    %3485 = vmatpush1.msra.mxu0 0.0
    %3486 = vmatprep.subr.mxu0 0.0
    %3487 = vmatpush1.msra.mxu0 0.0
    %3488 = vmatprep.subr.mxu0 0.0
    %3489 = vmatpush1.msra.mxu0 0.0
    %3490 = vmatprep.subr.mxu0 0.0
    %3491 = vmatpush1.msra.mxu0 0.0
    %3492 = vmatprep.subr.mxu0 0.0
    %3493 = vmatpush1.msra.mxu0 0.0
    %3494 = vmatprep.subr.mxu0 0.0
    %3495 = vmatpush1.msra.mxu0 0.0
    %3496 = vmatprep.subr.mxu0 0.0
    %3497 = vmatpush1.msra.mxu0 0.0
    %3498 = vmatprep.subr.mxu0 0.0
    %3499 = vmatpush1.msra.mxu0 0.0
    %3500 = vmatprep.subr.mxu0 0.0
    %3501 = vmatpush1.msra.mxu0 0.0
    %3502 = vmatprep.subr.mxu0 0.0
    %3503 = vmatpush1.msra.mxu0 0.0
    %3504 = vmatprep.subr.mxu0 0.0
    %3505 = vmatpush1.msra.mxu0 0.0
    %3506 = vmatprep.subr.mxu0 0.0
    %3507 = vmatpush1.msra.mxu0 0.0
    %3508 = vmatprep.subr.mxu0 0.0
    %3509 = vmatpush1.msra.mxu0 0.0
    %3510 = vmatprep.subr.mxu0 0.0
    %3511 = vmatpush1.msra.mxu0 0.0
    %3512 = vmatprep.subr.mxu0 0.0
    %3513 = vmatpush1.msra.mxu0 0.0
    %3514 = vmatprep.subr.mxu0 0.0
    %3515 = vmatpush1.msra.mxu0 0.0
    %3516 = vmatprep.subr.mxu0 0.0
    %3517 = vmatpush1.msra.mxu0 0.0
    %3518 = vmatprep.subr.mxu0 0.0
    %3519 = vmatpush1.msra.mxu0 0.0
    %3520 = vmatprep.subr.mxu0 0.0
    %3521 = vmatpush1.msra.mxu0 0.0
    %3522 = vmatprep.subr.mxu0 0.0
    %3523 = vmatpush1.msra.mxu0 0.0
    %3524 = vmatprep.subr.mxu0 0.0
    %3525 = vmatpush1.msra.mxu0 0.0
    %3526 = vmatprep.subr.mxu0 0.0
    %3527 = vmatpush1.msra.mxu0 0.0
    %3528 = vmatprep.subr.mxu0 0.0
    %3529 = vmatpush1.msra.mxu0 0.0
    %3530 = vmatprep.subr.mxu0 0.0
    %3531 = vmatpush1.msra.mxu0 0.0
    %3532 = vmatprep.subr.mxu0 0.0
    %3533 = vmatpush1.msra.mxu0 0.0
    %3534 = vmatprep.subr.mxu0 0.0
    %3535 = vmatpush1.msra.mxu0 0.0
    %3536 = vmatprep.subr.mxu0 0.0
    %3537 = vmatpush1.msra.mxu0 0.0
    %3538 = vmatprep.subr.mxu0 0.0
    %3539 = vmatpush1.msra.mxu0 0.0
    %3540 = vmatprep.mubr.f32.mxu0 0.0
    %v3541 = vand.u32 %v3293, 4294901760
    %v3542 = vsub.f32 %v3293, %v3541
    %3543 = vmatmul.mubr.f32.gmra.mrb[0].mxu0 %v3542
    %v3544 = vpop.f32.mrb[0].mxu0
    %v3545 = vadd.f32 %v3463, %v3544
    %v3546 = vpop.f32.mrb[0].mxu0
    %3547 = vmatprep.mubr.f32.mxu0 0.0
    %v3548 = vand.u32 %v3296, 4294901760
    %v3549 = vsub.f32 %v3296, %v3548
    %3550 = vmatmul.mubr.f32.gmra.mrb[0].mxu0 %v3549
    %v3551 = vpop.f32.mrb[0].mxu0
    %v3552 = vadd.f32 %v3469, %v3551
    %v3553 = vpop.f32.mrb[0].mxu0
    %3554 = vdwg.mxu0
    %3555 = vmatprep.subr.mxu0 0.0
    %v3556 = vand.u32 %v3287, 4294901760
    %3557 = vmatpush1.msra.mxu0 %v3556
    %3558 = vmatprep.subr.mxu0 0.0
    %v3559 = vand.u32 %v3289, 4294901760
    %3560 = vmatpush1.msra.mxu0 %v3559
    %3561 = vmatprep.subr.mxu0 0.0
    %3562 = vmatpush1.msra.mxu0 0.0
    %3563 = vmatprep.subr.mxu0 0.0
    %3564 = vmatpush1.msra.mxu0 0.0
    %3565 = vmatprep.subr.mxu0 0.0
    %3566 = vmatpush1.msra.mxu0 0.0
    %3567 = vmatprep.subr.mxu0 0.0
    %3568 = vmatpush1.msra.mxu0 0.0
    %3569 = vmatprep.subr.mxu0 0.0
    %3570 = vmatpush1.msra.mxu0 0.0
    %3571 = vmatprep.subr.mxu0 0.0
    %3572 = vmatpush1.msra.mxu0 0.0
    %3573 = vmatprep.subr.mxu0 0.0
    %3574 = vmatpush1.msra.mxu0 0.0
    %3575 = vmatprep.subr.mxu0 0.0
    %3576 = vmatpush1.msra.mxu0 0.0
    %3577 = vmatprep.subr.mxu0 0.0
    %3578 = vmatpush1.msra.mxu0 0.0
    %3579 = vmatprep.subr.mxu0 0.0
    %3580 = vmatpush1.msra.mxu0 0.0
    %3581 = vmatprep.subr.mxu0 0.0
    %3582 = vmatpush1.msra.mxu0 0.0
    %3583 = vmatprep.subr.mxu0 0.0
    %3584 = vmatpush1.msra.mxu0 0.0
    %3585 = vmatprep.subr.mxu0 0.0
    %3586 = vmatpush1.msra.mxu0 0.0
    %3587 = vmatprep.subr.mxu0 0.0
    %3588 = vmatpush1.msra.mxu0 0.0
    %3589 = vmatprep.subr.mxu0 0.0
    %3590 = vmatpush1.msra.mxu0 0.0
    %3591 = vmatprep.subr.mxu0 0.0
    %3592 = vmatpush1.msra.mxu0 0.0
    %3593 = vmatprep.subr.mxu0 0.0
    %3594 = vmatpush1.msra.mxu0 0.0
    %3595 = vmatprep.subr.mxu0 0.0
    %3596 = vmatpush1.msra.mxu0 0.0
    %3597 = vmatprep.subr.mxu0 0.0
    %3598 = vmatpush1.msra.mxu0 0.0
    %3599 = vmatprep.subr.mxu0 0.0
    %3600 = vmatpush1.msra.mxu0 0.0
    %3601 = vmatprep.subr.mxu0 0.0
    %3602 = vmatpush1.msra.mxu0 0.0
    %3603 = vmatprep.subr.mxu0 0.0
    %3604 = vmatpush1.msra.mxu0 0.0
    %3605 = vmatprep.subr.mxu0 0.0
    %3606 = vmatpush1.msra.mxu0 0.0
    %3607 = vmatprep.subr.mxu0 0.0
    %3608 = vmatpush1.msra.mxu0 0.0
    %3609 = vmatprep.subr.mxu0 0.0
    %3610 = vmatpush1.msra.mxu0 0.0
    %3611 = vmatprep.subr.mxu0 0.0
    %3612 = vmatpush1.msra.mxu0 0.0
    %3613 = vmatprep.subr.mxu0 0.0
    %3614 = vmatpush1.msra.mxu0 0.0
    %3615 = vmatprep.subr.mxu0 0.0
    %3616 = vmatpush1.msra.mxu0 0.0
    %3617 = vmatprep.subr.mxu0 0.0
    %3618 = vmatpush1.msra.mxu0 0.0
    %3619 = vmatprep.subr.mxu0 0.0
    %3620 = vmatpush1.msra.mxu0 0.0
    %3621 = vmatprep.mubr.f32.mxu0 0.0
    %v3622 = vand.u32 %v3293, 4294901760
    %v3623 = vsub.f32 %v3293, %v3622
    %v3624 = vand.u32 %v3623, 4294901760
    %3625 = vmatmul.mubr.f32.gmra.mrb[0].mxu0 %v3624
    %v3626 = vpop.f32.mrb[0].mxu0
    %v3627 = vadd.f32 %v3545, %v3626
    %v3628 = vpop.f32.mrb[0].mxu0
    %3629 = vmatprep.mubr.f32.mxu0 0.0
    %v3630 = vand.u32 %v3296, 4294901760
    %v3631 = vsub.f32 %v3296, %v3630
    %v3632 = vand.u32 %v3631, 4294901760
    %3633 = vmatmul.mubr.f32.gmra.mrb[0].mxu0 %v3632
    %v3634 = vpop.f32.mrb[0].mxu0
    %v3635 = vadd.f32 %v3552, %v3634
    %v3636 = vpop.f32.mrb[0].mxu0
    %3637 = vdwg.mxu0
    %3638 = vmatprep.subr.mxu0 0.0
    %v3639 = vand.u32 %v3287, 4294901760
    %v3640 = vsub.f32 %v3287, %v3639
    %v3641 = vand.u32 %v3640, 4294901760
    %3642 = vmatpush1.msra.mxu0 %v3641
    %3643 = vmatprep.subr.mxu0 0.0
    %v3644 = vand.u32 %v3289, 4294901760
    %v3645 = vsub.f32 %v3289, %v3644
    %v3646 = vand.u32 %v3645, 4294901760
    %3647 = vmatpush1.msra.mxu0 %v3646
    %3648 = vmatprep.subr.mxu0 0.0
    %3649 = vmatpush1.msra.mxu0 0.0
    %3650 = vmatprep.subr.mxu0 0.0
    %3651 = vmatpush1.msra.mxu0 0.0
    %3652 = vmatprep.subr.mxu0 0.0
    %3653 = vmatpush1.msra.mxu0 0.0
    %3654 = vmatprep.subr.mxu0 0.0
    %3655 = vmatpush1.msra.mxu0 0.0
    %3656 = vmatprep.subr.mxu0 0.0
    %3657 = vmatpush1.msra.mxu0 0.0
    %3658 = vmatprep.subr.mxu0 0.0
    %3659 = vmatpush1.msra.mxu0 0.0
    %3660 = vmatprep.subr.mxu0 0.0
    %3661 = vmatpush1.msra.mxu0 0.0
    %3662 = vmatprep.subr.mxu0 0.0
    %3663 = vmatpush1.msra.mxu0 0.0
    %3664 = vmatprep.subr.mxu0 0.0
    %3665 = vmatpush1.msra.mxu0 0.0
    %3666 = vmatprep.subr.mxu0 0.0
    %3667 = vmatpush1.msra.mxu0 0.0
    %3668 = vmatprep.subr.mxu0 0.0
    %3669 = vmatpush1.msra.mxu0 0.0
    %3670 = vmatprep.subr.mxu0 0.0
    %3671 = vmatpush1.msra.mxu0 0.0
    %3672 = vmatprep.subr.mxu0 0.0
    %3673 = vmatpush1.msra.mxu0 0.0
    %3674 = vmatprep.subr.mxu0 0.0
    %3675 = vmatpush1.msra.mxu0 0.0
    %3676 = vmatprep.subr.mxu0 0.0
    %3677 = vmatpush1.msra.mxu0 0.0
    %3678 = vmatprep.subr.mxu0 0.0
    %3679 = vmatpush1.msra.mxu0 0.0
    %3680 = vmatprep.subr.mxu0 0.0
    %3681 = vmatpush1.msra.mxu0 0.0
    %3682 = vmatprep.subr.mxu0 0.0
    %3683 = vmatpush1.msra.mxu0 0.0
    %3684 = vmatprep.subr.mxu0 0.0
    %3685 = vmatpush1.msra.mxu0 0.0
    %3686 = vmatprep.subr.mxu0 0.0
    %3687 = vmatpush1.msra.mxu0 0.0
    %3688 = vmatprep.subr.mxu0 0.0
    %3689 = vmatpush1.msra.mxu0 0.0
    %3690 = vmatprep.subr.mxu0 0.0
    %3691 = vmatpush1.msra.mxu0 0.0
    %3692 = vmatprep.subr.mxu0 0.0
    %3693 = vmatpush1.msra.mxu0 0.0
    %3694 = vmatprep.subr.mxu0 0.0
    %3695 = vmatpush1.msra.mxu0 0.0
    %3696 = vmatprep.subr.mxu0 0.0
    %3697 = vmatpush1.msra.mxu0 0.0
    %3698 = vmatprep.subr.mxu0 0.0
    %3699 = vmatpush1.msra.mxu0 0.0
    %3700 = vmatprep.subr.mxu0 0.0
    %3701 = vmatpush1.msra.mxu0 0.0
    %3702 = vmatprep.subr.mxu0 0.0
    %3703 = vmatpush1.msra.mxu0 0.0
    %3704 = vmatprep.subr.mxu0 0.0
    %3705 = vmatpush1.msra.mxu0 0.0
    %3706 = vmatprep.subr.mxu0 0.0
    %3707 = vmatpush1.msra.mxu0 0.0
    %3708 = vmatprep.mubr.f32.mxu0 0.0
    %v3709 = vand.u32 %v3293, 4294901760
    %3710 = vmatmul.mubr.f32.gmra.mrb[0].mxu0 %v3709
    %v3711 = vpop.f32.mrb[0].mxu0
    %v3712 = vadd.f32 %v3627, %v3711
    %v3713 = vpop.f32.mrb[0].mxu0
    %3714 = vmatprep.mubr.f32.mxu0 0.0
    %v3715 = vand.u32 %v3296, 4294901760
    %3716 = vmatmul.mubr.f32.gmra.mrb[0].mxu0 %v3715
    %v3717 = vpop.f32.mrb[0].mxu0
    %v3718 = vadd.f32 %v3635, %v3717
    %v3719 = vpop.f32.mrb[0].mxu0
    %3720 = vdwg.mxu0
    %3721 = vmatprep.subr.mxu0 0.0
    %v3722 = vand.u32 %v3287, 4294901760
    %3723 = vmatpush1.msra.mxu0 %v3722
    %3724 = vmatprep.subr.mxu0 0.0
    %v3725 = vand.u32 %v3289, 4294901760
    %3726 = vmatpush1.msra.mxu0 %v3725
    %3727 = vmatprep.subr.mxu0 0.0
    %3728 = vmatpush1.msra.mxu0 0.0
    %3729 = vmatprep.subr.mxu0 0.0
    %3730 = vmatpush1.msra.mxu0 0.0
    %3731 = vmatprep.subr.mxu0 0.0
    %3732 = vmatpush1.msra.mxu0 0.0
    %3733 = vmatprep.subr.mxu0 0.0
    %3734 = vmatpush1.msra.mxu0 0.0
    %3735 = vmatprep.subr.mxu0 0.0
    %3736 = vmatpush1.msra.mxu0 0.0
    %3737 = vmatprep.subr.mxu0 0.0
    %3738 = vmatpush1.msra.mxu0 0.0
    %3739 = vmatprep.subr.mxu0 0.0
    %3740 = vmatpush1.msra.mxu0 0.0
    %3741 = vmatprep.subr.mxu0 0.0
    %3742 = vmatpush1.msra.mxu0 0.0
    %3743 = vmatprep.subr.mxu0 0.0
    %3744 = vmatpush1.msra.mxu0 0.0
    %3745 = vmatprep.subr.mxu0 0.0
    %3746 = vmatpush1.msra.mxu0 0.0
    %3747 = vmatprep.subr.mxu0 0.0
    %3748 = vmatpush1.msra.mxu0 0.0
    %3749 = vmatprep.subr.mxu0 0.0
    %3750 = vmatpush1.msra.mxu0 0.0
    %3751 = vmatprep.subr.mxu0 0.0
    %3752 = vmatpush1.msra.mxu0 0.0
    %3753 = vmatprep.subr.mxu0 0.0
    %3754 = vmatpush1.msra.mxu0 0.0
    %3755 = vmatprep.subr.mxu0 0.0
    %3756 = vmatpush1.msra.mxu0 0.0
    %3757 = vmatprep.subr.mxu0 0.0
    %3758 = vmatpush1.msra.mxu0 0.0
    %3759 = vmatprep.subr.mxu0 0.0
    %3760 = vmatpush1.msra.mxu0 0.0
    %3761 = vmatprep.subr.mxu0 0.0
    %3762 = vmatpush1.msra.mxu0 0.0
    %3763 = vmatprep.subr.mxu0 0.0
    %3764 = vmatpush1.msra.mxu0 0.0
    %3765 = vmatprep.subr.mxu0 0.0
    %3766 = vmatpush1.msra.mxu0 0.0
    %3767 = vmatprep.subr.mxu0 0.0
    %3768 = vmatpush1.msra.mxu0 0.0
    %3769 = vmatprep.subr.mxu0 0.0
    %3770 = vmatpush1.msra.mxu0 0.0
    %3771 = vmatprep.subr.mxu0 0.0
    %3772 = vmatpush1.msra.mxu0 0.0
    %3773 = vmatprep.subr.mxu0 0.0
    %3774 = vmatpush1.msra.mxu0 0.0
    %3775 = vmatprep.subr.mxu0 0.0
    %3776 = vmatpush1.msra.mxu0 0.0
    %3777 = vmatprep.subr.mxu0 0.0
    %3778 = vmatpush1.msra.mxu0 0.0
    %3779 = vmatprep.subr.mxu0 0.0
    %3780 = vmatpush1.msra.mxu0 0.0
    %3781 = vmatprep.subr.mxu0 0.0
    %3782 = vmatpush1.msra.mxu0 0.0
    %3783 = vmatprep.subr.mxu0 0.0
    %3784 = vmatpush1.msra.mxu0 0.0
    %3785 = vmatprep.subr.mxu0 0.0
    %3786 = vmatpush1.msra.mxu0 0.0
    %3787 = vmatprep.mubr.f32.mxu0 0.0
    %v3788 = vand.u32 %v3293, 4294901760
    %3789 = vmatmul.mubr.f32.gmra.mrb[0].mxu0 %v3788
    %v3790 = vpop.f32.mrb[0].mxu0
    %v3791 = vadd.f32 %v3712, %v3790
    %v3792 = vpop.f32.mrb[0].mxu0
    %3793 = vmatprep.mubr.f32.mxu0 0.0
    %v3794 = vand.u32 %v3296, 4294901760
    %3795 = vmatmul.mubr.f32.gmra.mrb[0].mxu0 %v3794
    %v3796 = vpop.f32.mrb[0].mxu0
    %v3797 = vadd.f32 %v3718, %v3796
    %v3798 = vpop.f32.mrb[0].mxu0
    %3799 = vdwg.mxu0
    %3800 = vrot.lane.b32.xlu0 %v636, 116
    %v3801 = vpop.permute.xlu0 %3800
    %3802 = vrot.lane.b32.xlu0 %v637, 116
    %v3803 = vpop.permute.xlu0 %3802
    %3804 = vrot.lane.b32.xlu0 %v636, 100
    %v3805 = vpop.permute.xlu0 %3804
    %3806 = vrot.lane.b32.xlu0 %v637, 100
    %v3807 = vpop.permute.xlu0 %3806
    %v3808 = vsel %vm644, %v3801, 0
    %v3810 = vsel %vm644, %v3803, 0
    %v3812 = vsel %vm644, %v3805, 0
    %v3814 = vsel %vm644, %v3807, 0
    %3816 = vmatprep.subr.mxu0 0.0
    %v3817 = vand.u32 %v3812, 4294901760
    %3818 = vmatpush1.xpose.msra.mxu0 %v3817
    %3819 = vmatprep.subr.mxu0 0.0
    %v3820 = vand.u32 %v3814, 4294901760
    %3821 = vmatpush1.xpose.msra.mxu0 %v3820
    %3822 = vmatprep.subr.mxu0 0.0
    %3823 = vmatpush1.xpose.msra.mxu0 0.0
    %3824 = vmatprep.subr.mxu0 0.0
    %3825 = vmatpush1.xpose.msra.mxu0 0.0
    %3826 = vmatprep.subr.mxu0 0.0
    %3827 = vmatpush1.xpose.msra.mxu0 0.0
    %3828 = vmatprep.subr.mxu0 0.0
    %3829 = vmatpush1.xpose.msra.mxu0 0.0
    %3830 = vmatprep.subr.mxu0 0.0
    %3831 = vmatpush1.xpose.msra.mxu0 0.0
    %3832 = vmatprep.subr.mxu0 0.0
    %3833 = vmatpush1.xpose.msra.mxu0 0.0
    %3834 = vmatprep.subr.mxu0 0.0
    %3835 = vmatpush1.xpose.msra.mxu0 0.0
    %3836 = vmatprep.subr.mxu0 0.0
    %3837 = vmatpush1.xpose.msra.mxu0 0.0
    %3838 = vmatprep.subr.mxu0 0.0
    %3839 = vmatpush1.xpose.msra.mxu0 0.0
    %3840 = vmatprep.subr.mxu0 0.0
    %3841 = vmatpush1.xpose.msra.mxu0 0.0
    %3842 = vmatprep.subr.mxu0 0.0
    %3843 = vmatpush1.xpose.msra.mxu0 0.0
    %3844 = vmatprep.subr.mxu0 0.0
    %3845 = vmatpush1.xpose.msra.mxu0 0.0
    %3846 = vmatprep.subr.mxu0 0.0
    %3847 = vmatpush1.xpose.msra.mxu0 0.0
    %3848 = vmatprep.subr.mxu0 0.0
    %3849 = vmatpush1.xpose.msra.mxu0 0.0
    %3850 = vmatprep.subr.mxu0 0.0
    %3851 = vmatpush1.xpose.msra.mxu0 0.0
    %3852 = vmatprep.subr.mxu0 0.0
    %3853 = vmatpush1.xpose.msra.mxu0 0.0
    %3854 = vmatprep.subr.mxu0 0.0
    %3855 = vmatpush1.xpose.msra.mxu0 0.0
    %3856 = vmatprep.subr.mxu0 0.0
    %3857 = vmatpush1.xpose.msra.mxu0 0.0
    %3858 = vmatprep.subr.mxu0 0.0
    %3859 = vmatpush1.xpose.msra.mxu0 0.0
    %3860 = vmatprep.subr.mxu0 0.0
    %3861 = vmatpush1.xpose.msra.mxu0 0.0
    %3862 = vmatprep.subr.mxu0 0.0
    %3863 = vmatpush1.xpose.msra.mxu0 0.0
    %3864 = vmatprep.subr.mxu0 0.0
    %3865 = vmatpush1.xpose.msra.mxu0 0.0
    %3866 = vmatprep.subr.mxu0 0.0
    %3867 = vmatpush1.xpose.msra.mxu0 0.0
    %3868 = vmatprep.subr.mxu0 0.0
    %3869 = vmatpush1.xpose.msra.mxu0 0.0
    %3870 = vmatprep.subr.mxu0 0.0
    %3871 = vmatpush1.xpose.msra.mxu0 0.0
    %3872 = vmatprep.subr.mxu0 0.0
    %3873 = vmatpush1.xpose.msra.mxu0 0.0
    %3874 = vmatprep.subr.mxu0 0.0
    %3875 = vmatpush1.xpose.msra.mxu0 0.0
    %3876 = vmatprep.subr.mxu0 0.0
    %3877 = vmatpush1.xpose.msra.mxu0 0.0
    %3878 = vmatprep.subr.mxu0 0.0
    %3879 = vmatpush1.xpose.msra.mxu0 0.0
    %3880 = vmatprep.subr.mxu0 0.0
    %3881 = vmatpush1.xpose.msra.mxu0 0.0
    %3882 = vmatprep.mubr.f32.mxu0 0.0
    %v3883 = vand.u32 %v3808, 4294901760
    %v3884 = vsub.f32 %v3808, %v3883
    %v3885 = vand.u32 %v3884, 4294901760
    %v3886 = vsub.f32 %v3884, %v3885
    %v3887 = vand.u32 %v3886, 4294901760
    %3888 = vmatmul.mubr.f32.gmra.mrb[0].mxu0 %v3887
    %v3889 = vpop.f32.mrb[0].mxu0
    %v3890 = vadd.f32 %v30, %v3889
    %v3891 = vpop.f32.mrb[0].mxu0
    %3892 = vmatprep.mubr.f32.mxu0 0.0
    %v3893 = vand.u32 %v3810, 4294901760
    %v3894 = vsub.f32 %v3810, %v3893
    %v3895 = vand.u32 %v3894, 4294901760
    %v3896 = vsub.f32 %v3894, %v3895
    %v3897 = vand.u32 %v3896, 4294901760
    %3898 = vmatmul.mubr.f32.gmra.mrb[0].mxu0 %v3897
    %v3899 = vpop.f32.mrb[0].mxu0
    %v3900 = vadd.f32 %v31, %v3899
    %v3901 = vpop.f32.mrb[0].mxu0
    %3902 = vdwg.mxu0
    %3903 = vmatprep.subr.mxu0 0.0
    %v3904 = vand.u32 %v3812, 4294901760
    %v3905 = vsub.f32 %v3812, %v3904
    %v3906 = vand.u32 %v3905, 4294901760
    %v3907 = vsub.f32 %v3905, %v3906
    %v3908 = vand.u32 %v3907, 4294901760
    %3909 = vmatpush1.xpose.msra.mxu0 %v3908
    %3910 = vmatprep.subr.mxu0 0.0
    %v3911 = vand.u32 %v3814, 4294901760
    %v3912 = vsub.f32 %v3814, %v3911
    %v3913 = vand.u32 %v3912, 4294901760
    %v3914 = vsub.f32 %v3912, %v3913
    %v3915 = vand.u32 %v3914, 4294901760
    %3916 = vmatpush1.xpose.msra.mxu0 %v3915
    %3917 = vmatprep.subr.mxu0 0.0
    %3918 = vmatpush1.xpose.msra.mxu0 0.0
    %3919 = vmatprep.subr.mxu0 0.0
    %3920 = vmatpush1.xpose.msra.mxu0 0.0
    %3921 = vmatprep.subr.mxu0 0.0
    %3922 = vmatpush1.xpose.msra.mxu0 0.0
    %3923 = vmatprep.subr.mxu0 0.0
    %3924 = vmatpush1.xpose.msra.mxu0 0.0
    %3925 = vmatprep.subr.mxu0 0.0
    %3926 = vmatpush1.xpose.msra.mxu0 0.0
    %3927 = vmatprep.subr.mxu0 0.0
    %3928 = vmatpush1.xpose.msra.mxu0 0.0
    %3929 = vmatprep.subr.mxu0 0.0
    %3930 = vmatpush1.xpose.msra.mxu0 0.0
    %3931 = vmatprep.subr.mxu0 0.0
    %3932 = vmatpush1.xpose.msra.mxu0 0.0
    %3933 = vmatprep.subr.mxu0 0.0
    %3934 = vmatpush1.xpose.msra.mxu0 0.0
    %3935 = vmatprep.subr.mxu0 0.0
    %3936 = vmatpush1.xpose.msra.mxu0 0.0
    %3937 = vmatprep.subr.mxu0 0.0
    %3938 = vmatpush1.xpose.msra.mxu0 0.0
    %3939 = vmatprep.subr.mxu0 0.0
    %3940 = vmatpush1.xpose.msra.mxu0 0.0
    %3941 = vmatprep.subr.mxu0 0.0
    %3942 = vmatpush1.xpose.msra.mxu0 0.0
    %3943 = vmatprep.subr.mxu0 0.0
    %3944 = vmatpush1.xpose.msra.mxu0 0.0
    %3945 = vmatprep.subr.mxu0 0.0
    %3946 = vmatpush1.xpose.msra.mxu0 0.0
    %3947 = vmatprep.subr.mxu0 0.0
    %3948 = vmatpush1.xpose.msra.mxu0 0.0
    %3949 = vmatprep.subr.mxu0 0.0
    %3950 = vmatpush1.xpose.msra.mxu0 0.0
    %3951 = vmatprep.subr.mxu0 0.0
    %3952 = vmatpush1.xpose.msra.mxu0 0.0
    %3953 = vmatprep.subr.mxu0 0.0
    %3954 = vmatpush1.xpose.msra.mxu0 0.0
    %3955 = vmatprep.subr.mxu0 0.0
    %3956 = vmatpush1.xpose.msra.mxu0 0.0
    %3957 = vmatprep.subr.mxu0 0.0
    %3958 = vmatpush1.xpose.msra.mxu0 0.0
    %3959 = vmatprep.subr.mxu0 0.0
    %3960 = vmatpush1.xpose.msra.mxu0 0.0
    %3961 = vmatprep.subr.mxu0 0.0
    %3962 = vmatpush1.xpose.msra.mxu0 0.0
    %3963 = vmatprep.subr.mxu0 0.0
    %3964 = vmatpush1.xpose.msra.mxu0 0.0
    %3965 = vmatprep.subr.mxu0 0.0
    %3966 = vmatpush1.xpose.msra.mxu0 0.0
    %3967 = vmatprep.subr.mxu0 0.0
    %3968 = vmatpush1.xpose.msra.mxu0 0.0
    %3969 = vmatprep.subr.mxu0 0.0
    %3970 = vmatpush1.xpose.msra.mxu0 0.0
    %3971 = vmatprep.subr.mxu0 0.0
    %3972 = vmatpush1.xpose.msra.mxu0 0.0
    %3973 = vmatprep.subr.mxu0 0.0
    %3974 = vmatpush1.xpose.msra.mxu0 0.0
    %3975 = vmatprep.subr.mxu0 0.0
    %3976 = vmatpush1.xpose.msra.mxu0 0.0
    %3977 = vmatprep.mubr.f32.mxu0 0.0
    %v3978 = vand.u32 %v3808, 4294901760
    %3979 = vmatmul.mubr.f32.gmra.mrb[0].mxu0 %v3978
    %v3980 = vpop.f32.mrb[0].mxu0
    %v3981 = vadd.f32 %v3890, %v3980
    %v3982 = vpop.f32.mrb[0].mxu0
    %3983 = vmatprep.mubr.f32.mxu0 0.0
    %v3984 = vand.u32 %v3810, 4294901760
    %3985 = vmatmul.mubr.f32.gmra.mrb[0].mxu0 %v3984
    %v3986 = vpop.f32.mrb[0].mxu0
    %v3987 = vadd.f32 %v3900, %v3986
    %v3988 = vpop.f32.mrb[0].mxu0
    %3989 = vdwg.mxu0
    %3990 = vmatprep.subr.mxu0 0.0
    %v3991 = vand.u32 %v3812, 4294901760
    %v3992 = vsub.f32 %v3812, %v3991
    %3993 = vmatpush1.xpose.msra.mxu0 %v3992
    %3994 = vmatprep.subr.mxu0 0.0
    %v3995 = vand.u32 %v3814, 4294901760
    %v3996 = vsub.f32 %v3814, %v3995
    %3997 = vmatpush1.xpose.msra.mxu0 %v3996
    %3998 = vmatprep.subr.mxu0 0.0
    %3999 = vmatpush1.xpose.msra.mxu0 0.0
    %4000 = vmatprep.subr.mxu0 0.0
    %4001 = vmatpush1.xpose.msra.mxu0 0.0
    %4002 = vmatprep.subr.mxu0 0.0
    %4003 = vmatpush1.xpose.msra.mxu0 0.0
    %4004 = vmatprep.subr.mxu0 0.0
    %4005 = vmatpush1.xpose.msra.mxu0 0.0
    %4006 = vmatprep.subr.mxu0 0.0
    %4007 = vmatpush1.xpose.msra.mxu0 0.0
    %4008 = vmatprep.subr.mxu0 0.0
    %4009 = vmatpush1.xpose.msra.mxu0 0.0
    %4010 = vmatprep.subr.mxu0 0.0
    %4011 = vmatpush1.xpose.msra.mxu0 0.0
    %4012 = vmatprep.subr.mxu0 0.0
    %4013 = vmatpush1.xpose.msra.mxu0 0.0
    %4014 = vmatprep.subr.mxu0 0.0
    %4015 = vmatpush1.xpose.msra.mxu0 0.0
    %4016 = vmatprep.subr.mxu0 0.0
    %4017 = vmatpush1.xpose.msra.mxu0 0.0
    %4018 = vmatprep.subr.mxu0 0.0
    %4019 = vmatpush1.xpose.msra.mxu0 0.0
    %4020 = vmatprep.subr.mxu0 0.0
    %4021 = vmatpush1.xpose.msra.mxu0 0.0
    %4022 = vmatprep.subr.mxu0 0.0
    %4023 = vmatpush1.xpose.msra.mxu0 0.0
    %4024 = vmatprep.subr.mxu0 0.0
    %4025 = vmatpush1.xpose.msra.mxu0 0.0
    %4026 = vmatprep.subr.mxu0 0.0
    %4027 = vmatpush1.xpose.msra.mxu0 0.0
    %4028 = vmatprep.subr.mxu0 0.0
    %4029 = vmatpush1.xpose.msra.mxu0 0.0
    %4030 = vmatprep.subr.mxu0 0.0
    %4031 = vmatpush1.xpose.msra.mxu0 0.0
    %4032 = vmatprep.subr.mxu0 0.0
    %4033 = vmatpush1.xpose.msra.mxu0 0.0
    %4034 = vmatprep.subr.mxu0 0.0
    %4035 = vmatpush1.xpose.msra.mxu0 0.0
    %4036 = vmatprep.subr.mxu0 0.0
    %4037 = vmatpush1.xpose.msra.mxu0 0.0
    %4038 = vmatprep.subr.mxu0 0.0
    %4039 = vmatpush1.xpose.msra.mxu0 0.0
    %4040 = vmatprep.subr.mxu0 0.0
    %4041 = vmatpush1.xpose.msra.mxu0 0.0
    %4042 = vmatprep.subr.mxu0 0.0
    %4043 = vmatpush1.xpose.msra.mxu0 0.0
    %4044 = vmatprep.subr.mxu0 0.0
    %4045 = vmatpush1.xpose.msra.mxu0 0.0
    %4046 = vmatprep.subr.mxu0 0.0
    %4047 = vmatpush1.xpose.msra.mxu0 0.0
    %4048 = vmatprep.subr.mxu0 0.0
    %4049 = vmatpush1.xpose.msra.mxu0 0.0
    %4050 = vmatprep.subr.mxu0 0.0
    %4051 = vmatpush1.xpose.msra.mxu0 0.0
    %4052 = vmatprep.subr.mxu0 0.0
    %4053 = vmatpush1.xpose.msra.mxu0 0.0
    %4054 = vmatprep.subr.mxu0 0.0
    %4055 = vmatpush1.xpose.msra.mxu0 0.0
    %4056 = vmatprep.subr.mxu0 0.0
    %4057 = vmatpush1.xpose.msra.mxu0 0.0
    %4058 = vmatprep.mubr.f32.mxu0 0.0
    %v4059 = vand.u32 %v3808, 4294901760
    %v4060 = vsub.f32 %v3808, %v4059
    %4061 = vmatmul.mubr.f32.gmra.mrb[0].mxu0 %v4060
    %v4062 = vpop.f32.mrb[0].mxu0
    %v4063 = vadd.f32 %v3981, %v4062
    %v4064 = vpop.f32.mrb[0].mxu0
    %4065 = vmatprep.mubr.f32.mxu0 0.0
    %v4066 = vand.u32 %v3810, 4294901760
    %v4067 = vsub.f32 %v3810, %v4066
    %4068 = vmatmul.mubr.f32.gmra.mrb[0].mxu0 %v4067
    %v4069 = vpop.f32.mrb[0].mxu0
    %v4070 = vadd.f32 %v3987, %v4069
    %v4071 = vpop.f32.mrb[0].mxu0
    %4072 = vdwg.mxu0
    %4073 = vmatprep.subr.mxu0 0.0
    %v4074 = vand.u32 %v3812, 4294901760
    %4075 = vmatpush1.xpose.msra.mxu0 %v4074
    %4076 = vmatprep.subr.mxu0 0.0
    %v4077 = vand.u32 %v3814, 4294901760
    %4078 = vmatpush1.xpose.msra.mxu0 %v4077
    %4079 = vmatprep.subr.mxu0 0.0
    %4080 = vmatpush1.xpose.msra.mxu0 0.0
    %4081 = vmatprep.subr.mxu0 0.0
    %4082 = vmatpush1.xpose.msra.mxu0 0.0
    %4083 = vmatprep.subr.mxu0 0.0
    %4084 = vmatpush1.xpose.msra.mxu0 0.0
    %4085 = vmatprep.subr.mxu0 0.0
    %4086 = vmatpush1.xpose.msra.mxu0 0.0
    %4087 = vmatprep.subr.mxu0 0.0
    %4088 = vmatpush1.xpose.msra.mxu0 0.0
    %4089 = vmatprep.subr.mxu0 0.0
    %4090 = vmatpush1.xpose.msra.mxu0 0.0
    %4091 = vmatprep.subr.mxu0 0.0
    %4092 = vmatpush1.xpose.msra.mxu0 0.0
    %4093 = vmatprep.subr.mxu0 0.0
    %4094 = vmatpush1.xpose.msra.mxu0 0.0
    %4095 = vmatprep.subr.mxu0 0.0
    %4096 = vmatpush1.xpose.msra.mxu0 0.0
    %4097 = vmatprep.subr.mxu0 0.0
    %4098 = vmatpush1.xpose.msra.mxu0 0.0
    %4099 = vmatprep.subr.mxu0 0.0
    %4100 = vmatpush1.xpose.msra.mxu0 0.0
    %4101 = vmatprep.subr.mxu0 0.0
    %4102 = vmatpush1.xpose.msra.mxu0 0.0
    %4103 = vmatprep.subr.mxu0 0.0
    %4104 = vmatpush1.xpose.msra.mxu0 0.0
    %4105 = vmatprep.subr.mxu0 0.0
    %4106 = vmatpush1.xpose.msra.mxu0 0.0
    %4107 = vmatprep.subr.mxu0 0.0
    %4108 = vmatpush1.xpose.msra.mxu0 0.0
    %4109 = vmatprep.subr.mxu0 0.0
    %4110 = vmatpush1.xpose.msra.mxu0 0.0
    %4111 = vmatprep.subr.mxu0 0.0
    %4112 = vmatpush1.xpose.msra.mxu0 0.0
    %4113 = vmatprep.subr.mxu0 0.0
    %4114 = vmatpush1.xpose.msra.mxu0 0.0
    %4115 = vmatprep.subr.mxu0 0.0
    %4116 = vmatpush1.xpose.msra.mxu0 0.0
    %4117 = vmatprep.subr.mxu0 0.0
    %4118 = vmatpush1.xpose.msra.mxu0 0.0
    %4119 = vmatprep.subr.mxu0 0.0
    %4120 = vmatpush1.xpose.msra.mxu0 0.0
    %4121 = vmatprep.subr.mxu0 0.0
    %4122 = vmatpush1.xpose.msra.mxu0 0.0
    %4123 = vmatprep.subr.mxu0 0.0
    %4124 = vmatpush1.xpose.msra.mxu0 0.0
    %4125 = vmatprep.subr.mxu0 0.0
    %4126 = vmatpush1.xpose.msra.mxu0 0.0
    %4127 = vmatprep.subr.mxu0 0.0
    %4128 = vmatpush1.xpose.msra.mxu0 0.0
    %4129 = vmatprep.subr.mxu0 0.0
    %4130 = vmatpush1.xpose.msra.mxu0 0.0
    %4131 = vmatprep.subr.mxu0 0.0
    %4132 = vmatpush1.xpose.msra.mxu0 0.0
    %4133 = vmatprep.subr.mxu0 0.0
    %4134 = vmatpush1.xpose.msra.mxu0 0.0
    %4135 = vmatprep.subr.mxu0 0.0
    %4136 = vmatpush1.xpose.msra.mxu0 0.0
    %4137 = vmatprep.subr.mxu0 0.0
    %4138 = vmatpush1.xpose.msra.mxu0 0.0
    %4139 = vmatprep.mubr.f32.mxu0 0.0
    %v4140 = vand.u32 %v3808, 4294901760
    %v4141 = vsub.f32 %v3808, %v4140
    %v4142 = vand.u32 %v4141, 4294901760
    %4143 = vmatmul.mubr.f32.gmra.mrb[0].mxu0 %v4142
    %v4144 = vpop.f32.mrb[0].mxu0
    %v4145 = vadd.f32 %v4063, %v4144
    %v4146 = vpop.f32.mrb[0].mxu0
    %4147 = vmatprep.mubr.f32.mxu0 0.0
    %v4148 = vand.u32 %v3810, 4294901760
    %v4149 = vsub.f32 %v3810, %v4148
    %v4150 = vand.u32 %v4149, 4294901760
    %4151 = vmatmul.mubr.f32.gmra.mrb[0].mxu0 %v4150
    %v4152 = vpop.f32.mrb[0].mxu0
    %v4153 = vadd.f32 %v4070, %v4152
    %v4154 = vpop.f32.mrb[0].mxu0
    %4155 = vdwg.mxu0
    %4156 = vmatprep.subr.mxu0 0.0
    %v4157 = vand.u32 %v3812, 4294901760
    %v4158 = vsub.f32 %v3812, %v4157
    %v4159 = vand.u32 %v4158, 4294901760
    %4160 = vmatpush1.xpose.msra.mxu0 %v4159
    %4161 = vmatprep.subr.mxu0 0.0
    %v4162 = vand.u32 %v3814, 4294901760
    %v4163 = vsub.f32 %v3814, %v4162
    %v4164 = vand.u32 %v4163, 4294901760
    %4165 = vmatpush1.xpose.msra.mxu0 %v4164
    %4166 = vmatprep.subr.mxu0 0.0
    %4167 = vmatpush1.xpose.msra.mxu0 0.0
    %4168 = vmatprep.subr.mxu0 0.0
    %4169 = vmatpush1.xpose.msra.mxu0 0.0
    %4170 = vmatprep.subr.mxu0 0.0
    %4171 = vmatpush1.xpose.msra.mxu0 0.0
    %4172 = vmatprep.subr.mxu0 0.0
    %4173 = vmatpush1.xpose.msra.mxu0 0.0
    %4174 = vmatprep.subr.mxu0 0.0
    %4175 = vmatpush1.xpose.msra.mxu0 0.0
    %4176 = vmatprep.subr.mxu0 0.0
    %4177 = vmatpush1.xpose.msra.mxu0 0.0
    %4178 = vmatprep.subr.mxu0 0.0
    %4179 = vmatpush1.xpose.msra.mxu0 0.0
    %4180 = vmatprep.subr.mxu0 0.0
    %4181 = vmatpush1.xpose.msra.mxu0 0.0
    %4182 = vmatprep.subr.mxu0 0.0
    %4183 = vmatpush1.xpose.msra.mxu0 0.0
    %4184 = vmatprep.subr.mxu0 0.0
    %4185 = vmatpush1.xpose.msra.mxu0 0.0
    %4186 = vmatprep.subr.mxu0 0.0
    %4187 = vmatpush1.xpose.msra.mxu0 0.0
    %4188 = vmatprep.subr.mxu0 0.0
    %4189 = vmatpush1.xpose.msra.mxu0 0.0
    %4190 = vmatprep.subr.mxu0 0.0
    %4191 = vmatpush1.xpose.msra.mxu0 0.0
    %4192 = vmatprep.subr.mxu0 0.0
    %4193 = vmatpush1.xpose.msra.mxu0 0.0
    %4194 = vmatprep.subr.mxu0 0.0
    %4195 = vmatpush1.xpose.msra.mxu0 0.0
    %4196 = vmatprep.subr.mxu0 0.0
    %4197 = vmatpush1.xpose.msra.mxu0 0.0
    %4198 = vmatprep.subr.mxu0 0.0
    %4199 = vmatpush1.xpose.msra.mxu0 0.0
    %4200 = vmatprep.subr.mxu0 0.0
    %4201 = vmatpush1.xpose.msra.mxu0 0.0
    %4202 = vmatprep.subr.mxu0 0.0
    %4203 = vmatpush1.xpose.msra.mxu0 0.0
    %4204 = vmatprep.subr.mxu0 0.0
    %4205 = vmatpush1.xpose.msra.mxu0 0.0
    %4206 = vmatprep.subr.mxu0 0.0
    %4207 = vmatpush1.xpose.msra.mxu0 0.0
    %4208 = vmatprep.subr.mxu0 0.0
    %4209 = vmatpush1.xpose.msra.mxu0 0.0
    %4210 = vmatprep.subr.mxu0 0.0
    %4211 = vmatpush1.xpose.msra.mxu0 0.0
    %4212 = vmatprep.subr.mxu0 0.0
    %4213 = vmatpush1.xpose.msra.mxu0 0.0
    %4214 = vmatprep.subr.mxu0 0.0
    %4215 = vmatpush1.xpose.msra.mxu0 0.0
    %4216 = vmatprep.subr.mxu0 0.0
    %4217 = vmatpush1.xpose.msra.mxu0 0.0
    %4218 = vmatprep.subr.mxu0 0.0
    %4219 = vmatpush1.xpose.msra.mxu0 0.0
    %4220 = vmatprep.subr.mxu0 0.0
    %4221 = vmatpush1.xpose.msra.mxu0 0.0
    %4222 = vmatprep.subr.mxu0 0.0
    %4223 = vmatpush1.xpose.msra.mxu0 0.0
    %4224 = vmatprep.subr.mxu0 0.0
    %4225 = vmatpush1.xpose.msra.mxu0 0.0
    %4226 = vmatprep.mubr.f32.mxu0 0.0
    %v4227 = vand.u32 %v3808, 4294901760
    %4228 = vmatmul.mubr.f32.gmra.mrb[0].mxu0 %v4227
    %v4229 = vpop.f32.mrb[0].mxu0
    %v4230 = vadd.f32 %v4145, %v4229
    %v4231 = vpop.f32.mrb[0].mxu0
    %4232 = vmatprep.mubr.f32.mxu0 0.0
    %v4233 = vand.u32 %v3810, 4294901760
    %4234 = vmatmul.mubr.f32.gmra.mrb[0].mxu0 %v4233
    %v4235 = vpop.f32.mrb[0].mxu0
    %v4236 = vadd.f32 %v4153, %v4235
    %v4237 = vpop.f32.mrb[0].mxu0
    %4238 = vdwg.mxu0
    %4239 = vmatprep.subr.mxu0 0.0
    %v4240 = vand.u32 %v3812, 4294901760
    %4241 = vmatpush1.xpose.msra.mxu0 %v4240
    %4242 = vmatprep.subr.mxu0 0.0
    %v4243 = vand.u32 %v3814, 4294901760
    %4244 = vmatpush1.xpose.msra.mxu0 %v4243
    %4245 = vmatprep.subr.mxu0 0.0
    %4246 = vmatpush1.xpose.msra.mxu0 0.0
    %4247 = vmatprep.subr.mxu0 0.0
    %4248 = vmatpush1.xpose.msra.mxu0 0.0
    %4249 = vmatprep.subr.mxu0 0.0
    %4250 = vmatpush1.xpose.msra.mxu0 0.0
    %4251 = vmatprep.subr.mxu0 0.0
    %4252 = vmatpush1.xpose.msra.mxu0 0.0
    %4253 = vmatprep.subr.mxu0 0.0
    %4254 = vmatpush1.xpose.msra.mxu0 0.0
    %4255 = vmatprep.subr.mxu0 0.0
    %4256 = vmatpush1.xpose.msra.mxu0 0.0
    %4257 = vmatprep.subr.mxu0 0.0
    %4258 = vmatpush1.xpose.msra.mxu0 0.0
    %4259 = vmatprep.subr.mxu0 0.0
    %4260 = vmatpush1.xpose.msra.mxu0 0.0
    %4261 = vmatprep.subr.mxu0 0.0
    %4262 = vmatpush1.xpose.msra.mxu0 0.0
    %4263 = vmatprep.subr.mxu0 0.0
    %4264 = vmatpush1.xpose.msra.mxu0 0.0
    %4265 = vmatprep.subr.mxu0 0.0
    %4266 = vmatpush1.xpose.msra.mxu0 0.0
    %4267 = vmatprep.subr.mxu0 0.0
    %4268 = vmatpush1.xpose.msra.mxu0 0.0
    %4269 = vmatprep.subr.mxu0 0.0
    %4270 = vmatpush1.xpose.msra.mxu0 0.0
    %4271 = vmatprep.subr.mxu0 0.0
    %4272 = vmatpush1.xpose.msra.mxu0 0.0
    %4273 = vmatprep.subr.mxu0 0.0
    %4274 = vmatpush1.xpose.msra.mxu0 0.0
    %4275 = vmatprep.subr.mxu0 0.0
    %4276 = vmatpush1.xpose.msra.mxu0 0.0
    %4277 = vmatprep.subr.mxu0 0.0
    %4278 = vmatpush1.xpose.msra.mxu0 0.0
    %4279 = vmatprep.subr.mxu0 0.0
    %4280 = vmatpush1.xpose.msra.mxu0 0.0
    %4281 = vmatprep.subr.mxu0 0.0
    %4282 = vmatpush1.xpose.msra.mxu0 0.0
    %4283 = vmatprep.subr.mxu0 0.0
    %4284 = vmatpush1.xpose.msra.mxu0 0.0
    %4285 = vmatprep.subr.mxu0 0.0
    %4286 = vmatpush1.xpose.msra.mxu0 0.0
    %4287 = vmatprep.subr.mxu0 0.0
    %4288 = vmatpush1.xpose.msra.mxu0 0.0
    %4289 = vmatprep.subr.mxu0 0.0
    %4290 = vmatpush1.xpose.msra.mxu0 0.0
    %4291 = vmatprep.subr.mxu0 0.0
    %4292 = vmatpush1.xpose.msra.mxu0 0.0
    %4293 = vmatprep.subr.mxu0 0.0
    %4294 = vmatpush1.xpose.msra.mxu0 0.0
    %4295 = vmatprep.subr.mxu0 0.0
    %4296 = vmatpush1.xpose.msra.mxu0 0.0
    %4297 = vmatprep.subr.mxu0 0.0
    %4298 = vmatpush1.xpose.msra.mxu0 0.0
    %4299 = vmatprep.subr.mxu0 0.0
    %4300 = vmatpush1.xpose.msra.mxu0 0.0
    %4301 = vmatprep.subr.mxu0 0.0
    %4302 = vmatpush1.xpose.msra.mxu0 0.0
    %4303 = vmatprep.subr.mxu0 0.0
    %4304 = vmatpush1.xpose.msra.mxu0 0.0
    %4305 = vmatprep.mubr.f32.mxu0 0.0
    %v4306 = vand.u32 %v3808, 4294901760
    %4307 = vmatmul.mubr.f32.gmra.mrb[0].mxu0 %v4306
    %v4308 = vpop.f32.mrb[0].mxu0
    %v4309 = vadd.f32 %v4230, %v4308
    %v4310 = vpop.f32.mrb[0].mxu0
    %4311 = vmatprep.mubr.f32.mxu0 0.0
    %v4312 = vand.u32 %v3810, 4294901760
    %4313 = vmatmul.mubr.f32.gmra.mrb[0].mxu0 %v4312
    %v4314 = vpop.f32.mrb[0].mxu0
    %v4315 = vadd.f32 %v4236, %v4314
    %v4316 = vpop.f32.mrb[0].mxu0
    %4317 = vdwg.mxu0
    %v4318 = vsel %vm1155, %v4309, -inf
    %4319 = vmax.xlane.f32.xlu0 %v4318
    %v4320 = vpop.xlane.xlu0 %4319
    %v4321 = vsel %vm1155, %v4315, -inf
    %4322 = vmax.xlane.f32.xlu0 %v4321
    %v4323 = vpop.xlane.xlu0 %4322
    %v4324 = vsub.f32 %v4309, %v4320
    %v4325 = vsub.f32 %v4315, %v4323
    %v4326 = vmul.f32 %v4324, 1.442695
    %v4327 = vpow.pop %v4326
    %v4328 = vmul.f32 %v4325, 1.442695
    %v4329 = vpow.pop %v4328
    %v4330 = vsel %vm1155, %v4327, 0.0
    %4331 = vadd.xlane.f32.xlu0 %v4330
    %v4332 = vpop.xlane.xlu0 %4331
    %v4333 = vsel %vm1155, %v4329, 0.0
    %4334 = vadd.xlane.f32.xlu0 %v4333
    %v4335 = vpop.xlane.xlu0 %4334
    %v4336 = vrcp.pop %v4332
    %v4337 = vmul.f32 %v4327, %v4336
    %v4338 = vrcp.pop %v4335
    %v4339 = vmul.f32 %v4329, %v4338
    %4340 = vrot.lane.b32.xlu0 %v636, 72
    %v4341 = vpop.permute.xlu0 %4340
    %4342 = vrot.lane.b32.xlu0 %v637, 72
    %v4343 = vpop.permute.xlu0 %4342
    %v4347 = vsel %vm1155, %v4337, 0
    %v4350 = vsel %vm1155, %v4339, 0
    %4352 = vmatprep.subr.mxu0 0.0
    %v4353 = vand.u32 %v4341, 4294901760
    %4354 = vmatpush1.msra.mxu0 %v4353
    %4355 = vmatprep.subr.mxu0 0.0
    %v4356 = vand.u32 %v4343, 4294901760
    %4357 = vmatpush1.msra.mxu0 %v4356
    %4358 = vmatprep.subr.mxu0 0.0
    %4359 = vmatpush1.msra.mxu0 0.0
    %4360 = vmatprep.subr.mxu0 0.0
    %4361 = vmatpush1.msra.mxu0 0.0
    %4362 = vmatprep.subr.mxu0 0.0
    %4363 = vmatpush1.msra.mxu0 0.0
    %4364 = vmatprep.subr.mxu0 0.0
    %4365 = vmatpush1.msra.mxu0 0.0
    %4366 = vmatprep.subr.mxu0 0.0
    %4367 = vmatpush1.msra.mxu0 0.0
    %4368 = vmatprep.subr.mxu0 0.0
    %4369 = vmatpush1.msra.mxu0 0.0
    %4370 = vmatprep.subr.mxu0 0.0
    %4371 = vmatpush1.msra.mxu0 0.0
    %4372 = vmatprep.subr.mxu0 0.0
    %4373 = vmatpush1.msra.mxu0 0.0
    %4374 = vmatprep.subr.mxu0 0.0
    %4375 = vmatpush1.msra.mxu0 0.0
    %4376 = vmatprep.subr.mxu0 0.0
    %4377 = vmatpush1.msra.mxu0 0.0
    %4378 = vmatprep.subr.mxu0 0.0
    %4379 = vmatpush1.msra.mxu0 0.0
    %4380 = vmatprep.subr.mxu0 0.0
    %4381 = vmatpush1.msra.mxu0 0.0
    %4382 = vmatprep.subr.mxu0 0.0
    %4383 = vmatpush1.msra.mxu0 0.0
    %4384 = vmatprep.subr.mxu0 0.0
    %4385 = vmatpush1.msra.mxu0 0.0
    %4386 = vmatprep.subr.mxu0 0.0
    %4387 = vmatpush1.msra.mxu0 0.0
    %4388 = vmatprep.subr.mxu0 0.0
    %4389 = vmatpush1.msra.mxu0 0.0
    %4390 = vmatprep.subr.mxu0 0.0
    %4391 = vmatpush1.msra.mxu0 0.0
    %4392 = vmatprep.subr.mxu0 0.0
    %4393 = vmatpush1.msra.mxu0 0.0
    %4394 = vmatprep.subr.mxu0 0.0
    %4395 = vmatpush1.msra.mxu0 0.0
    %4396 = vmatprep.subr.mxu0 0.0
    %4397 = vmatpush1.msra.mxu0 0.0
    %4398 = vmatprep.subr.mxu0 0.0
    %4399 = vmatpush1.msra.mxu0 0.0
    %4400 = vmatprep.subr.mxu0 0.0
    %4401 = vmatpush1.msra.mxu0 0.0
    %4402 = vmatprep.subr.mxu0 0.0
    %4403 = vmatpush1.msra.mxu0 0.0
    %4404 = vmatprep.subr.mxu0 0.0
    %4405 = vmatpush1.msra.mxu0 0.0
    %4406 = vmatprep.subr.mxu0 0.0
    %4407 = vmatpush1.msra.mxu0 0.0
    %4408 = vmatprep.subr.mxu0 0.0
    %4409 = vmatpush1.msra.mxu0 0.0
    %4410 = vmatprep.subr.mxu0 0.0
    %4411 = vmatpush1.msra.mxu0 0.0
    %4412 = vmatprep.subr.mxu0 0.0
    %4413 = vmatpush1.msra.mxu0 0.0
    %4414 = vmatprep.subr.mxu0 0.0
    %4415 = vmatpush1.msra.mxu0 0.0
    %4416 = vmatprep.subr.mxu0 0.0
    %4417 = vmatpush1.msra.mxu0 0.0
    %4418 = vmatprep.mubr.f32.mxu0 0.0
    %v4419 = vand.u32 %v4347, 4294901760
    %v4420 = vsub.f32 %v4347, %v4419
    %v4421 = vand.u32 %v4420, 4294901760
    %v4422 = vsub.f32 %v4420, %v4421
    %v4423 = vand.u32 %v4422, 4294901760
    %4424 = vmatmul.mubr.f32.gmra.mrb[0].mxu0 %v4423
    %v4425 = vpop.f32.mrb[0].mxu0
    %v4426 = vadd.f32 0.0, %v4425
    %v4427 = vpop.f32.mrb[0].mxu0
    %4428 = vmatprep.mubr.f32.mxu0 0.0
    %v4429 = vand.u32 %v4350, 4294901760
    %v4430 = vsub.f32 %v4350, %v4429
    %v4431 = vand.u32 %v4430, 4294901760
    %v4432 = vsub.f32 %v4430, %v4431
    %v4433 = vand.u32 %v4432, 4294901760
    %4434 = vmatmul.mubr.f32.gmra.mrb[0].mxu0 %v4433
    %v4435 = vpop.f32.mrb[0].mxu0
    %v4436 = vadd.f32 0.0, %v4435
    %v4437 = vpop.f32.mrb[0].mxu0
    %4438 = vdwg.mxu0
    %4439 = vmatprep.subr.mxu0 0.0
    %v4440 = vand.u32 %v4341, 4294901760
    %v4441 = vsub.f32 %v4341, %v4440
    %v4442 = vand.u32 %v4441, 4294901760
    %v4443 = vsub.f32 %v4441, %v4442
    %v4444 = vand.u32 %v4443, 4294901760
    %4445 = vmatpush1.msra.mxu0 %v4444
    %4446 = vmatprep.subr.mxu0 0.0
    %v4447 = vand.u32 %v4343, 4294901760
    %v4448 = vsub.f32 %v4343, %v4447
    %v4449 = vand.u32 %v4448, 4294901760
    %v4450 = vsub.f32 %v4448, %v4449
    %v4451 = vand.u32 %v4450, 4294901760
    %4452 = vmatpush1.msra.mxu0 %v4451
    %4453 = vmatprep.subr.mxu0 0.0
    %4454 = vmatpush1.msra.mxu0 0.0
    %4455 = vmatprep.subr.mxu0 0.0
    %4456 = vmatpush1.msra.mxu0 0.0
    %4457 = vmatprep.subr.mxu0 0.0
    %4458 = vmatpush1.msra.mxu0 0.0
    %4459 = vmatprep.subr.mxu0 0.0
    %4460 = vmatpush1.msra.mxu0 0.0
    %4461 = vmatprep.subr.mxu0 0.0
    %4462 = vmatpush1.msra.mxu0 0.0
    %4463 = vmatprep.subr.mxu0 0.0
    %4464 = vmatpush1.msra.mxu0 0.0
    %4465 = vmatprep.subr.mxu0 0.0
    %4466 = vmatpush1.msra.mxu0 0.0
    %4467 = vmatprep.subr.mxu0 0.0
    %4468 = vmatpush1.msra.mxu0 0.0
    %4469 = vmatprep.subr.mxu0 0.0
    %4470 = vmatpush1.msra.mxu0 0.0
    %4471 = vmatprep.subr.mxu0 0.0
    %4472 = vmatpush1.msra.mxu0 0.0
    %4473 = vmatprep.subr.mxu0 0.0
    %4474 = vmatpush1.msra.mxu0 0.0
    %4475 = vmatprep.subr.mxu0 0.0
    %4476 = vmatpush1.msra.mxu0 0.0
    %4477 = vmatprep.subr.mxu0 0.0
    %4478 = vmatpush1.msra.mxu0 0.0
    %4479 = vmatprep.subr.mxu0 0.0
    %4480 = vmatpush1.msra.mxu0 0.0
    %4481 = vmatprep.subr.mxu0 0.0
    %4482 = vmatpush1.msra.mxu0 0.0
    %4483 = vmatprep.subr.mxu0 0.0
    %4484 = vmatpush1.msra.mxu0 0.0
    %4485 = vmatprep.subr.mxu0 0.0
    %4486 = vmatpush1.msra.mxu0 0.0
    %4487 = vmatprep.subr.mxu0 0.0
    %4488 = vmatpush1.msra.mxu0 0.0
    %4489 = vmatprep.subr.mxu0 0.0
    %4490 = vmatpush1.msra.mxu0 0.0
    %4491 = vmatprep.subr.mxu0 0.0
    %4492 = vmatpush1.msra.mxu0 0.0
    %4493 = vmatprep.subr.mxu0 0.0
    %4494 = vmatpush1.msra.mxu0 0.0
    %4495 = vmatprep.subr.mxu0 0.0
    %4496 = vmatpush1.msra.mxu0 0.0
    %4497 = vmatprep.subr.mxu0 0.0
    %4498 = vmatpush1.msra.mxu0 0.0
    %4499 = vmatprep.subr.mxu0 0.0
    %4500 = vmatpush1.msra.mxu0 0.0
    %4501 = vmatprep.subr.mxu0 0.0
    %4502 = vmatpush1.msra.mxu0 0.0
    %4503 = vmatprep.subr.mxu0 0.0
    %4504 = vmatpush1.msra.mxu0 0.0
    %4505 = vmatprep.subr.mxu0 0.0
    %4506 = vmatpush1.msra.mxu0 0.0
    %4507 = vmatprep.subr.mxu0 0.0
    %4508 = vmatpush1.msra.mxu0 0.0
    %4509 = vmatprep.subr.mxu0 0.0
    %4510 = vmatpush1.msra.mxu0 0.0
    %4511 = vmatprep.subr.mxu0 0.0
    %4512 = vmatpush1.msra.mxu0 0.0
    %4513 = vmatprep.mubr.f32.mxu0 0.0
    %v4514 = vand.u32 %v4347, 4294901760
    %4515 = vmatmul.mubr.f32.gmra.mrb[0].mxu0 %v4514
    %v4516 = vpop.f32.mrb[0].mxu0
    %v4517 = vadd.f32 %v4426, %v4516
    %v4518 = vpop.f32.mrb[0].mxu0
    %4519 = vmatprep.mubr.f32.mxu0 0.0
    %v4520 = vand.u32 %v4350, 4294901760
    %4521 = vmatmul.mubr.f32.gmra.mrb[0].mxu0 %v4520
    %v4522 = vpop.f32.mrb[0].mxu0
    %v4523 = vadd.f32 %v4436, %v4522
    %v4524 = vpop.f32.mrb[0].mxu0
    %4525 = vdwg.mxu0
    %4526 = vmatprep.subr.mxu0 0.0
    %v4527 = vand.u32 %v4341, 4294901760
    %v4528 = vsub.f32 %v4341, %v4527
    %4529 = vmatpush1.msra.mxu0 %v4528
    %4530 = vmatprep.subr.mxu0 0.0
    %v4531 = vand.u32 %v4343, 4294901760
    %v4532 = vsub.f32 %v4343, %v4531
    %4533 = vmatpush1.msra.mxu0 %v4532
    %4534 = vmatprep.subr.mxu0 0.0
    %4535 = vmatpush1.msra.mxu0 0.0
    %4536 = vmatprep.subr.mxu0 0.0
    %4537 = vmatpush1.msra.mxu0 0.0
    %4538 = vmatprep.subr.mxu0 0.0
    %4539 = vmatpush1.msra.mxu0 0.0
    %4540 = vmatprep.subr.mxu0 0.0
    %4541 = vmatpush1.msra.mxu0 0.0
    %4542 = vmatprep.subr.mxu0 0.0
    %4543 = vmatpush1.msra.mxu0 0.0
    %4544 = vmatprep.subr.mxu0 0.0
    %4545 = vmatpush1.msra.mxu0 0.0
    %4546 = vmatprep.subr.mxu0 0.0
    %4547 = vmatpush1.msra.mxu0 0.0
    %4548 = vmatprep.subr.mxu0 0.0
    %4549 = vmatpush1.msra.mxu0 0.0
    %4550 = vmatprep.subr.mxu0 0.0
    %4551 = vmatpush1.msra.mxu0 0.0
    %4552 = vmatprep.subr.mxu0 0.0
    %4553 = vmatpush1.msra.mxu0 0.0
    %4554 = vmatprep.subr.mxu0 0.0
    %4555 = vmatpush1.msra.mxu0 0.0
    %4556 = vmatprep.subr.mxu0 0.0
    %4557 = vmatpush1.msra.mxu0 0.0
    %4558 = vmatprep.subr.mxu0 0.0
    %4559 = vmatpush1.msra.mxu0 0.0
    %4560 = vmatprep.subr.mxu0 0.0
    %4561 = vmatpush1.msra.mxu0 0.0
    %4562 = vmatprep.subr.mxu0 0.0
    %4563 = vmatpush1.msra.mxu0 0.0
    %4564 = vmatprep.subr.mxu0 0.0
    %4565 = vmatpush1.msra.mxu0 0.0
    %4566 = vmatprep.subr.mxu0 0.0
    %4567 = vmatpush1.msra.mxu0 0.0
    %4568 = vmatprep.subr.mxu0 0.0
    %4569 = vmatpush1.msra.mxu0 0.0
    %4570 = vmatprep.subr.mxu0 0.0
    %4571 = vmatpush1.msra.mxu0 0.0
    %4572 = vmatprep.subr.mxu0 0.0
    %4573 = vmatpush1.msra.mxu0 0.0
    %4574 = vmatprep.subr.mxu0 0.0
    %4575 = vmatpush1.msra.mxu0 0.0
    %4576 = vmatprep.subr.mxu0 0.0
    %4577 = vmatpush1.msra.mxu0 0.0
    %4578 = vmatprep.subr.mxu0 0.0
    %4579 = vmatpush1.msra.mxu0 0.0
    %4580 = vmatprep.subr.mxu0 0.0
    %4581 = vmatpush1.msra.mxu0 0.0
    %4582 = vmatprep.subr.mxu0 0.0
    %4583 = vmatpush1.msra.mxu0 0.0
    %4584 = vmatprep.subr.mxu0 0.0
    %4585 = vmatpush1.msra.mxu0 0.0
    %4586 = vmatprep.subr.mxu0 0.0
    %4587 = vmatpush1.msra.mxu0 0.0
    %4588 = vmatprep.subr.mxu0 0.0
    %4589 = vmatpush1.msra.mxu0 0.0
    %4590 = vmatprep.subr.mxu0 0.0
    %4591 = vmatpush1.msra.mxu0 0.0
    %4592 = vmatprep.subr.mxu0 0.0
    %4593 = vmatpush1.msra.mxu0 0.0
    %4594 = vmatprep.mubr.f32.mxu0 0.0
    %v4595 = vand.u32 %v4347, 4294901760
    %v4596 = vsub.f32 %v4347, %v4595
    %4597 = vmatmul.mubr.f32.gmra.mrb[0].mxu0 %v4596
    %v4598 = vpop.f32.mrb[0].mxu0
    %v4599 = vadd.f32 %v4517, %v4598
    %v4600 = vpop.f32.mrb[0].mxu0
    %4601 = vmatprep.mubr.f32.mxu0 0.0
    %v4602 = vand.u32 %v4350, 4294901760
    %v4603 = vsub.f32 %v4350, %v4602
    %4604 = vmatmul.mubr.f32.gmra.mrb[0].mxu0 %v4603
    %v4605 = vpop.f32.mrb[0].mxu0
    %v4606 = vadd.f32 %v4523, %v4605
    %v4607 = vpop.f32.mrb[0].mxu0
    %4608 = vdwg.mxu0
    %4609 = vmatprep.subr.mxu0 0.0
    %v4610 = vand.u32 %v4341, 4294901760
    %4611 = vmatpush1.msra.mxu0 %v4610
    %4612 = vmatprep.subr.mxu0 0.0
    %v4613 = vand.u32 %v4343, 4294901760
    %4614 = vmatpush1.msra.mxu0 %v4613
    %4615 = vmatprep.subr.mxu0 0.0
    %4616 = vmatpush1.msra.mxu0 0.0
    %4617 = vmatprep.subr.mxu0 0.0
    %4618 = vmatpush1.msra.mxu0 0.0
    %4619 = vmatprep.subr.mxu0 0.0
    %4620 = vmatpush1.msra.mxu0 0.0
    %4621 = vmatprep.subr.mxu0 0.0
    %4622 = vmatpush1.msra.mxu0 0.0
    %4623 = vmatprep.subr.mxu0 0.0
    %4624 = vmatpush1.msra.mxu0 0.0
    %4625 = vmatprep.subr.mxu0 0.0
    %4626 = vmatpush1.msra.mxu0 0.0
    %4627 = vmatprep.subr.mxu0 0.0
    %4628 = vmatpush1.msra.mxu0 0.0
    %4629 = vmatprep.subr.mxu0 0.0
    %4630 = vmatpush1.msra.mxu0 0.0
    %4631 = vmatprep.subr.mxu0 0.0
    %4632 = vmatpush1.msra.mxu0 0.0
    %4633 = vmatprep.subr.mxu0 0.0
    %4634 = vmatpush1.msra.mxu0 0.0
    %4635 = vmatprep.subr.mxu0 0.0
    %4636 = vmatpush1.msra.mxu0 0.0
    %4637 = vmatprep.subr.mxu0 0.0
    %4638 = vmatpush1.msra.mxu0 0.0
    %4639 = vmatprep.subr.mxu0 0.0
    %4640 = vmatpush1.msra.mxu0 0.0
    %4641 = vmatprep.subr.mxu0 0.0
    %4642 = vmatpush1.msra.mxu0 0.0
    %4643 = vmatprep.subr.mxu0 0.0
    %4644 = vmatpush1.msra.mxu0 0.0
    %4645 = vmatprep.subr.mxu0 0.0
    %4646 = vmatpush1.msra.mxu0 0.0
    %4647 = vmatprep.subr.mxu0 0.0
    %4648 = vmatpush1.msra.mxu0 0.0
    %4649 = vmatprep.subr.mxu0 0.0
    %4650 = vmatpush1.msra.mxu0 0.0
    %4651 = vmatprep.subr.mxu0 0.0
    %4652 = vmatpush1.msra.mxu0 0.0
    %4653 = vmatprep.subr.mxu0 0.0
    %4654 = vmatpush1.msra.mxu0 0.0
    %4655 = vmatprep.subr.mxu0 0.0
    %4656 = vmatpush1.msra.mxu0 0.0
    %4657 = vmatprep.subr.mxu0 0.0
    %4658 = vmatpush1.msra.mxu0 0.0
    %4659 = vmatprep.subr.mxu0 0.0
    %4660 = vmatpush1.msra.mxu0 0.0
    %4661 = vmatprep.subr.mxu0 0.0
    %4662 = vmatpush1.msra.mxu0 0.0
    %4663 = vmatprep.subr.mxu0 0.0
    %4664 = vmatpush1.msra.mxu0 0.0
    %4665 = vmatprep.subr.mxu0 0.0
    %4666 = vmatpush1.msra.mxu0 0.0
    %4667 = vmatprep.subr.mxu0 0.0
    %4668 = vmatpush1.msra.mxu0 0.0
    %4669 = vmatprep.subr.mxu0 0.0
    %4670 = vmatpush1.msra.mxu0 0.0
    %4671 = vmatprep.subr.mxu0 0.0
    %4672 = vmatpush1.msra.mxu0 0.0
    %4673 = vmatprep.subr.mxu0 0.0
    %4674 = vmatpush1.msra.mxu0 0.0
    %4675 = vmatprep.mubr.f32.mxu0 0.0
    %v4676 = vand.u32 %v4347, 4294901760
    %v4677 = vsub.f32 %v4347, %v4676
    %v4678 = vand.u32 %v4677, 4294901760
    %4679 = vmatmul.mubr.f32.gmra.mrb[0].mxu0 %v4678
    %v4680 = vpop.f32.mrb[0].mxu0
    %v4681 = vadd.f32 %v4599, %v4680
    %v4682 = vpop.f32.mrb[0].mxu0
    %4683 = vmatprep.mubr.f32.mxu0 0.0
    %v4684 = vand.u32 %v4350, 4294901760
    %v4685 = vsub.f32 %v4350, %v4684
    %v4686 = vand.u32 %v4685, 4294901760
    %4687 = vmatmul.mubr.f32.gmra.mrb[0].mxu0 %v4686
    %v4688 = vpop.f32.mrb[0].mxu0
    %v4689 = vadd.f32 %v4606, %v4688
    %v4690 = vpop.f32.mrb[0].mxu0
    %4691 = vdwg.mxu0
    %4692 = vmatprep.subr.mxu0 0.0
    %v4693 = vand.u32 %v4341, 4294901760
    %v4694 = vsub.f32 %v4341, %v4693
    %v4695 = vand.u32 %v4694, 4294901760
    %4696 = vmatpush1.msra.mxu0 %v4695
    %4697 = vmatprep.subr.mxu0 0.0
    %v4698 = vand.u32 %v4343, 4294901760
    %v4699 = vsub.f32 %v4343, %v4698
    %v4700 = vand.u32 %v4699, 4294901760
    %4701 = vmatpush1.msra.mxu0 %v4700
    %4702 = vmatprep.subr.mxu0 0.0
    %4703 = vmatpush1.msra.mxu0 0.0
    %4704 = vmatprep.subr.mxu0 0.0
    %4705 = vmatpush1.msra.mxu0 0.0
    %4706 = vmatprep.subr.mxu0 0.0
    %4707 = vmatpush1.msra.mxu0 0.0
    %4708 = vmatprep.subr.mxu0 0.0
    %4709 = vmatpush1.msra.mxu0 0.0
    %4710 = vmatprep.subr.mxu0 0.0
    %4711 = vmatpush1.msra.mxu0 0.0
    %4712 = vmatprep.subr.mxu0 0.0
    %4713 = vmatpush1.msra.mxu0 0.0
    %4714 = vmatprep.subr.mxu0 0.0
    %4715 = vmatpush1.msra.mxu0 0.0
    %4716 = vmatprep.subr.mxu0 0.0
    %4717 = vmatpush1.msra.mxu0 0.0
    %4718 = vmatprep.subr.mxu0 0.0
    %4719 = vmatpush1.msra.mxu0 0.0
    %4720 = vmatprep.subr.mxu0 0.0
    %4721 = vmatpush1.msra.mxu0 0.0
    %4722 = vmatprep.subr.mxu0 0.0
    %4723 = vmatpush1.msra.mxu0 0.0
    %4724 = vmatprep.subr.mxu0 0.0
    %4725 = vmatpush1.msra.mxu0 0.0
    %4726 = vmatprep.subr.mxu0 0.0
    %4727 = vmatpush1.msra.mxu0 0.0
    %4728 = vmatprep.subr.mxu0 0.0
    %4729 = vmatpush1.msra.mxu0 0.0
    %4730 = vmatprep.subr.mxu0 0.0
    %4731 = vmatpush1.msra.mxu0 0.0
    %4732 = vmatprep.subr.mxu0 0.0
    %4733 = vmatpush1.msra.mxu0 0.0
    %4734 = vmatprep.subr.mxu0 0.0
    %4735 = vmatpush1.msra.mxu0 0.0
    %4736 = vmatprep.subr.mxu0 0.0
    %4737 = vmatpush1.msra.mxu0 0.0
    %4738 = vmatprep.subr.mxu0 0.0
    %4739 = vmatpush1.msra.mxu0 0.0
    %4740 = vmatprep.subr.mxu0 0.0
    %4741 = vmatpush1.msra.mxu0 0.0
    %4742 = vmatprep.subr.mxu0 0.0
    %4743 = vmatpush1.msra.mxu0 0.0
    %4744 = vmatprep.subr.mxu0 0.0
    %4745 = vmatpush1.msra.mxu0 0.0
    %4746 = vmatprep.subr.mxu0 0.0
    %4747 = vmatpush1.msra.mxu0 0.0
    %4748 = vmatprep.subr.mxu0 0.0
    %4749 = vmatpush1.msra.mxu0 0.0
    %4750 = vmatprep.subr.mxu0 0.0
    %4751 = vmatpush1.msra.mxu0 0.0
    %4752 = vmatprep.subr.mxu0 0.0
    %4753 = vmatpush1.msra.mxu0 0.0
    %4754 = vmatprep.subr.mxu0 0.0
    %4755 = vmatpush1.msra.mxu0 0.0
    %4756 = vmatprep.subr.mxu0 0.0
    %4757 = vmatpush1.msra.mxu0 0.0
    %4758 = vmatprep.subr.mxu0 0.0
    %4759 = vmatpush1.msra.mxu0 0.0
    %4760 = vmatprep.subr.mxu0 0.0
    %4761 = vmatpush1.msra.mxu0 0.0
    %4762 = vmatprep.mubr.f32.mxu0 0.0
    %v4763 = vand.u32 %v4347, 4294901760
    %4764 = vmatmul.mubr.f32.gmra.mrb[0].mxu0 %v4763
    %v4765 = vpop.f32.mrb[0].mxu0
    %v4766 = vadd.f32 %v4681, %v4765
    %v4767 = vpop.f32.mrb[0].mxu0
    %4768 = vmatprep.mubr.f32.mxu0 0.0
    %v4769 = vand.u32 %v4350, 4294901760
    %4770 = vmatmul.mubr.f32.gmra.mrb[0].mxu0 %v4769
    %v4771 = vpop.f32.mrb[0].mxu0
    %v4772 = vadd.f32 %v4689, %v4771
    %v4773 = vpop.f32.mrb[0].mxu0
    %4774 = vdwg.mxu0
    %4775 = vmatprep.subr.mxu0 0.0
    %v4776 = vand.u32 %v4341, 4294901760
    %4777 = vmatpush1.msra.mxu0 %v4776
    %4778 = vmatprep.subr.mxu0 0.0
    %v4779 = vand.u32 %v4343, 4294901760
    %4780 = vmatpush1.msra.mxu0 %v4779
    %4781 = vmatprep.subr.mxu0 0.0
    %4782 = vmatpush1.msra.mxu0 0.0
    %4783 = vmatprep.subr.mxu0 0.0
    %4784 = vmatpush1.msra.mxu0 0.0
    %4785 = vmatprep.subr.mxu0 0.0
    %4786 = vmatpush1.msra.mxu0 0.0
    %4787 = vmatprep.subr.mxu0 0.0
    %4788 = vmatpush1.msra.mxu0 0.0
    %4789 = vmatprep.subr.mxu0 0.0
    %4790 = vmatpush1.msra.mxu0 0.0
    %4791 = vmatprep.subr.mxu0 0.0
    %4792 = vmatpush1.msra.mxu0 0.0
    %4793 = vmatprep.subr.mxu0 0.0
    %4794 = vmatpush1.msra.mxu0 0.0
    %4795 = vmatprep.subr.mxu0 0.0
    %4796 = vmatpush1.msra.mxu0 0.0
    %4797 = vmatprep.subr.mxu0 0.0
    %4798 = vmatpush1.msra.mxu0 0.0
    %4799 = vmatprep.subr.mxu0 0.0
    %4800 = vmatpush1.msra.mxu0 0.0
    %4801 = vmatprep.subr.mxu0 0.0
    %4802 = vmatpush1.msra.mxu0 0.0
    %4803 = vmatprep.subr.mxu0 0.0
    %4804 = vmatpush1.msra.mxu0 0.0
    %4805 = vmatprep.subr.mxu0 0.0
    %4806 = vmatpush1.msra.mxu0 0.0
    %4807 = vmatprep.subr.mxu0 0.0
    %4808 = vmatpush1.msra.mxu0 0.0
    %4809 = vmatprep.subr.mxu0 0.0
    %4810 = vmatpush1.msra.mxu0 0.0
    %4811 = vmatprep.subr.mxu0 0.0
    %4812 = vmatpush1.msra.mxu0 0.0
    %4813 = vmatprep.subr.mxu0 0.0
    %4814 = vmatpush1.msra.mxu0 0.0
    %4815 = vmatprep.subr.mxu0 0.0
    %4816 = vmatpush1.msra.mxu0 0.0
    %4817 = vmatprep.subr.mxu0 0.0
    %4818 = vmatpush1.msra.mxu0 0.0
    %4819 = vmatprep.subr.mxu0 0.0
    %4820 = vmatpush1.msra.mxu0 0.0
    %4821 = vmatprep.subr.mxu0 0.0
    %4822 = vmatpush1.msra.mxu0 0.0
    %4823 = vmatprep.subr.mxu0 0.0
    %4824 = vmatpush1.msra.mxu0 0.0
    %4825 = vmatprep.subr.mxu0 0.0
    %4826 = vmatpush1.msra.mxu0 0.0
    %4827 = vmatprep.subr.mxu0 0.0
    %4828 = vmatpush1.msra.mxu0 0.0
    %4829 = vmatprep.subr.mxu0 0.0
    %4830 = vmatpush1.msra.mxu0 0.0
    %4831 = vmatprep.subr.mxu0 0.0
    %4832 = vmatpush1.msra.mxu0 0.0
    %4833 = vmatprep.subr.mxu0 0.0
    %4834 = vmatpush1.msra.mxu0 0.0
    %4835 = vmatprep.subr.mxu0 0.0
    %4836 = vmatpush1.msra.mxu0 0.0
    %4837 = vmatprep.subr.mxu0 0.0
    %4838 = vmatpush1.msra.mxu0 0.0
    %4839 = vmatprep.subr.mxu0 0.0
    %4840 = vmatpush1.msra.mxu0 0.0
    %4841 = vmatprep.mubr.f32.mxu0 0.0
    %v4842 = vand.u32 %v4347, 4294901760
    %4843 = vmatmul.mubr.f32.gmra.mrb[0].mxu0 %v4842
    %v4844 = vpop.f32.mrb[0].mxu0
    %v4845 = vadd.f32 %v4766, %v4844
    %v4846 = vpop.f32.mrb[0].mxu0
    %4847 = vmatprep.mubr.f32.mxu0 0.0
    %v4848 = vand.u32 %v4350, 4294901760
    %4849 = vmatmul.mubr.f32.gmra.mrb[0].mxu0 %v4848
    %v4850 = vpop.f32.mrb[0].mxu0
    %v4851 = vadd.f32 %v4772, %v4850
    %v4852 = vpop.f32.mrb[0].mxu0
    %4853 = vdwg.mxu0
    %4856 = vrot.lane.b32.xlu0 %v2737, 8
    %v4857 = vpop.permute.xlu0 %4856
    %4858 = vrot.lane.b32.xlu0 %v2743, 8
    %v4859 = vpop.permute.xlu0 %4858
    %4864 = vrot.lane.b32.xlu0 %v3791, 16
    %v4865 = vpop.permute.xlu0 %4864
    %4866 = vrot.lane.b32.xlu0 %v3797, 16
    %v4867 = vpop.permute.xlu0 %4866
    %4872 = vrot.lane.b32.xlu0 %v4845, 24
    %v4873 = vpop.permute.xlu0 %4872
    %4874 = vrot.lane.b32.xlu0 %v4851, 24
    %v4875 = vpop.permute.xlu0 %4874
    %vm4878 = vcmask 64512
    %v4879 = vsel %vm4878, %v1683, %v4857
    %v4880 = vsel %vm4878, %v1689, %v4859
    %v4881 = vsel %vm1155, %v4879, %v4865
    %v4882 = vsel %vm1155, %v4880, %v4867
    %vm4883 = vcmask 195584
    %v4884 = vsel %vm4883, %v4881, %v4873
    %v4885 = vsel %vm4883, %v4882, %v4875
    %v4886 = vadd.f32 %v12, %v4884
    %v4887 = vadd.f32 %v13, %v4885
    %v4888 = vmax.f32 %v4886, 0.0
    %v4889 = vmax.f32 %v4887, 0.0
    %v4890 = vlaneseq
    %v4891 = vshrl.u32 %v4890, 7
    %v4892 = vsub.s32 0, %v4891
    %v4893 = vrot.slane %v27, %v4892
    %v4895 = vsel %vm36, %v4888, 0
    %v4898 = vsel %vm36, %v4889, 0
    %4900 = vmatprep.subr.mxu0 0.0
    %v4901 = vand.u32 %v18, 4294901760
    %4902 = vmatpush1.msra.mxu0 %v4901
    %4903 = vmatprep.subr.mxu0 0.0
    %v4904 = vand.u32 %v19, 4294901760
    %4905 = vmatpush1.msra.mxu0 %v4904
    %4906 = vmatprep.subr.mxu0 0.0
    %v4907 = vand.u32 %v20, 4294901760
    %4908 = vmatpush1.msra.mxu0 %v4907
    %4909 = vmatprep.subr.mxu0 0.0
    %v4910 = vand.u32 %v21, 4294901760
    %4911 = vmatpush1.msra.mxu0 %v4910
    %4912 = vmatprep.subr.mxu0 0.0
    %4913 = vmatpush1.msra.mxu0 0.0
    %4914 = vmatprep.subr.mxu0 0.0
    %4915 = vmatpush1.msra.mxu0 0.0
    %4916 = vmatprep.subr.mxu0 0.0
    %4917 = vmatpush1.msra.mxu0 0.0
    %4918 = vmatprep.subr.mxu0 0.0
    %4919 = vmatpush1.msra.mxu0 0.0
    %4920 = vmatprep.subr.mxu0 0.0
    %4921 = vmatpush1.msra.mxu0 0.0
    %4922 = vmatprep.subr.mxu0 0.0
    %4923 = vmatpush1.msra.mxu0 0.0
    %4924 = vmatprep.subr.mxu0 0.0
    %4925 = vmatpush1.msra.mxu0 0.0
    %4926 = vmatprep.subr.mxu0 0.0
    %4927 = vmatpush1.msra.mxu0 0.0
    %4928 = vmatprep.subr.mxu0 0.0
    %4929 = vmatpush1.msra.mxu0 0.0
    %4930 = vmatprep.subr.mxu0 0.0
    %4931 = vmatpush1.msra.mxu0 0.0
    %4932 = vmatprep.subr.mxu0 0.0
    %4933 = vmatpush1.msra.mxu0 0.0
    %4934 = vmatprep.subr.mxu0 0.0
    %4935 = vmatpush1.msra.mxu0 0.0
    %4936 = vmatprep.subr.mxu0 0.0
    %4937 = vmatpush1.msra.mxu0 0.0
    %4938 = vmatprep.subr.mxu0 0.0
    %4939 = vmatpush1.msra.mxu0 0.0
    %4940 = vmatprep.subr.mxu0 0.0
    %4941 = vmatpush1.msra.mxu0 0.0
    %4942 = vmatprep.subr.mxu0 0.0
    %4943 = vmatpush1.msra.mxu0 0.0
    %4944 = vmatprep.subr.mxu0 0.0
    %4945 = vmatpush1.msra.mxu0 0.0
    %4946 = vmatprep.subr.mxu0 0.0
    %4947 = vmatpush1.msra.mxu0 0.0
    %4948 = vmatprep.subr.mxu0 0.0
    %4949 = vmatpush1.msra.mxu0 0.0
    %4950 = vmatprep.subr.mxu0 0.0
    %4951 = vmatpush1.msra.mxu0 0.0
    %4952 = vmatprep.subr.mxu0 0.0
    %4953 = vmatpush1.msra.mxu0 0.0
    %4954 = vmatprep.subr.mxu0 0.0
    %4955 = vmatpush1.msra.mxu0 0.0
    %4956 = vmatprep.subr.mxu0 0.0
    %4957 = vmatpush1.msra.mxu0 0.0
    %4958 = vmatprep.subr.mxu0 0.0
    %4959 = vmatpush1.msra.mxu0 0.0
    %4960 = vmatprep.subr.mxu0 0.0
    %4961 = vmatpush1.msra.mxu0 0.0
    %4962 = vmatprep.subr.mxu0 0.0
    %4963 = vmatpush1.msra.mxu0 0.0
    %4964 = vmatprep.subr.mxu0 0.0
    %4965 = vmatpush1.msra.mxu0 0.0
    %4966 = vmatprep.subr.mxu0 0.0
    %4967 = vmatpush1.msra.mxu0 0.0
    %4968 = vmatprep.mubr.f32.mxu0 0.0
    %v4969 = vand.u32 %v4895, 4294901760
    %v4970 = vsub.f32 %v4895, %v4969
    %v4971 = vand.u32 %v4970, 4294901760
    %v4972 = vsub.f32 %v4970, %v4971
    %v4973 = vand.u32 %v4972, 4294901760
    %4974 = vmatmul.mubr.f32.gmra.mrb[0].mxu0 %v4973
    %v4975 = vpop.f32.mrb[0].mxu0
    %v4976 = vadd.f32 %v4893, %v4975
    %v4977 = vpop.f32.mrb[0].mxu0
    %4978 = vmatprep.mubr.f32.mxu0 0.0
    %v4979 = vand.u32 %v4898, 4294901760
    %v4980 = vsub.f32 %v4898, %v4979
    %v4981 = vand.u32 %v4980, 4294901760
    %v4982 = vsub.f32 %v4980, %v4981
    %v4983 = vand.u32 %v4982, 4294901760
    %4984 = vmatmul.mubr.f32.gmra.mrb[0].mxu0 %v4983
    %v4985 = vpop.f32.mrb[0].mxu0
    %v4986 = vadd.f32 %v4893, %v4985
    %v4987 = vpop.f32.mrb[0].mxu0
    %4988 = vdwg.mxu0
    %4989 = vmatprep.subr.mxu0 0.0
    %v4990 = vand.u32 %v18, 4294901760
    %v4991 = vsub.f32 %v18, %v4990
    %v4992 = vand.u32 %v4991, 4294901760
    %v4993 = vsub.f32 %v4991, %v4992
    %v4994 = vand.u32 %v4993, 4294901760
    %4995 = vmatpush1.msra.mxu0 %v4994
    %4996 = vmatprep.subr.mxu0 0.0
    %v4997 = vand.u32 %v19, 4294901760
    %v4998 = vsub.f32 %v19, %v4997
    %v4999 = vand.u32 %v4998, 4294901760
    %v5000 = vsub.f32 %v4998, %v4999
    %v5001 = vand.u32 %v5000, 4294901760
    %5002 = vmatpush1.msra.mxu0 %v5001
    %5003 = vmatprep.subr.mxu0 0.0
    %v5004 = vand.u32 %v20, 4294901760
    %v5005 = vsub.f32 %v20, %v5004
    %v5006 = vand.u32 %v5005, 4294901760
    %v5007 = vsub.f32 %v5005, %v5006
    %v5008 = vand.u32 %v5007, 4294901760
    %5009 = vmatpush1.msra.mxu0 %v5008
    %5010 = vmatprep.subr.mxu0 0.0
    %v5011 = vand.u32 %v21, 4294901760
    %v5012 = vsub.f32 %v21, %v5011
    %v5013 = vand.u32 %v5012, 4294901760
    %v5014 = vsub.f32 %v5012, %v5013
    %v5015 = vand.u32 %v5014, 4294901760
    %5016 = vmatpush1.msra.mxu0 %v5015
    %5017 = vmatprep.subr.mxu0 0.0
    %5018 = vmatpush1.msra.mxu0 0.0
    %5019 = vmatprep.subr.mxu0 0.0
    %5020 = vmatpush1.msra.mxu0 0.0
    %5021 = vmatprep.subr.mxu0 0.0
    %5022 = vmatpush1.msra.mxu0 0.0
    %5023 = vmatprep.subr.mxu0 0.0
    %5024 = vmatpush1.msra.mxu0 0.0
    %5025 = vmatprep.subr.mxu0 0.0
    %5026 = vmatpush1.msra.mxu0 0.0
    %5027 = vmatprep.subr.mxu0 0.0
    %5028 = vmatpush1.msra.mxu0 0.0
    %5029 = vmatprep.subr.mxu0 0.0
    %5030 = vmatpush1.msra.mxu0 0.0
    %5031 = vmatprep.subr.mxu0 0.0
    %5032 = vmatpush1.msra.mxu0 0.0
    %5033 = vmatprep.subr.mxu0 0.0
    %5034 = vmatpush1.msra.mxu0 0.0
    %5035 = vmatprep.subr.mxu0 0.0
    %5036 = vmatpush1.msra.mxu0 0.0
    %5037 = vmatprep.subr.mxu0 0.0
    %5038 = vmatpush1.msra.mxu0 0.0
    %5039 = vmatprep.subr.mxu0 0.0
    %5040 = vmatpush1.msra.mxu0 0.0
    %5041 = vmatprep.subr.mxu0 0.0
    %5042 = vmatpush1.msra.mxu0 0.0
    %5043 = vmatprep.subr.mxu0 0.0
    %5044 = vmatpush1.msra.mxu0 0.0
    %5045 = vmatprep.subr.mxu0 0.0
    %5046 = vmatpush1.msra.mxu0 0.0
    %5047 = vmatprep.subr.mxu0 0.0
    %5048 = vmatpush1.msra.mxu0 0.0
    %5049 = vmatprep.subr.mxu0 0.0
    %5050 = vmatpush1.msra.mxu0 0.0
    %5051 = vmatprep.subr.mxu0 0.0
    %5052 = vmatpush1.msra.mxu0 0.0
    %5053 = vmatprep.subr.mxu0 0.0
    %5054 = vmatpush1.msra.mxu0 0.0
    %5055 = vmatprep.subr.mxu0 0.0
    %5056 = vmatpush1.msra.mxu0 0.0
    %5057 = vmatprep.subr.mxu0 0.0
    %5058 = vmatpush1.msra.mxu0 0.0
    %5059 = vmatprep.subr.mxu0 0.0
    %5060 = vmatpush1.msra.mxu0 0.0
    %5061 = vmatprep.subr.mxu0 0.0
    %5062 = vmatpush1.msra.mxu0 0.0
    %5063 = vmatprep.subr.mxu0 0.0
    %5064 = vmatpush1.msra.mxu0 0.0
    %5065 = vmatprep.subr.mxu0 0.0
    %5066 = vmatpush1.msra.mxu0 0.0
    %5067 = vmatprep.subr.mxu0 0.0
    %5068 = vmatpush1.msra.mxu0 0.0
    %5069 = vmatprep.subr.mxu0 0.0
    %5070 = vmatpush1.msra.mxu0 0.0
    %5071 = vmatprep.subr.mxu0 0.0
    %5072 = vmatpush1.msra.mxu0 0.0
    %5073 = vmatprep.mubr.f32.mxu0 0.0
    %v5074 = vand.u32 %v4895, 4294901760
    %5075 = vmatmul.mubr.f32.gmra.mrb[0].mxu0 %v5074
    %v5076 = vpop.f32.mrb[0].mxu0
    %v5077 = vadd.f32 %v4976, %v5076
    %v5078 = vpop.f32.mrb[0].mxu0
    %5079 = vmatprep.mubr.f32.mxu0 0.0
    %v5080 = vand.u32 %v4898, 4294901760
    %5081 = vmatmul.mubr.f32.gmra.mrb[0].mxu0 %v5080
    %v5082 = vpop.f32.mrb[0].mxu0
    %v5083 = vadd.f32 %v4986, %v5082
    %v5084 = vpop.f32.mrb[0].mxu0
    %5085 = vdwg.mxu0
    %5086 = vmatprep.subr.mxu0 0.0
    %v5087 = vand.u32 %v18, 4294901760
    %v5088 = vsub.f32 %v18, %v5087
    %5089 = vmatpush1.msra.mxu0 %v5088
    %5090 = vmatprep.subr.mxu0 0.0
    %v5091 = vand.u32 %v19, 4294901760
    %v5092 = vsub.f32 %v19, %v5091
    %5093 = vmatpush1.msra.mxu0 %v5092
    %5094 = vmatprep.subr.mxu0 0.0
    %v5095 = vand.u32 %v20, 4294901760
    %v5096 = vsub.f32 %v20, %v5095
    %5097 = vmatpush1.msra.mxu0 %v5096
    %5098 = vmatprep.subr.mxu0 0.0
    %v5099 = vand.u32 %v21, 4294901760
    %v5100 = vsub.f32 %v21, %v5099
    %5101 = vmatpush1.msra.mxu0 %v5100
    %5102 = vmatprep.subr.mxu0 0.0
    %5103 = vmatpush1.msra.mxu0 0.0
    %5104 = vmatprep.subr.mxu0 0.0
    %5105 = vmatpush1.msra.mxu0 0.0
    %5106 = vmatprep.subr.mxu0 0.0
    %5107 = vmatpush1.msra.mxu0 0.0
    %5108 = vmatprep.subr.mxu0 0.0
    %5109 = vmatpush1.msra.mxu0 0.0
    %5110 = vmatprep.subr.mxu0 0.0
    %5111 = vmatpush1.msra.mxu0 0.0
    %5112 = vmatprep.subr.mxu0 0.0
    %5113 = vmatpush1.msra.mxu0 0.0
    %5114 = vmatprep.subr.mxu0 0.0
    %5115 = vmatpush1.msra.mxu0 0.0
    %5116 = vmatprep.subr.mxu0 0.0
    %5117 = vmatpush1.msra.mxu0 0.0
    %5118 = vmatprep.subr.mxu0 0.0
    %5119 = vmatpush1.msra.mxu0 0.0
    %5120 = vmatprep.subr.mxu0 0.0
    %5121 = vmatpush1.msra.mxu0 0.0
    %5122 = vmatprep.subr.mxu0 0.0
    %5123 = vmatpush1.msra.mxu0 0.0
    %5124 = vmatprep.subr.mxu0 0.0
    %5125 = vmatpush1.msra.mxu0 0.0
    %5126 = vmatprep.subr.mxu0 0.0
    %5127 = vmatpush1.msra.mxu0 0.0
    %5128 = vmatprep.subr.mxu0 0.0
    %5129 = vmatpush1.msra.mxu0 0.0
    %5130 = vmatprep.subr.mxu0 0.0
    %5131 = vmatpush1.msra.mxu0 0.0
    %5132 = vmatprep.subr.mxu0 0.0
    %5133 = vmatpush1.msra.mxu0 0.0
    %5134 = vmatprep.subr.mxu0 0.0
    %5135 = vmatpush1.msra.mxu0 0.0
    %5136 = vmatprep.subr.mxu0 0.0
    %5137 = vmatpush1.msra.mxu0 0.0
    %5138 = vmatprep.subr.mxu0 0.0
    %5139 = vmatpush1.msra.mxu0 0.0
    %5140 = vmatprep.subr.mxu0 0.0
    %5141 = vmatpush1.msra.mxu0 0.0
    %5142 = vmatprep.subr.mxu0 0.0
    %5143 = vmatpush1.msra.mxu0 0.0
    %5144 = vmatprep.subr.mxu0 0.0
    %5145 = vmatpush1.msra.mxu0 0.0
    %5146 = vmatprep.subr.mxu0 0.0
    %5147 = vmatpush1.msra.mxu0 0.0
    %5148 = vmatprep.subr.mxu0 0.0
    %5149 = vmatpush1.msra.mxu0 0.0
    %5150 = vmatprep.subr.mxu0 0.0
    %5151 = vmatpush1.msra.mxu0 0.0
    %5152 = vmatprep.subr.mxu0 0.0
    %5153 = vmatpush1.msra.mxu0 0.0
    %5154 = vmatprep.subr.mxu0 0.0
    %5155 = vmatpush1.msra.mxu0 0.0
    %5156 = vmatprep.subr.mxu0 0.0
    %5157 = vmatpush1.msra.mxu0 0.0
    %5158 = vmatprep.mubr.f32.mxu0 0.0
    %v5159 = vand.u32 %v4895, 4294901760
    %v5160 = vsub.f32 %v4895, %v5159
    %5161 = vmatmul.mubr.f32.gmra.mrb[0].mxu0 %v5160
    %v5162 = vpop.f32.mrb[0].mxu0
    %v5163 = vadd.f32 %v5077, %v5162
    %v5164 = vpop.f32.mrb[0].mxu0
    %5165 = vmatprep.mubr.f32.mxu0 0.0
    %v5166 = vand.u32 %v4898, 4294901760
    %v5167 = vsub.f32 %v4898, %v5166
    %5168 = vmatmul.mubr.f32.gmra.mrb[0].mxu0 %v5167
    %v5169 = vpop.f32.mrb[0].mxu0
    %v5170 = vadd.f32 %v5083, %v5169
    %v5171 = vpop.f32.mrb[0].mxu0
    %5172 = vdwg.mxu0
    %5173 = vmatprep.subr.mxu0 0.0
    %v5174 = vand.u32 %v18, 4294901760
    %5175 = vmatpush1.msra.mxu0 %v5174
    %5176 = vmatprep.subr.mxu0 0.0
    %v5177 = vand.u32 %v19, 4294901760
    %5178 = vmatpush1.msra.mxu0 %v5177
    %5179 = vmatprep.subr.mxu0 0.0
    %v5180 = vand.u32 %v20, 4294901760
    %5181 = vmatpush1.msra.mxu0 %v5180
    %5182 = vmatprep.subr.mxu0 0.0
    %v5183 = vand.u32 %v21, 4294901760
    %5184 = vmatpush1.msra.mxu0 %v5183
    %5185 = vmatprep.subr.mxu0 0.0
    %5186 = vmatpush1.msra.mxu0 0.0
    %5187 = vmatprep.subr.mxu0 0.0
    %5188 = vmatpush1.msra.mxu0 0.0
    %5189 = vmatprep.subr.mxu0 0.0
    %5190 = vmatpush1.msra.mxu0 0.0
    %5191 = vmatprep.subr.mxu0 0.0
    %5192 = vmatpush1.msra.mxu0 0.0
    %5193 = vmatprep.subr.mxu0 0.0
    %5194 = vmatpush1.msra.mxu0 0.0
    %5195 = vmatprep.subr.mxu0 0.0
    %5196 = vmatpush1.msra.mxu0 0.0
    %5197 = vmatprep.subr.mxu0 0.0
    %5198 = vmatpush1.msra.mxu0 0.0
    %5199 = vmatprep.subr.mxu0 0.0
    %5200 = vmatpush1.msra.mxu0 0.0
    %5201 = vmatprep.subr.mxu0 0.0
    %5202 = vmatpush1.msra.mxu0 0.0
    %5203 = vmatprep.subr.mxu0 0.0
    %5204 = vmatpush1.msra.mxu0 0.0
    %5205 = vmatprep.subr.mxu0 0.0
    %5206 = vmatpush1.msra.mxu0 0.0
    %5207 = vmatprep.subr.mxu0 0.0
    %5208 = vmatpush1.msra.mxu0 0.0
    %5209 = vmatprep.subr.mxu0 0.0
    %5210 = vmatpush1.msra.mxu0 0.0
    %5211 = vmatprep.subr.mxu0 0.0
    %5212 = vmatpush1.msra.mxu0 0.0
    %5213 = vmatprep.subr.mxu0 0.0
    %5214 = vmatpush1.msra.mxu0 0.0
    %5215 = vmatprep.subr.mxu0 0.0
    %5216 = vmatpush1.msra.mxu0 0.0
    %5217 = vmatprep.subr.mxu0 0.0
    %5218 = vmatpush1.msra.mxu0 0.0
    %5219 = vmatprep.subr.mxu0 0.0
    %5220 = vmatpush1.msra.mxu0 0.0
    %5221 = vmatprep.subr.mxu0 0.0
    %5222 = vmatpush1.msra.mxu0 0.0
    %5223 = vmatprep.subr.mxu0 0.0
    %5224 = vmatpush1.msra.mxu0 0.0
    %5225 = vmatprep.subr.mxu0 0.0
    %5226 = vmatpush1.msra.mxu0 0.0
    %5227 = vmatprep.subr.mxu0 0.0
    %5228 = vmatpush1.msra.mxu0 0.0
    %5229 = vmatprep.subr.mxu0 0.0
    %5230 = vmatpush1.msra.mxu0 0.0
    %5231 = vmatprep.subr.mxu0 0.0
    %5232 = vmatpush1.msra.mxu0 0.0
    %5233 = vmatprep.subr.mxu0 0.0
    %5234 = vmatpush1.msra.mxu0 0.0
    %5235 = vmatprep.subr.mxu0 0.0
    %5236 = vmatpush1.msra.mxu0 0.0
    %5237 = vmatprep.subr.mxu0 0.0
    %5238 = vmatpush1.msra.mxu0 0.0
    %5239 = vmatprep.subr.mxu0 0.0
    %5240 = vmatpush1.msra.mxu0 0.0
    %5241 = vmatprep.mubr.f32.mxu0 0.0
    %v5242 = vand.u32 %v4895, 4294901760
    %v5243 = vsub.f32 %v4895, %v5242
    %v5244 = vand.u32 %v5243, 4294901760
    %5245 = vmatmul.mubr.f32.gmra.mrb[0].mxu0 %v5244
    %v5246 = vpop.f32.mrb[0].mxu0
    %v5247 = vadd.f32 %v5163, %v5246
    %v5248 = vpop.f32.mrb[0].mxu0
    %5249 = vmatprep.mubr.f32.mxu0 0.0
    %v5250 = vand.u32 %v4898, 4294901760
    %v5251 = vsub.f32 %v4898, %v5250
    %v5252 = vand.u32 %v5251, 4294901760
    %5253 = vmatmul.mubr.f32.gmra.mrb[0].mxu0 %v5252
    %v5254 = vpop.f32.mrb[0].mxu0
    %v5255 = vadd.f32 %v5170, %v5254
    %v5256 = vpop.f32.mrb[0].mxu0
    %5257 = vdwg.mxu0
    %5258 = vmatprep.subr.mxu0 0.0
    %v5259 = vand.u32 %v18, 4294901760
    %v5260 = vsub.f32 %v18, %v5259
    %v5261 = vand.u32 %v5260, 4294901760
    %5262 = vmatpush1.msra.mxu0 %v5261
    %5263 = vmatprep.subr.mxu0 0.0
    %v5264 = vand.u32 %v19, 4294901760
    %v5265 = vsub.f32 %v19, %v5264
    %v5266 = vand.u32 %v5265, 4294901760
    %5267 = vmatpush1.msra.mxu0 %v5266
    %5268 = vmatprep.subr.mxu0 0.0
    %v5269 = vand.u32 %v20, 4294901760
    %v5270 = vsub.f32 %v20, %v5269
    %v5271 = vand.u32 %v5270, 4294901760
    %5272 = vmatpush1.msra.mxu0 %v5271
    %5273 = vmatprep.subr.mxu0 0.0
    %v5274 = vand.u32 %v21, 4294901760
    %v5275 = vsub.f32 %v21, %v5274
    %v5276 = vand.u32 %v5275, 4294901760
    %5277 = vmatpush1.msra.mxu0 %v5276
    %5278 = vmatprep.subr.mxu0 0.0
    %5279 = vmatpush1.msra.mxu0 0.0
    %5280 = vmatprep.subr.mxu0 0.0
    %5281 = vmatpush1.msra.mxu0 0.0
    %5282 = vmatprep.subr.mxu0 0.0
    %5283 = vmatpush1.msra.mxu0 0.0
    %5284 = vmatprep.subr.mxu0 0.0
    %5285 = vmatpush1.msra.mxu0 0.0
    %5286 = vmatprep.subr.mxu0 0.0
    %5287 = vmatpush1.msra.mxu0 0.0
    %5288 = vmatprep.subr.mxu0 0.0
    %5289 = vmatpush1.msra.mxu0 0.0
    %5290 = vmatprep.subr.mxu0 0.0
    %5291 = vmatpush1.msra.mxu0 0.0
    %5292 = vmatprep.subr.mxu0 0.0
    %5293 = vmatpush1.msra.mxu0 0.0
    %5294 = vmatprep.subr.mxu0 0.0
    %5295 = vmatpush1.msra.mxu0 0.0
    %5296 = vmatprep.subr.mxu0 0.0
    %5297 = vmatpush1.msra.mxu0 0.0
    %5298 = vmatprep.subr.mxu0 0.0
    %5299 = vmatpush1.msra.mxu0 0.0
    %5300 = vmatprep.subr.mxu0 0.0
    %5301 = vmatpush1.msra.mxu0 0.0
    %5302 = vmatprep.subr.mxu0 0.0
    %5303 = vmatpush1.msra.mxu0 0.0
    %5304 = vmatprep.subr.mxu0 0.0
    %5305 = vmatpush1.msra.mxu0 0.0
    %5306 = vmatprep.subr.mxu0 0.0
    %5307 = vmatpush1.msra.mxu0 0.0
    %5308 = vmatprep.subr.mxu0 0.0
    %5309 = vmatpush1.msra.mxu0 0.0
    %5310 = vmatprep.subr.mxu0 0.0
    %5311 = vmatpush1.msra.mxu0 0.0
    %5312 = vmatprep.subr.mxu0 0.0
    %5313 = vmatpush1.msra.mxu0 0.0
    %5314 = vmatprep.subr.mxu0 0.0
    %5315 = vmatpush1.msra.mxu0 0.0
    %5316 = vmatprep.subr.mxu0 0.0
    %5317 = vmatpush1.msra.mxu0 0.0
    %5318 = vmatprep.subr.mxu0 0.0
    %5319 = vmatpush1.msra.mxu0 0.0
    %5320 = vmatprep.subr.mxu0 0.0
    %5321 = vmatpush1.msra.mxu0 0.0
    %5322 = vmatprep.subr.mxu0 0.0
    %5323 = vmatpush1.msra.mxu0 0.0
    %5324 = vmatprep.subr.mxu0 0.0
    %5325 = vmatpush1.msra.mxu0 0.0
    %5326 = vmatprep.subr.mxu0 0.0
    %5327 = vmatpush1.msra.mxu0 0.0
    %5328 = vmatprep.subr.mxu0 0.0
    %5329 = vmatpush1.msra.mxu0 0.0
    %5330 = vmatprep.subr.mxu0 0.0
    %5331 = vmatpush1.msra.mxu0 0.0
    %5332 = vmatprep.subr.mxu0 0.0
    %5333 = vmatpush1.msra.mxu0 0.0
    %5334 = vmatprep.mubr.f32.mxu0 0.0
    %v5335 = vand.u32 %v4895, 4294901760
    %5336 = vmatmul.mubr.f32.gmra.mrb[0].mxu0 %v5335
    %v5337 = vpop.f32.mrb[0].mxu0
    %v5338 = vadd.f32 %v5247, %v5337
    %v5339 = vpop.f32.mrb[0].mxu0
    %5340 = vmatprep.mubr.f32.mxu0 0.0
    %v5341 = vand.u32 %v4898, 4294901760
    %5342 = vmatmul.mubr.f32.gmra.mrb[0].mxu0 %v5341
    %v5343 = vpop.f32.mrb[0].mxu0
    %v5344 = vadd.f32 %v5255, %v5343
    %v5345 = vpop.f32.mrb[0].mxu0
    %5346 = vdwg.mxu0
    %5347 = vmatprep.subr.mxu0 0.0
    %v5348 = vand.u32 %v18, 4294901760
    %5349 = vmatpush1.msra.mxu0 %v5348
    %5350 = vmatprep.subr.mxu0 0.0
    %v5351 = vand.u32 %v19, 4294901760
    %5352 = vmatpush1.msra.mxu0 %v5351
    %5353 = vmatprep.subr.mxu0 0.0
    %v5354 = vand.u32 %v20, 4294901760
    %5355 = vmatpush1.msra.mxu0 %v5354
    %5356 = vmatprep.subr.mxu0 0.0
    %v5357 = vand.u32 %v21, 4294901760
    %5358 = vmatpush1.msra.mxu0 %v5357
    %5359 = vmatprep.subr.mxu0 0.0
    %5360 = vmatpush1.msra.mxu0 0.0
    %5361 = vmatprep.subr.mxu0 0.0
    %5362 = vmatpush1.msra.mxu0 0.0
    %5363 = vmatprep.subr.mxu0 0.0
    %5364 = vmatpush1.msra.mxu0 0.0
    %5365 = vmatprep.subr.mxu0 0.0
    %5366 = vmatpush1.msra.mxu0 0.0
    %5367 = vmatprep.subr.mxu0 0.0
    %5368 = vmatpush1.msra.mxu0 0.0
    %5369 = vmatprep.subr.mxu0 0.0
    %5370 = vmatpush1.msra.mxu0 0.0
    %5371 = vmatprep.subr.mxu0 0.0
    %5372 = vmatpush1.msra.mxu0 0.0
    %5373 = vmatprep.subr.mxu0 0.0
    %5374 = vmatpush1.msra.mxu0 0.0
    %5375 = vmatprep.subr.mxu0 0.0
    %5376 = vmatpush1.msra.mxu0 0.0
    %5377 = vmatprep.subr.mxu0 0.0
    %5378 = vmatpush1.msra.mxu0 0.0
    %5379 = vmatprep.subr.mxu0 0.0
    %5380 = vmatpush1.msra.mxu0 0.0
    %5381 = vmatprep.subr.mxu0 0.0
    %5382 = vmatpush1.msra.mxu0 0.0
    %5383 = vmatprep.subr.mxu0 0.0
    %5384 = vmatpush1.msra.mxu0 0.0
    %5385 = vmatprep.subr.mxu0 0.0
    %5386 = vmatpush1.msra.mxu0 0.0
    %5387 = vmatprep.subr.mxu0 0.0
    %5388 = vmatpush1.msra.mxu0 0.0
    %5389 = vmatprep.subr.mxu0 0.0
    %5390 = vmatpush1.msra.mxu0 0.0
    %5391 = vmatprep.subr.mxu0 0.0
    %5392 = vmatpush1.msra.mxu0 0.0
    %5393 = vmatprep.subr.mxu0 0.0
    %5394 = vmatpush1.msra.mxu0 0.0
    %5395 = vmatprep.subr.mxu0 0.0
    %5396 = vmatpush1.msra.mxu0 0.0
    %5397 = vmatprep.subr.mxu0 0.0
    %5398 = vmatpush1.msra.mxu0 0.0
    %5399 = vmatprep.subr.mxu0 0.0
    %5400 = vmatpush1.msra.mxu0 0.0
    %5401 = vmatprep.subr.mxu0 0.0
    %5402 = vmatpush1.msra.mxu0 0.0
    %5403 = vmatprep.subr.mxu0 0.0
    %5404 = vmatpush1.msra.mxu0 0.0
    %5405 = vmatprep.subr.mxu0 0.0
    %5406 = vmatpush1.msra.mxu0 0.0
    %5407 = vmatprep.subr.mxu0 0.0
    %5408 = vmatpush1.msra.mxu0 0.0
    %5409 = vmatprep.subr.mxu0 0.0
    %5410 = vmatpush1.msra.mxu0 0.0
    %5411 = vmatprep.subr.mxu0 0.0
    %5412 = vmatpush1.msra.mxu0 0.0
    %5413 = vmatprep.subr.mxu0 0.0
    %5414 = vmatpush1.msra.mxu0 0.0
    %5415 = vmatprep.mubr.f32.mxu0 0.0
    %v5416 = vand.u32 %v4895, 4294901760
    %5417 = vmatmul.mubr.f32.gmra.mrb[0].mxu0 %v5416
    %v5418 = vpop.f32.mrb[0].mxu0
    %v5419 = vadd.f32 %v5338, %v5418
    %v5420 = vpop.f32.mrb[0].mxu0
    %5421 = vmatprep.mubr.f32.mxu0 0.0
    %v5422 = vand.u32 %v4898, 4294901760
    %5423 = vmatmul.mubr.f32.gmra.mrb[0].mxu0 %v5422
    %v5424 = vpop.f32.mrb[0].mxu0
    %v5425 = vadd.f32 %v5344, %v5424
    %v5426 = vpop.f32.mrb[0].mxu0
    %5427 = vdwg.mxu0
    %v5428 = vsel %vm36, %v5419, 0.0
    %5429 = vadd.xlane.f32.xlu0 %v5428
    %v5430 = vpop.xlane.xlu0 %5429
    %v5431 = vsel %vm36, %v5425, 0.0
    %5432 = vadd.xlane.f32.xlu0 %v5431
    %v5433 = vpop.xlane.xlu0 %5432
    %v5434 = vmul.f32 %v5430, 0.03125
    %v5435 = vmul.f32 %v5433, 0.03125
    %v5436 = vsub.f32 %v5419, %v5434
    %v5437 = vsub.f32 %v5425, %v5435
    %v5438 = vmul.f32 %v5436, %v5436
    %v5439 = vmul.f32 %v5437, %v5437
    %v5440 = vsel %vm36, %v5438, 0.0
    %5441 = vadd.xlane.f32.xlu0 %v5440
    %v5442 = vpop.xlane.xlu0 %5441
    %v5443 = vsel %vm36, %v5439, 0.0
    %5444 = vadd.xlane.f32.xlu0 %v5443
    %v5445 = vpop.xlane.xlu0 %5444
    %v5446 = vmul.f32 %v5442, 0.03125
    %v5447 = vmul.f32 %v5445, 0.03125
    %v5448 = vadd.f32 %v5446, 1e-05
    %v5449 = vadd.f32 %v5447, 1e-05
    %v5450 = vrsqrt.pop %v5448
    %v5451 = vrsqrt.pop %v5449
    %v5452 = vmul.f32 %v5436, %v5450
    %v5453 = vmul.f32 %v5437, %v5451
    %v5454 = vlaneseq
    %v5455 = vshrl.u32 %v5454, 7
    %v5456 = vsub.s32 0, %v5455
    %v5457 = vrot.slane %v28, %v5456
    %v5458 = vmul.f32 %v5452, %v5457
    %v5459 = vmul.f32 %v5453, %v5457
    %v5460 = vlaneseq
    %v5461 = vshrl.u32 %v5460, 7
    %v5462 = vsub.s32 0, %v5461
    %v5463 = vrot.slane %v29, %v5462
    %v5464 = vadd.f32 %v5458, %v5463
    %v5465 = vadd.f32 %v5459, %v5463
    %v5466 = vadd.f32 %v4886, %v5464
    %v5467 = vadd.f32 %v4887, %v5465
    %5468 = vst.msk [vmem:[#allocation2] sm:$0xff] %vm36, %v5466
    %5469 = vst.msk [vmem:[#allocation2 + $0x8] sm:$0xff] %vm36, %v5467
    // Predicated region
    $region10: #{residual_transform.1} parent=1 // pred_check
      _
    $region11: #{residual_transform.1} parent=1 // pred_check_branch
      %5471 = sbr.rel (0) target = $region13
    $region12: #{residual_transform.1} parent=1 // pred_region
      %s5473 = ssub.s32 256, 256
      %5474 = vsyncadd [#allocation3], %s5473
      %s5475 = sshll.u32 [#allocation2], 4
      %s5476 = int_to_ptr.vmem [resolvable:$true] %s5475
      %5481 = dma.vmem_to_hbm [thread:$0]  %s5476, 256, %s2, [#allocation3], 128, 128, 8
    $region13: #{residual_transform.1} parent=1 // pred_fallthru
      _
    // Predicated region
    $region14: #{residual_transform.1} parent=1 // pred_check
      _
    $region15: #{residual_transform.1} parent=1 // pred_check_branch
      %5483 = sbr.rel (0) target = $region17
    $region16: #{residual_transform.1} parent=1 // pred_region
      %5484 = dma.done [#allocation3], 256
    $region17: #{residual_transform.1} parent=1 // pred_fallthru
      _
    %5485 = vsyncpa [#allocation3], 1

</llo_original>
